<compile_context>
chip_gen: v7x
topology: tpu7x:2x2x1
jax: 0.10.0
libtpu: 0.0.40
codegen_flags: <defaults>
</compile_context>

<pallas_src>
import functools

import jax
import jax.numpy as jnp
from jax import lax
from jax.experimental import pallas as pl
from jax.experimental.pallas import tpu as pltpu


def _layer_norm(z, gamma, beta, eps=1e-5):
    mu = jnp.mean(z, axis=-1, keepdims=True)
    var = jnp.mean((z - mu) ** 2, axis=-1, keepdims=True)
    return (z - mu) * lax.rsqrt(var + eps) * gamma + beta


def _gelu_exact(z):
    # PyTorch F.gelu default is the exact (erf) form; keep f32 on the VPU.
    return 0.5 * z * (1.0 + lax.erf(z * 0.7071067811865476))


def encoder_layer_kernel(
    x_ref,
    wqkv_ref, bqkv_ref, wo_ref, bo_ref,
    g1_ref, be1_ref,
    w1_ref, b1_ref, w2_ref, b2_ref,
    g2_ref, be2_ref,
    out_ref, attn_ref,
    *, n_heads,
):
    f32 = jnp.float32
    bf16 = jnp.bfloat16

    x = x_ref[0]                                    # (L, D) f32
    L, D = x.shape
    dh = D // n_heads
    scale = 1.0 / float(dh) ** 0.5

    xb = x.astype(bf16)

    # ---- fused QKV projection: bf16 MXU inputs, f32 accumulation ----------
    qkv = jnp.dot(xb, wqkv_ref[...], preferred_element_type=f32) + bqkv_ref[0]
    q = (qkv[:, :D] * scale).astype(bf16)           # fold 1/sqrt(dh) into q once
    k = qkv[:, D:2 * D].astype(bf16)
    v = qkv[:, 2 * D:].astype(bf16)

    # ---- multi-head self attention -----------------------------------------
    # Per-head contexts are concatenated into one (L, D) tensor so the output
    # projection is a single K=D matmul (full MXU contraction) instead of H
    # small K=dh matmuls; every store is lane-dense.
    ctx_heads = []
    for h in range(n_heads):                        # static, unrolled head loop
        sl = slice(h * dh, (h + 1) * dh)
        s = jnp.einsum("qd,kd->qk", q[:, sl], k[:, sl],
                       preferred_element_type=f32)
        s = s - jnp.max(s, axis=-1, keepdims=True)
        e = jnp.exp(s)                              # f32 softmax statistics
        p = e / jnp.sum(e, axis=-1, keepdims=True)  # exact normalisation
        attn_ref[0, h] = p.astype(attn_ref.dtype)   # lane-dense (L, L) store
        ctx_heads.append(jnp.dot(p.astype(bf16), v[:, sl],
                                 preferred_element_type=f32))
    ctx = jnp.concatenate(ctx_heads, axis=-1)       # (L, D) f32
    new_x = jnp.dot(ctx.astype(bf16), wo_ref[...],
                    preferred_element_type=f32) + bo_ref[0]

    # ---- residual + norm1 (dropout == identity at inference) ---------------
    x1 = x + _layer_norm(new_x, g1_ref[0], be1_ref[0])

    # ---- feed-forward: conv1(k=1) -> exact GELU -> conv2(k=1) --------------
    y = jnp.dot(x1.astype(bf16), w1_ref[...], preferred_element_type=f32) + b1_ref[0]
    y = _gelu_exact(y)
    y = jnp.dot(y.astype(bf16), w2_ref[...], preferred_element_type=f32) + b2_ref[0]

    # ---- out = x1 + norm2(x1 + y)  (matches the given PyTorch forward) -----
    out_ref[0] = x1 + _layer_norm(x1 + y, g2_ref[0], be2_ref[0])


def pack_params(params):
    """One-time weight packing (QKV fusion + bf16 casts), hoisted out of the
    per-forward-call path so no per-call weight copy/cast traffic remains."""
    bf16 = jnp.bfloat16
    return {
        "wqkv": jnp.concatenate([params["wq"], params["wk"], params["wv"]],
                                axis=1).astype(bf16),
        "bqkv": jnp.concatenate([params["bq"], params["bk"], params["bv"]], axis=1),
        "wo": params["wo"].astype(bf16), "bo": params["bo"],
        "g1": params["g1"], "be1": params["be1"],
        "w1": params["w1"].astype(bf16), "b1": params["b1"],
        "w2": params["w2"].astype(bf16), "b2": params["b2"],
        "g2": params["g2"], "be2": params["be2"],
    }


def _vmem_limit_bytes():
    # Generation-aware cap (~60% of physical VMEM): ~38 MiB on v7x (64 MiB
    # physical), ~76 MiB on v5e/v6e (128 MiB physical). Conservative fallback
    # when hardware info is unavailable (e.g. interpret mode).
    try:
        cap = int(pltpu.get_tpu_info().vmem_capacity_bytes)
    except Exception:
        return 32 * 1024 * 1024
    return cap * 3 // 5


def encoder_layer(x, packed, n_heads, attn_dtype=jnp.bfloat16):
    B, L, D = x.shape
    Fd = packed["w1"].shape[1]
    H = n_heads

    def const_spec(shape):
        # Grid-invariant operand: full-extent block, constant index map.
        return pl.BlockSpec(shape, lambda b, _n=len(shape): (0,) * _n)

    in_specs = [
        pl.BlockSpec((1, L, D), lambda b: (b, 0, 0)),      # x
        const_spec((D, 3 * D)), const_spec((1, 3 * D)),    # Wqkv, bqkv
        const_spec((D, D)), const_spec((1, D)),            # Wo, bo
        const_spec((1, D)), const_spec((1, D)),            # norm1 gamma, beta
        const_spec((D, Fd)), const_spec((1, Fd)),          # conv1 W, b
        const_spec((Fd, D)), const_spec((1, D)),           # conv2 W, b
        const_spec((1, D)), const_spec((1, D)),            # norm2 gamma, beta
    ]
    out_specs = [
        pl.BlockSpec((1, L, D), lambda b: (b, 0, 0)),
        pl.BlockSpec((1, H, L, L), lambda b: (b, 0, 0, 0)),
    ]

    kernel = functools.partial(encoder_layer_kernel, n_heads=H)
    return pl.pallas_call(
        kernel,
        out_shape=(
            jax.ShapeDtypeStruct((B, L, D), jnp.float32),
            jax.ShapeDtypeStruct((B, H, L, L), attn_dtype),
        ),
        grid_spec=pltpu.PrefetchScalarGridSpec(
            num_scalar_prefetch=0,
            grid=(B,),
            in_specs=in_specs,
            out_specs=out_specs,
        ),
        compiler_params=pltpu.CompilerParams(
            dimension_semantics=("parallel",),   # batch items independent
            vmem_limit_bytes=_vmem_limit_bytes()),
    )(
        x, packed["wqkv"], packed["bqkv"], packed["wo"], packed["bo"],
        packed["g1"], packed["be1"],
        packed["w1"], packed["b1"], packed["w2"], packed["b2"],
        packed["g2"], packed["be2"],
    )


def ref_forward(x, p, n_heads):
    """Pure-JAX reference mirroring the kernel's bf16-matmul / f32-accumulate math."""
    bf16, f32 = jnp.bfloat16, jnp.float32
    B, L, D = x.shape
    dh = D // n_heads
    scale = 1.0 / float(dh) ** 0.5

    def mm(a, w):
        return jnp.dot(a.astype(bf16), w.astype(bf16), preferred_element_type=f32)

    def ln(z, g, b, eps=1e-5):
        mu = z.mean(-1, keepdims=True)
        var = ((z - mu) ** 2).mean(-1, keepdims=True)
        return (z - mu) * lax.rsqrt(var + eps) * g + b

    q = mm(x, p["wq"]) + p["bq"][0]
    k = mm(x, p["wk"]) + p["bk"][0]
    v = mm(x, p["wv"]) + p["bv"][0]
    qh = (q * scale).astype(bf16).reshape(B, L, n_heads, dh).transpose(0, 2, 1, 3)
    kh = k.astype(bf16).reshape(B, L, n_heads, dh).transpose(0, 2, 1, 3)
    vh = v.astype(bf16).reshape(B, L, n_heads, dh).transpose(0, 2, 1, 3)
    s = jnp.einsum("bhqd,bhkd->bhqk", qh, kh, preferred_element_type=f32)
    s = s - s.max(-1, keepdims=True)
    e = jnp.exp(s)
    attn = e / e.sum(-1, keepdims=True)
    ctx = jnp.einsum("bhqk,bhkd->bhqd", attn.astype(bf16), vh,
                     preferred_element_type=f32)
    ctx = ctx.transpose(0, 2, 1, 3).reshape(B, L, D)
    new_x = mm(ctx, p["wo"]) + p["bo"][0]

    x1 = x + ln(new_x, p["g1"][0], p["be1"][0])
    y = _gelu_exact(mm(x1, p["w1"]) + p["b1"][0])
    y = mm(y, p["w2"]) + p["b2"][0]
    out = x1 + ln(x1 + y, p["g2"][0], p["be2"][0])
    return out, attn


def make_params(key, d_model, d_ff):
    ks = jax.random.split(key, 12)

    def init(k, shape, scale=0.1):
        return (jax.random.normal(k, shape, jnp.float32) * scale).astype(jnp.float32)

    return {
        "wq": init(ks[0], (d_model, d_model)), "bq": init(ks[1], (1, d_model)),
        "wk": init(ks[2], (d_model, d_model)), "bk": init(ks[3], (1, d_model)),
        "wv": init(ks[4], (d_model, d_model)), "bv": init(ks[5], (1, d_model)),
        "wo": init(ks[6], (d_model, d_model)), "bo": init(ks[7], (1, d_model)),
        "g1": jnp.ones((1, d_model), jnp.float32),
        "be1": jnp.zeros((1, d_model), jnp.float32),
        "w1": init(ks[8], (d_model, d_ff)), "b1": init(ks[9], (1, d_ff)),
        "w2": init(ks[10], (d_ff, d_model)), "b2": init(ks[11], (1, d_model)),
        "g2": jnp.ones((1, d_model), jnp.float32),
        "be2": jnp.zeros((1, d_model), jnp.float32),
    }


if __name__ == "__main__":
    # Tile-aligned demo shapes: D and d_ff multiples of 128, L = 128 so the
    # (L, L) attention tiles and all activations are lane/sublane dense.
    B, L, D, FF, H = 2, 128, 128, 256, 4

    key = jax.random.PRNGKey(0)
    kx, kp = jax.random.split(key)
    x = jax.random.normal(kx, (B, L, D), jnp.float32)
    params = make_params(kp, D, FF)
    packed = pack_params(params)          # one-time packing (not per-forward)

    out, attn = encoder_layer(x, packed, n_heads=H)
    out = jax.block_until_ready(out)
    attn = jax.block_until_ready(attn)

    ref_out, ref_attn = ref_forward(x, params, H)
    assert out.shape == (B, L, D) and attn.shape == (B, H, L, L)
    # Both paths use bf16 MXU inputs with f32 accumulation; the tolerance
    # covers residual bf16-rounding / reduction-order divergence plus the
    # bf16 quantisation of the returned attention map.
    assert jnp.allclose(out, ref_out, rtol=2e-2, atol=2e-2), "output mismatch"
    assert jnp.allclose(attn.astype(jnp.float32), ref_attn,
                        rtol=2e-2, atol=2e-2), "attn mismatch"

    # TODO(synk): dropout is treated as identity (eval mode); no RNG dropout mask.
    # TODO(synk): for long sequences (L >~ 512 on v7x / ~1k on v5e-v6e) add a
    #             query-block grid axis with online softmax and a tiled FFN so
    #             the live set fits v7x's 64 MiB VMEM and DMA overlaps compute.
    print("KERNEL_OK")
</pallas_src>

<mosaic_0001>
module attributes {stable_mosaic.version = 11 : i64} {
  func.func @encoder_layer_kernel(%arg0: i32, %arg1: memref<1x128x128xf32, #tpu.memory_space<vmem>>, %arg2: memref<128x384xbf16, #tpu.memory_space<vmem>>, %arg3: memref<1x384xf32, #tpu.memory_space<vmem>>, %arg4: memref<128x128xbf16, #tpu.memory_space<vmem>>, %arg5: memref<1x128xf32, #tpu.memory_space<vmem>>, %arg6: memref<1x128xf32, #tpu.memory_space<vmem>>, %arg7: memref<1x128xf32, #tpu.memory_space<vmem>>, %arg8: memref<128x256xbf16, #tpu.memory_space<vmem>>, %arg9: memref<1x256xf32, #tpu.memory_space<vmem>>, %arg10: memref<256x128xbf16, #tpu.memory_space<vmem>>, %arg11: memref<1x128xf32, #tpu.memory_space<vmem>>, %arg12: memref<1x128xf32, #tpu.memory_space<vmem>>, %arg13: memref<1x128xf32, #tpu.memory_space<vmem>>, %arg14: memref<1x128x128xf32, #tpu.memory_space<vmem>>, %arg15: memref<1x4x128x128xbf16, #tpu.memory_space<vmem>>) attributes {dimension_semantics = [#tpu.dimension_semantics<parallel>], iteration_bounds = array<i64: 2>, scalar_prefetch = 0 : i64, scratch_operands = 0 : i64, tpu.core_type = #tpu.core_type<tc>, window_params = [{transform_indices = @transform_0, window_bounds = array<i64: 1, 128, 128>}, {pipeline_mode = #tpu.pipeline_mode<synchronous>, transform_indices = @transform_1, window_bounds = array<i64: 128, 384>}, {pipeline_mode = #tpu.pipeline_mode<synchronous>, transform_indices = @transform_2, window_bounds = array<i64: 1, 384>}, {pipeline_mode = #tpu.pipeline_mode<synchronous>, transform_indices = @transform_3, window_bounds = array<i64: 128, 128>}, {pipeline_mode = #tpu.pipeline_mode<synchronous>, transform_indices = @transform_4, window_bounds = array<i64: 1, 128>}, {pipeline_mode = #tpu.pipeline_mode<synchronous>, transform_indices = @transform_5, window_bounds = array<i64: 1, 128>}, {pipeline_mode = #tpu.pipeline_mode<synchronous>, transform_indices = @transform_6, window_bounds = array<i64: 1, 128>}, {pipeline_mode = #tpu.pipeline_mode<synchronous>, transform_indices = @transform_7, window_bounds = array<i64: 128, 256>}, {pipeline_mode = #tpu.pipeline_mode<synchronous>, transform_indices = @transform_8, window_bounds = array<i64: 1, 256>}, {pipeline_mode = #tpu.pipeline_mode<synchronous>, transform_indices = @transform_9, window_bounds = array<i64: 256, 128>}, {pipeline_mode = #tpu.pipeline_mode<synchronous>, transform_indices = @transform_10, window_bounds = array<i64: 1, 128>}, {pipeline_mode = #tpu.pipeline_mode<synchronous>, transform_indices = @transform_11, window_bounds = array<i64: 1, 128>}, {pipeline_mode = #tpu.pipeline_mode<synchronous>, transform_indices = @transform_12, window_bounds = array<i64: 1, 128>}, {transform_indices = @transform_13, window_bounds = array<i64: 1, 128, 128>}, {transform_indices = @transform_14, window_bounds = array<i64: 1, 4, 128, 128>}]} {
    %c0 = arith.constant 0 : index
    %c0_0 = arith.constant 0 : index
    %c0_1 = arith.constant 0 : index
    %0 = vector.load %arg1[%c0, %c0_0, %c0_1] : memref<1x128x128xf32, #tpu.memory_space<vmem>>, vector<1x128x128xf32>
    %1 = vector.shape_cast %0 : vector<1x128x128xf32> to vector<128x128xf32>
    %2 = arith.truncf %1 : vector<128x128xf32> to vector<128x128xbf16>
    %c0_2 = arith.constant 0 : index
    %c0_3 = arith.constant 0 : index
    %3 = vector.load %arg2[%c0_2, %c0_3] : memref<128x384xbf16, #tpu.memory_space<vmem>>, vector<128x384xbf16>
    %cst = arith.constant dense<0.000000e+00> : vector<128x384xf32>
    %4 = tpu.matmul %2, %3, %cst {dimension_numbers = #tpu.dot_dimension_numbers<[1], [0], [0], [1], [0, 0, 1, 1], [], []>} : vector<128x128xbf16>, vector<128x384xbf16>, vector<128x384xf32> -> vector<128x384xf32>
    %c0_4 = arith.constant 0 : index
    %c0_5 = arith.constant 0 : index
    %5 = vector.load %arg3[%c0_4, %c0_5] : memref<1x384xf32, #tpu.memory_space<vmem>>, vector<1x384xf32>
    %6 = vector.shape_cast %5 : vector<1x384xf32> to vector<384xf32>
    %7 = vector.shape_cast %6 : vector<384xf32> to vector<1x384xf32>
    %8 = vector.broadcast %7 : vector<1x384xf32> to vector<128x384xf32>
    %9 = arith.addf %4, %8 : vector<128x384xf32>
    %10 = vector.extract_strided_slice %9 {offsets = [0, 0], sizes = [128, 128], strides = [1, 1]} : vector<128x384xf32> to vector<128x128xf32>
    %cst_6 = arith.constant 0.176776692 : f32
    %11 = vector.broadcast %cst_6 : f32 to vector<128x128xf32>
    %12 = arith.mulf %10, %11 : vector<128x128xf32>
    %13 = arith.truncf %12 : vector<128x128xf32> to vector<128x128xbf16>
    %14 = vector.extract_strided_slice %9 {offsets = [0, 128], sizes = [128, 128], strides = [1, 1]} : vector<128x384xf32> to vector<128x128xf32>
    %15 = arith.truncf %14 : vector<128x128xf32> to vector<128x128xbf16>
    %16 = vector.extract_strided_slice %9 {offsets = [0, 256], sizes = [128, 128], strides = [1, 1]} : vector<128x384xf32> to vector<128x128xf32>
    %17 = arith.truncf %16 : vector<128x128xf32> to vector<128x128xbf16>
    %18 = vector.extract_strided_slice %13 {offsets = [0, 0], sizes = [128, 32], strides = [1, 1]} : vector<128x128xbf16> to vector<128x32xbf16>
    %19 = vector.extract_strided_slice %15 {offsets = [0, 0], sizes = [128, 32], strides = [1, 1]} : vector<128x128xbf16> to vector<128x32xbf16>
    "tpu.trace_start"() <{level = 10 : i32, message = "qd,kd->qk"}> : () -> ()
    %cst_7 = arith.constant dense<0.000000e+00> : vector<128x128xf32>
    %20 = tpu.matmul %18, %19, %cst_7 {dimension_numbers = #tpu.dot_dimension_numbers<[1], [1], [0], [0], [0, 0, 1, 0], [], []>} : vector<128x32xbf16>, vector<128x32xbf16>, vector<128x128xf32> -> vector<128x128xf32>
    "tpu.trace_stop"() : () -> ()
    %cst_8 = arith.constant dense<0xFF800000> : vector<128xf32>
    %21 = vector.multi_reduction <maximumf>, %20, %cst_8 [1] : vector<128x128xf32> to vector<128xf32>
    %22 = vector.shape_cast %21 : vector<128xf32> to vector<128x1xf32>
    %23 = vector.broadcast %22 : vector<128x1xf32> to vector<128x128xf32>
    %24 = arith.subf %20, %23 : vector<128x128xf32>
    %25 = math.exp %24 : vector<128x128xf32>
    %cst_9 = arith.constant dense<0.000000e+00> : vector<128xf32>
    %26 = vector.multi_reduction <add>, %25, %cst_9 [1] : vector<128x128xf32> to vector<128xf32>
    %27 = vector.shape_cast %26 : vector<128xf32> to vector<128x1xf32>
    %28 = vector.broadcast %27 : vector<128x1xf32> to vector<128x128xf32>
    %29 = arith.divf %25, %28 : vector<128x128xf32>
    %30 = arith.truncf %29 : vector<128x128xf32> to vector<128x128xbf16>
    %c0_10 = arith.constant 0 : index
    %c0_11 = arith.constant 0 : index
    %c0_12 = arith.constant 0 : index
    %c0_13 = arith.constant 0 : index
    %31 = vector.load %arg15[%c0_10, %c0_11, %c0_12, %c0_13] : memref<1x4x128x128xbf16, #tpu.memory_space<vmem>>, vector<1x1x128x128xbf16>
    %32 = vector.shape_cast %31 : vector<1x1x128x128xbf16> to vector<128x128xbf16>
    %33 = vector.shape_cast %30 : vector<128x128xbf16> to vector<1x1x128x128xbf16>
    tpu.vector_store %arg15[%c0_10, %c0_11, %c0_12, %c0_13], %33 {strides = array<i32>} : memref<1x4x128x128xbf16, #tpu.memory_space<vmem>>, vector<1x1x128x128xbf16>,
    %34 = arith.truncf %29 : vector<128x128xf32> to vector<128x128xbf16>
    %35 = vector.extract_strided_slice %17 {offsets = [0, 0], sizes = [128, 32], strides = [1, 1]} : vector<128x128xbf16> to vector<128x32xbf16>
    %cst_14 = arith.constant dense<0.000000e+00> : vector<128x32xf32>
    %36 = tpu.matmul %34, %35, %cst_14 {dimension_numbers = #tpu.dot_dimension_numbers<[1], [0], [0], [1], [0, 0, 1, 1], [], []>} : vector<128x128xbf16>, vector<128x32xbf16>, vector<128x32xf32> -> vector<128x32xf32>
    %37 = vector.extract_strided_slice %13 {offsets = [0, 32], sizes = [128, 32], strides = [1, 1]} : vector<128x128xbf16> to vector<128x32xbf16>
    %38 = vector.extract_strided_slice %15 {offsets = [0, 32], sizes = [128, 32], strides = [1, 1]} : vector<128x128xbf16> to vector<128x32xbf16>
    "tpu.trace_start"() <{level = 10 : i32, message = "qd,kd->qk"}> : () -> ()
    %cst_15 = arith.constant dense<0.000000e+00> : vector<128x128xf32>
    %39 = tpu.matmul %37, %38, %cst_15 {dimension_numbers = #tpu.dot_dimension_numbers<[1], [1], [0], [0], [0, 0, 1, 0], [], []>} : vector<128x32xbf16>, vector<128x32xbf16>, vector<128x128xf32> -> vector<128x128xf32>
    "tpu.trace_stop"() : () -> ()
    %cst_16 = arith.constant dense<0xFF800000> : vector<128xf32>
    %40 = vector.multi_reduction <maximumf>, %39, %cst_16 [1] : vector<128x128xf32> to vector<128xf32>
    %41 = vector.shape_cast %40 : vector<128xf32> to vector<128x1xf32>
    %42 = vector.broadcast %41 : vector<128x1xf32> to vector<128x128xf32>
    %43 = arith.subf %39, %42 : vector<128x128xf32>
    %44 = math.exp %43 : vector<128x128xf32>
    %cst_17 = arith.constant dense<0.000000e+00> : vector<128xf32>
    %45 = vector.multi_reduction <add>, %44, %cst_17 [1] : vector<128x128xf32> to vector<128xf32>
    %46 = vector.shape_cast %45 : vector<128xf32> to vector<128x1xf32>
    %47 = vector.broadcast %46 : vector<128x1xf32> to vector<128x128xf32>
    %48 = arith.divf %44, %47 : vector<128x128xf32>
    %49 = arith.truncf %48 : vector<128x128xf32> to vector<128x128xbf16>
    %c0_18 = arith.constant 0 : index
    %c1 = arith.constant 1 : index
    %c0_19 = arith.constant 0 : index
    %c0_20 = arith.constant 0 : index
    %50 = vector.load %arg15[%c0_18, %c1, %c0_19, %c0_20] : memref<1x4x128x128xbf16, #tpu.memory_space<vmem>>, vector<1x1x128x128xbf16>
    %51 = vector.shape_cast %50 : vector<1x1x128x128xbf16> to vector<128x128xbf16>
    %52 = vector.shape_cast %49 : vector<128x128xbf16> to vector<1x1x128x128xbf16>
    tpu.vector_store %arg15[%c0_18, %c1, %c0_19, %c0_20], %52 {strides = array<i32>} : memref<1x4x128x128xbf16, #tpu.memory_space<vmem>>, vector<1x1x128x128xbf16>,
    %53 = arith.truncf %48 : vector<128x128xf32> to vector<128x128xbf16>
    %54 = vector.extract_strided_slice %17 {offsets = [0, 32], sizes = [128, 32], strides = [1, 1]} : vector<128x128xbf16> to vector<128x32xbf16>
    %cst_21 = arith.constant dense<0.000000e+00> : vector<128x32xf32>
    %55 = tpu.matmul %53, %54, %cst_21 {dimension_numbers = #tpu.dot_dimension_numbers<[1], [0], [0], [1], [0, 0, 1, 1], [], []>} : vector<128x128xbf16>, vector<128x32xbf16>, vector<128x32xf32> -> vector<128x32xf32>
    %56 = vector.extract_strided_slice %13 {offsets = [0, 64], sizes = [128, 32], strides = [1, 1]} : vector<128x128xbf16> to vector<128x32xbf16>
    %57 = vector.extract_strided_slice %15 {offsets = [0, 64], sizes = [128, 32], strides = [1, 1]} : vector<128x128xbf16> to vector<128x32xbf16>
    "tpu.trace_start"() <{level = 10 : i32, message = "qd,kd->qk"}> : () -> ()
    %cst_22 = arith.constant dense<0.000000e+00> : vector<128x128xf32>
    %58 = tpu.matmul %56, %57, %cst_22 {dimension_numbers = #tpu.dot_dimension_numbers<[1], [1], [0], [0], [0, 0, 1, 0], [], []>} : vector<128x32xbf16>, vector<128x32xbf16>, vector<128x128xf32> -> vector<128x128xf32>
    "tpu.trace_stop"() : () -> ()
    %cst_23 = arith.constant dense<0xFF800000> : vector<128xf32>
    %59 = vector.multi_reduction <maximumf>, %58, %cst_23 [1] : vector<128x128xf32> to vector<128xf32>
    %60 = vector.shape_cast %59 : vector<128xf32> to vector<128x1xf32>
    %61 = vector.broadcast %60 : vector<128x1xf32> to vector<128x128xf32>
    %62 = arith.subf %58, %61 : vector<128x128xf32>
    %63 = math.exp %62 : vector<128x128xf32>
    %cst_24 = arith.constant dense<0.000000e+00> : vector<128xf32>
    %64 = vector.multi_reduction <add>, %63, %cst_24 [1] : vector<128x128xf32> to vector<128xf32>
    %65 = vector.shape_cast %64 : vector<128xf32> to vector<128x1xf32>
    %66 = vector.broadcast %65 : vector<128x1xf32> to vector<128x128xf32>
    %67 = arith.divf %63, %66 : vector<128x128xf32>
    %68 = arith.truncf %67 : vector<128x128xf32> to vector<128x128xbf16>
    %c0_25 = arith.constant 0 : index
    %c2 = arith.constant 2 : index
    %c0_26 = arith.constant 0 : index
    %c0_27 = arith.constant 0 : index
    %69 = vector.load %arg15[%c0_25, %c2, %c0_26, %c0_27] : memref<1x4x128x128xbf16, #tpu.memory_space<vmem>>, vector<1x1x128x128xbf16>
    %70 = vector.shape_cast %69 : vector<1x1x128x128xbf16> to vector<128x128xbf16>
    %71 = vector.shape_cast %68 : vector<128x128xbf16> to vector<1x1x128x128xbf16>
    tpu.vector_store %arg15[%c0_25, %c2, %c0_26, %c0_27], %71 {strides = array<i32>} : memref<1x4x128x128xbf16, #tpu.memory_space<vmem>>, vector<1x1x128x128xbf16>,
    %72 = arith.truncf %67 : vector<128x128xf32> to vector<128x128xbf16>
    %73 = vector.extract_strided_slice %17 {offsets = [0, 64], sizes = [128, 32], strides = [1, 1]} : vector<128x128xbf16> to vector<128x32xbf16>
    %cst_28 = arith.constant dense<0.000000e+00> : vector<128x32xf32>
    %74 = tpu.matmul %72, %73, %cst_28 {dimension_numbers = #tpu.dot_dimension_numbers<[1], [0], [0], [1], [0, 0, 1, 1], [], []>} : vector<128x128xbf16>, vector<128x32xbf16>, vector<128x32xf32> -> vector<128x32xf32>
    %75 = vector.extract_strided_slice %13 {offsets = [0, 96], sizes = [128, 32], strides = [1, 1]} : vector<128x128xbf16> to vector<128x32xbf16>
    %76 = vector.extract_strided_slice %15 {offsets = [0, 96], sizes = [128, 32], strides = [1, 1]} : vector<128x128xbf16> to vector<128x32xbf16>
    "tpu.trace_start"() <{level = 10 : i32, message = "qd,kd->qk"}> : () -> ()
    %cst_29 = arith.constant dense<0.000000e+00> : vector<128x128xf32>
    %77 = tpu.matmul %75, %76, %cst_29 {dimension_numbers = #tpu.dot_dimension_numbers<[1], [1], [0], [0], [0, 0, 1, 0], [], []>} : vector<128x32xbf16>, vector<128x32xbf16>, vector<128x128xf32> -> vector<128x128xf32>
    "tpu.trace_stop"() : () -> ()
    %cst_30 = arith.constant dense<0xFF800000> : vector<128xf32>
    %78 = vector.multi_reduction <maximumf>, %77, %cst_30 [1] : vector<128x128xf32> to vector<128xf32>
    %79 = vector.shape_cast %78 : vector<128xf32> to vector<128x1xf32>
    %80 = vector.broadcast %79 : vector<128x1xf32> to vector<128x128xf32>
    %81 = arith.subf %77, %80 : vector<128x128xf32>
    %82 = math.exp %81 : vector<128x128xf32>
    %cst_31 = arith.constant dense<0.000000e+00> : vector<128xf32>
    %83 = vector.multi_reduction <add>, %82, %cst_31 [1] : vector<128x128xf32> to vector<128xf32>
    %84 = vector.shape_cast %83 : vector<128xf32> to vector<128x1xf32>
    %85 = vector.broadcast %84 : vector<128x1xf32> to vector<128x128xf32>
    %86 = arith.divf %82, %85 : vector<128x128xf32>
    %87 = arith.truncf %86 : vector<128x128xf32> to vector<128x128xbf16>
    %c0_32 = arith.constant 0 : index
    %c3 = arith.constant 3 : index
    %c0_33 = arith.constant 0 : index
    %c0_34 = arith.constant 0 : index
    %88 = vector.load %arg15[%c0_32, %c3, %c0_33, %c0_34] : memref<1x4x128x128xbf16, #tpu.memory_space<vmem>>, vector<1x1x128x128xbf16>
    %89 = vector.shape_cast %88 : vector<1x1x128x128xbf16> to vector<128x128xbf16>
    %90 = vector.shape_cast %87 : vector<128x128xbf16> to vector<1x1x128x128xbf16>
    tpu.vector_store %arg15[%c0_32, %c3, %c0_33, %c0_34], %90 {strides = array<i32>} : memref<1x4x128x128xbf16, #tpu.memory_space<vmem>>, vector<1x1x128x128xbf16>,
    %91 = arith.truncf %86 : vector<128x128xf32> to vector<128x128xbf16>
    %92 = vector.extract_strided_slice %17 {offsets = [0, 96], sizes = [128, 32], strides = [1, 1]} : vector<128x128xbf16> to vector<128x32xbf16>
    %cst_35 = arith.constant dense<0.000000e+00> : vector<128x32xf32>
    %93 = tpu.matmul %91, %92, %cst_35 {dimension_numbers = #tpu.dot_dimension_numbers<[1], [0], [0], [1], [0, 0, 1, 1], [], []>} : vector<128x128xbf16>, vector<128x32xbf16>, vector<128x32xf32> -> vector<128x32xf32>
    %94 = tpu.concatenate %36, %55, %74, %93 in 1 : vector<128x32xf32>, vector<128x32xf32>, vector<128x32xf32>, vector<128x32xf32> -> vector<128x128xf32>
    %95 = arith.truncf %94 : vector<128x128xf32> to vector<128x128xbf16>
    %c0_36 = arith.constant 0 : index
    %c0_37 = arith.constant 0 : index
    %96 = vector.load %arg4[%c0_36, %c0_37] : memref<128x128xbf16, #tpu.memory_space<vmem>>, vector<128x128xbf16>
    %cst_38 = arith.constant dense<0.000000e+00> : vector<128x128xf32>
    %97 = tpu.matmul %95, %96, %cst_38 {dimension_numbers = #tpu.dot_dimension_numbers<[1], [0], [0], [1], [0, 0, 1, 1], [], []>} : vector<128x128xbf16>, vector<128x128xbf16>, vector<128x128xf32> -> vector<128x128xf32>
    %c0_39 = arith.constant 0 : index
    %c0_40 = arith.constant 0 : index
    %98 = vector.load %arg5[%c0_39, %c0_40] : memref<1x128xf32, #tpu.memory_space<vmem>>, vector<1x128xf32>
    %99 = vector.shape_cast %98 : vector<1x128xf32> to vector<128xf32>
    %100 = vector.shape_cast %99 : vector<128xf32> to vector<1x128xf32>
    %101 = vector.broadcast %100 : vector<1x128xf32> to vector<128x128xf32>
    %102 = arith.addf %97, %101 : vector<128x128xf32>
    %c0_41 = arith.constant 0 : index
    %c0_42 = arith.constant 0 : index
    %103 = vector.load %arg6[%c0_41, %c0_42] : memref<1x128xf32, #tpu.memory_space<vmem>>, vector<1x128xf32>
    %104 = vector.shape_cast %103 : vector<1x128xf32> to vector<128xf32>
    %c0_43 = arith.constant 0 : index
    %c0_44 = arith.constant 0 : index
    %105 = vector.load %arg7[%c0_43, %c0_44] : memref<1x128xf32, #tpu.memory_space<vmem>>, vector<1x128xf32>
    %106 = vector.shape_cast %105 : vector<1x128xf32> to vector<128xf32>
    %cst_45 = arith.constant dense<0.000000e+00> : vector<128xf32>
    %107 = vector.multi_reduction <add>, %102, %cst_45 [1] : vector<128x128xf32> to vector<128xf32>
    %108 = vector.shape_cast %107 : vector<128xf32> to vector<128x1xf32>
    %cst_46 = arith.constant 1.280000e+02 : f32
    %109 = vector.broadcast %cst_46 : f32 to vector<128x1xf32>
    %110 = arith.divf %108, %109 : vector<128x1xf32>
    %111 = vector.broadcast %110 : vector<128x1xf32> to vector<128x128xf32>
    %112 = arith.subf %102, %111 : vector<128x128xf32>
    %113 = arith.mulf %112, %112 : vector<128x128xf32>
    %cst_47 = arith.constant dense<0.000000e+00> : vector<128xf32>
    %114 = vector.multi_reduction <add>, %113, %cst_47 [1] : vector<128x128xf32> to vector<128xf32>
    %115 = vector.shape_cast %114 : vector<128xf32> to vector<128x1xf32>
    %cst_48 = arith.constant 1.280000e+02 : f32
    %116 = vector.broadcast %cst_48 : f32 to vector<128x1xf32>
    %117 = arith.divf %115, %116 : vector<128x1xf32>
    %118 = vector.broadcast %110 : vector<128x1xf32> to vector<128x128xf32>
    %119 = arith.subf %102, %118 : vector<128x128xf32>
    %cst_49 = arith.constant 9.99999974E-6 : f32
    %120 = vector.broadcast %cst_49 : f32 to vector<128x1xf32>
    %121 = arith.addf %117, %120 : vector<128x1xf32>
    %122 = math.rsqrt %121 : vector<128x1xf32>
    %123 = vector.broadcast %122 : vector<128x1xf32> to vector<128x128xf32>
    %124 = arith.mulf %119, %123 : vector<128x128xf32>
    %125 = vector.shape_cast %104 : vector<128xf32> to vector<1x128xf32>
    %126 = vector.broadcast %125 : vector<1x128xf32> to vector<128x128xf32>
    %127 = arith.mulf %124, %126 : vector<128x128xf32>
    %128 = vector.shape_cast %106 : vector<128xf32> to vector<1x128xf32>
    %129 = vector.broadcast %128 : vector<1x128xf32> to vector<128x128xf32>
    %130 = arith.addf %127, %129 : vector<128x128xf32>
    %131 = arith.addf %1, %130 : vector<128x128xf32>
    %132 = arith.truncf %131 : vector<128x128xf32> to vector<128x128xbf16>
    %c0_50 = arith.constant 0 : index
    %c0_51 = arith.constant 0 : index
    %133 = vector.load %arg8[%c0_50, %c0_51] : memref<128x256xbf16, #tpu.memory_space<vmem>>, vector<128x256xbf16>
    %cst_52 = arith.constant dense<0.000000e+00> : vector<128x256xf32>
    %134 = tpu.matmul %132, %133, %cst_52 {dimension_numbers = #tpu.dot_dimension_numbers<[1], [0], [0], [1], [0, 0, 1, 1], [], []>} : vector<128x128xbf16>, vector<128x256xbf16>, vector<128x256xf32> -> vector<128x256xf32>
    %c0_53 = arith.constant 0 : index
    %c0_54 = arith.constant 0 : index
    %135 = vector.load %arg9[%c0_53, %c0_54] : memref<1x256xf32, #tpu.memory_space<vmem>>, vector<1x256xf32>
    %136 = vector.shape_cast %135 : vector<1x256xf32> to vector<256xf32>
    %137 = vector.shape_cast %136 : vector<256xf32> to vector<1x256xf32>
    %138 = vector.broadcast %137 : vector<1x256xf32> to vector<128x256xf32>
    %139 = arith.addf %134, %138 : vector<128x256xf32>
    %cst_55 = arith.constant 5.000000e-01 : f32
    %140 = vector.broadcast %cst_55 : f32 to vector<128x256xf32>
    %141 = arith.mulf %140, %139 : vector<128x256xf32>
    %cst_56 = arith.constant 0.707106769 : f32
    %142 = vector.broadcast %cst_56 : f32 to vector<128x256xf32>
    %143 = arith.mulf %139, %142 : vector<128x256xf32>
    %144 = math.erf %143 : vector<128x256xf32>
    %cst_57 = arith.constant 1.000000e+00 : f32
    %145 = vector.broadcast %cst_57 : f32 to vector<128x256xf32>
    %146 = arith.addf %145, %144 : vector<128x256xf32>
    %147 = arith.mulf %141, %146 : vector<128x256xf32>
    %148 = arith.truncf %147 : vector<128x256xf32> to vector<128x256xbf16>
    %c0_58 = arith.constant 0 : index
    %c0_59 = arith.constant 0 : index
    %149 = vector.load %arg10[%c0_58, %c0_59] : memref<256x128xbf16, #tpu.memory_space<vmem>>, vector<256x128xbf16>
    %cst_60 = arith.constant dense<0.000000e+00> : vector<128x128xf32>
    %150 = tpu.matmul %148, %149, %cst_60 {dimension_numbers = #tpu.dot_dimension_numbers<[1], [0], [0], [1], [0, 0, 1, 1], [], []>} : vector<128x256xbf16>, vector<256x128xbf16>, vector<128x128xf32> -> vector<128x128xf32>
    %c0_61 = arith.constant 0 : index
    %c0_62 = arith.constant 0 : index
    %151 = vector.load %arg11[%c0_61, %c0_62] : memref<1x128xf32, #tpu.memory_space<vmem>>, vector<1x128xf32>
    %152 = vector.shape_cast %151 : vector<1x128xf32> to vector<128xf32>
    %153 = vector.shape_cast %152 : vector<128xf32> to vector<1x128xf32>
    %154 = vector.broadcast %153 : vector<1x128xf32> to vector<128x128xf32>
    %155 = arith.addf %150, %154 : vector<128x128xf32>
    %156 = arith.addf %131, %155 : vector<128x128xf32>
    %c0_63 = arith.constant 0 : index
    %c0_64 = arith.constant 0 : index
    %157 = vector.load %arg12[%c0_63, %c0_64] : memref<1x128xf32, #tpu.memory_space<vmem>>, vector<1x128xf32>
    %158 = vector.shape_cast %157 : vector<1x128xf32> to vector<128xf32>
    %c0_65 = arith.constant 0 : index
    %c0_66 = arith.constant 0 : index
    %159 = vector.load %arg13[%c0_65, %c0_66] : memref<1x128xf32, #tpu.memory_space<vmem>>, vector<1x128xf32>
    %160 = vector.shape_cast %159 : vector<1x128xf32> to vector<128xf32>
    %cst_67 = arith.constant dense<0.000000e+00> : vector<128xf32>
    %161 = vector.multi_reduction <add>, %156, %cst_67 [1] : vector<128x128xf32> to vector<128xf32>
    %162 = vector.shape_cast %161 : vector<128xf32> to vector<128x1xf32>
    %cst_68 = arith.constant 1.280000e+02 : f32
    %163 = vector.broadcast %cst_68 : f32 to vector<128x1xf32>
    %164 = arith.divf %162, %163 : vector<128x1xf32>
    %165 = vector.broadcast %164 : vector<128x1xf32> to vector<128x128xf32>
    %166 = arith.subf %156, %165 : vector<128x128xf32>
    %167 = arith.mulf %166, %166 : vector<128x128xf32>
    %cst_69 = arith.constant dense<0.000000e+00> : vector<128xf32>
    %168 = vector.multi_reduction <add>, %167, %cst_69 [1] : vector<128x128xf32> to vector<128xf32>
    %169 = vector.shape_cast %168 : vector<128xf32> to vector<128x1xf32>
    %cst_70 = arith.constant 1.280000e+02 : f32
    %170 = vector.broadcast %cst_70 : f32 to vector<128x1xf32>
    %171 = arith.divf %169, %170 : vector<128x1xf32>
    %172 = vector.broadcast %164 : vector<128x1xf32> to vector<128x128xf32>
    %173 = arith.subf %156, %172 : vector<128x128xf32>
    %cst_71 = arith.constant 9.99999974E-6 : f32
    %174 = vector.broadcast %cst_71 : f32 to vector<128x1xf32>
    %175 = arith.addf %171, %174 : vector<128x1xf32>
    %176 = math.rsqrt %175 : vector<128x1xf32>
    %177 = vector.broadcast %176 : vector<128x1xf32> to vector<128x128xf32>
    %178 = arith.mulf %173, %177 : vector<128x128xf32>
    %179 = vector.shape_cast %158 : vector<128xf32> to vector<1x128xf32>
    %180 = vector.broadcast %179 : vector<1x128xf32> to vector<128x128xf32>
    %181 = arith.mulf %178, %180 : vector<128x128xf32>
    %182 = vector.shape_cast %160 : vector<128xf32> to vector<1x128xf32>
    %183 = vector.broadcast %182 : vector<1x128xf32> to vector<128x128xf32>
    %184 = arith.addf %181, %183 : vector<128x128xf32>
    %185 = arith.addf %131, %184 : vector<128x128xf32>
    %c0_72 = arith.constant 0 : index
    %c0_73 = arith.constant 0 : index
    %c0_74 = arith.constant 0 : index
    %186 = vector.load %arg14[%c0_72, %c0_73, %c0_74] : memref<1x128x128xf32, #tpu.memory_space<vmem>>, vector<1x128x128xf32>
    %187 = vector.shape_cast %186 : vector<1x128x128xf32> to vector<128x128xf32>
    %188 = vector.shape_cast %185 : vector<128x128xf32> to vector<1x128x128xf32>
    tpu.vector_store %arg14[%c0_72, %c0_73, %c0_74], %188 {strides = array<i32>} : memref<1x128x128xf32, #tpu.memory_space<vmem>>, vector<1x128x128xf32>,
    return
  }
  func.func @transform_0(%arg0: i32) -> (i32, i32, i32) {
    %c0_i32 = arith.constant 0 : i32
    %c0_i32_0 = arith.constant 0 : i32
    %c0_i32_1 = arith.constant 0 : i32
    return %arg0, %c0_i32, %c0_i32_0 : i32, i32, i32
  }
  func.func @transform_1(%arg0: i32) -> (i32, i32) {
    %c0_i32 = arith.constant 0 : i32
    %c0_i32_0 = arith.constant 0 : i32
    %c0_i32_1 = arith.constant 0 : i32
    return %c0_i32, %c0_i32_0 : i32, i32
  }
  func.func @transform_2(%arg0: i32) -> (i32, i32) {
    %c0_i32 = arith.constant 0 : i32
    %c0_i32_0 = arith.constant 0 : i32
    %c0_i32_1 = arith.constant 0 : i32
    return %c0_i32, %c0_i32_0 : i32, i32
  }
  func.func @transform_3(%arg0: i32) -> (i32, i32) {
    %c0_i32 = arith.constant 0 : i32
    %c0_i32_0 = arith.constant 0 : i32
    %c0_i32_1 = arith.constant 0 : i32
    return %c0_i32, %c0_i32_0 : i32, i32
  }
  func.func @transform_4(%arg0: i32) -> (i32, i32) {
    %c0_i32 = arith.constant 0 : i32
    %c0_i32_0 = arith.constant 0 : i32
    %c0_i32_1 = arith.constant 0 : i32
    return %c0_i32, %c0_i32_0 : i32, i32
  }
  func.func @transform_5(%arg0: i32) -> (i32, i32) {
    %c0_i32 = arith.constant 0 : i32
    %c0_i32_0 = arith.constant 0 : i32
    %c0_i32_1 = arith.constant 0 : i32
    return %c0_i32, %c0_i32_0 : i32, i32
  }
  func.func @transform_6(%arg0: i32) -> (i32, i32) {
    %c0_i32 = arith.constant 0 : i32
    %c0_i32_0 = arith.constant 0 : i32
    %c0_i32_1 = arith.constant 0 : i32
    return %c0_i32, %c0_i32_0 : i32, i32
  }
  func.func @transform_7(%arg0: i32) -> (i32, i32) {
    %c0_i32 = arith.constant 0 : i32
    %c0_i32_0 = arith.constant 0 : i32
    %c0_i32_1 = arith.constant 0 : i32
    return %c0_i32, %c0_i32_0 : i32, i32
  }
  func.func @transform_8(%arg0: i32) -> (i32, i32) {
    %c0_i32 = arith.constant 0 : i32
    %c0_i32_0 = arith.constant 0 : i32
    %c0_i32_1 = arith.constant 0 : i32
    return %c0_i32, %c0_i32_0 : i32, i32
  }
  func.func @transform_9(%arg0: i32) -> (i32, i32) {
    %c0_i32 = arith.constant 0 : i32
    %c0_i32_0 = arith.constant 0 : i32
    %c0_i32_1 = arith.constant 0 : i32
    return %c0_i32, %c0_i32_0 : i32, i32
  }
  func.func @transform_10(%arg0: i32) -> (i32, i32) {
    %c0_i32 = arith.constant 0 : i32
    %c0_i32_0 = arith.constant 0 : i32
    %c0_i32_1 = arith.constant 0 : i32
    return %c0_i32, %c0_i32_0 : i32, i32
  }
  func.func @transform_11(%arg0: i32) -> (i32, i32) {
    %c0_i32 = arith.constant 0 : i32
    %c0_i32_0 = arith.constant 0 : i32
    %c0_i32_1 = arith.constant 0 : i32
    return %c0_i32, %c0_i32_0 : i32, i32
  }
  func.func @transform_12(%arg0: i32) -> (i32, i32) {
    %c0_i32 = arith.constant 0 : i32
    %c0_i32_0 = arith.constant 0 : i32
    %c0_i32_1 = arith.constant 0 : i32
    return %c0_i32, %c0_i32_0 : i32, i32
  }
  func.func @transform_13(%arg0: i32) -> (i32, i32, i32) {
    %c0_i32 = arith.constant 0 : i32
    %c0_i32_0 = arith.constant 0 : i32
    %c0_i32_1 = arith.constant 0 : i32
    return %arg0, %c0_i32, %c0_i32_0 : i32, i32, i32
  }
  func.func @transform_14(%arg0: i32) -> (i32, i32, i32, i32) {
    %c0_i32 = arith.constant 0 : i32
    %c0_i32_0 = arith.constant 0 : i32
    %c0_i32_1 = arith.constant 0 : i32
    %c0_i32_2 = arith.constant 0 : i32
    return %arg0, %c0_i32, %c0_i32_0, %c0_i32_1 : i32, i32, i32, i32
  }
}

</mosaic_0001>

<llo_original>
// kernel: tpu_custom_call.1
$region0: #{tpu_custom_call.1}
  #allocation0 [shape = 'u32[]', space=smem, size = 0x4, offset = 0x4, fixed_abs, tag = 'smem constant byte address 0x4 - core index']
  #allocation1 [shape = 'u32[144,128]{1,0:T(1,128)}', space=vmem, size = 0x12000, scoped, tag = 'internal scratch']
  %s0 = inlined_call_operand.hbm [shape: f32[2,128,128], index: 0, kind: input, shape index: {}]
  %s1 = inlined_call_operand.hbm [shape: bf16[128,384], index: 1, kind: input, shape index: {}]
  %s2 = inlined_call_operand.vmem [shape: f32[1,384], index: 2, kind: input, shape index: {}]
  %s3 = inlined_call_operand.hbm [shape: bf16[128,128], index: 3, kind: input, shape index: {}]
  %s4 = inlined_call_operand.vmem [shape: f32[1,128], index: 4, kind: input, shape index: {}]
  %s5 = inlined_call_operand.vmem [shape: f32[1,128], index: 5, kind: input, shape index: {}]
  %s6 = inlined_call_operand.vmem [shape: f32[1,128], index: 6, kind: input, shape index: {}]
  %s7 = inlined_call_operand.hbm [shape: bf16[128,256], index: 7, kind: input, shape index: {}]
  %s8 = inlined_call_operand.vmem [shape: f32[1,256], index: 8, kind: input, shape index: {}]
  %s9 = inlined_call_operand.hbm [shape: bf16[256,128], index: 9, kind: input, shape index: {}]
  %s10 = inlined_call_operand.vmem [shape: f32[1,128], index: 10, kind: input, shape index: {}]
  %s11 = inlined_call_operand.vmem [shape: f32[1,128], index: 11, kind: input, shape index: {}]
  %s12 = inlined_call_operand.vmem [shape: f32[1,128], index: 12, kind: input, shape index: {}]
  %s13 = inlined_call_operand.hbm [shape: f32[2,128,128], index: 13, kind: output, shape index: {0}]
  %s14 = inlined_call_operand.hbm [shape: bf16[2,4,128,128], index: 14, kind: output, shape index: {1}]
  %15 = xla_tuple %s13, %s14
  %s16 = sld [smem:[#allocation0]]
  $region113: #{tpu_custom_call.1} parent=0
    _
  %s18 = ssub.s32 1, %s16
  %s19 = scalar_select 0, %s18, %s16
  $region1: #{tpu_custom_call.1} parent=0
    #allocation2 [shape = 'u8[131072]{0}', space=vmem, size = 0x20000, scoped, tag = 'input window, operand 0']
    #allocation3 [shape = 's32[2]{0}', space=sflag, size = 0x8, scoped, tag = 'scoped memory for tpu_custom_call.1']
    #allocation4 [shape = 's32[2]{0}', space=sflag, size = 0x8, scoped, tag = 'scoped memory for tpu_custom_call.1']
    #allocation5 [shape = 'u8[98304]{0}', space=vmem, size = 0x18000, scoped, tag = 'input window, operand 1, single buffered']
    #allocation6 [shape = 's32[1]{0}', space=sflag, size = 0x4, scoped, tag = 'scoped memory for tpu_custom_call.1']
    #allocation7 [shape = 'u8[32768]{0}', space=vmem, size = 0x8000, scoped, tag = 'input window, operand 3, single buffered']
    #allocation8 [shape = 'u8[65536]{0}', space=vmem, size = 0x10000, scoped, tag = 'input window, operand 7, single buffered']
    #allocation9 [shape = 's32[1]{0}', space=sflag, size = 0x4, scoped, tag = 'scoped memory for tpu_custom_call.1']
    #allocation10 [shape = 'u8[65536]{0}', space=vmem, size = 0x10000, scoped, tag = 'input window, operand 9, single buffered']
    #allocation11 [shape = 'u8[131072]{0}', space=vmem, size = 0x20000, scoped, tag = 'output window, operand 0']
    #allocation12 [shape = 'u8[262144]{0}', space=vmem, size = 0x40000, scoped, tag = 'output window, operand 1']
    #allocation13 [shape = 's32[2]{0}', space=sflag, size = 0x8, scoped, tag = 'scoped memory for tpu_custom_call.1']
    %20 = vsyncpa [#allocation3], 0
    %s21 = scalar_lea.sflag [#allocation3], 1
    %22 = vsyncpa %s21, 0
    %23 = vsyncpa [#allocation6], 0
    %24 = vsyncpa [#allocation9], 0
    %25 = vsyncpa [#allocation4], 0
    %s26 = scalar_lea.sflag [#allocation4], 1
    %27 = vsyncpa %s26, 0
    %28 = vsyncpa [#allocation13], 0
    %s29 = scalar_lea.sflag [#allocation13], 1
    %30 = vsyncpa %s29, 0
    loop: start=0, step=1, limit=4
    $region2: #{tpu_custom_call.1} parent=1 // loop_pre_header
      _
    $region3: #{tpu_custom_call.1} parent=1 // loop_header
      %s32 = sphi 0, %s36
      %p33 = scmp.ge.s32.totalorder %s32, 4
      %s42 = sphi 0, %s44
      %s45 = sphi 0, %s42
      %s46 = sphi 0, %s45
      %s62 = sphi 0, %s46
      %s66 = sphi 0, %s66
      %s68 = sphi 0, %s66
      %s69 = sphi 0, %s68
      %s83 = sphi 0, %s69
      %s87 = sphi 0, %s87
      %s89 = sphi 0, %s87
      %s90 = sphi 0, %s89
      %s104 = sphi 0, %s90
      %s108 = sphi 0, %s108
      %s110 = sphi 0, %s108
      %s111 = sphi 0, %s110
      %s125 = sphi 0, %s111
      %s129 = sphi 0, %s129
      %s131 = sphi 0, %s129
      %s132 = sphi 0, %s131
      %s146 = sphi 0, %s132
      %s150 = sphi 0, %s150
      %s152 = sphi 0, %s150
      %s153 = sphi 0, %s152
      %s167 = sphi 0, %s153
      %s171 = sphi 0, %s171
      %s173 = sphi 0, %s171
      %s174 = sphi 0, %s173
      %s188 = sphi 0, %s174
      %s192 = sphi 0, %s192
      %s194 = sphi 0, %s192
      %s195 = sphi 0, %s194
      %s209 = sphi 0, %s195
      %s213 = sphi 0, %s213
      %s215 = sphi 0, %s213
      %s216 = sphi 0, %s215
      %s230 = sphi 0, %s216
      %s234 = sphi 0, %s234
      %s236 = sphi 0, %s234
      %s237 = sphi 0, %s236
      %s251 = sphi 0, %s237
      %s255 = sphi 0, %s255
      %s257 = sphi 0, %s255
      %s258 = sphi 0, %s257
      %s272 = sphi 0, %s258
      %s276 = sphi 0, %s276
      %s278 = sphi 0, %s276
      %s279 = sphi 0, %s278
      %s293 = sphi 0, %s279
      %s297 = sphi 0, %s297
      %s299 = sphi 0, %s297
      %s300 = sphi 0, %s299
      %s314 = sphi 0, %s300
      %s320 = sphi 0, %s322
      %s323 = sphi 0, %s320
      %s324 = sphi 0, %s323
      %s340 = sphi 0, %s324
      %s346 = sphi 0, %s348
      %s349 = sphi 0, %s346
      %s350 = sphi 0, %s349
      %s366 = sphi 0, %s350
    $region4: #{tpu_custom_call.1} parent=1 // loop_header_branch
      %35 = sbr.rel (%p33) target = $region8
    $region5: #{tpu_custom_call.1} parent=1 // loop_body
      %s37 = ssub.s32 %s32, 1
      %s38 = ssub.s32 %s32, 2
      %s39 = sadd.s32 %s32, 1
      %s40 = ssub.s32 %s32, %s39
      %p41 = scmp.eq.s32.totalorder %s40, 0
      %s43 = sadd.s32 %s42, 1
      %s44 = scalar_select %p41, %s42, %s43
      %p47 = pneg %p41
      %p48 = scmp.eq.s32.totalorder %s32, 1
      %p49 = por %p47, %p48
      %p50 = scmp.ne.s32.totalorder %s42, %s45
      %p51 = scmp.eq.s32.totalorder %s32, 0
      %p52 = por %p50, %p51
      %p53 = scmp.ne.s32.totalorder %s42, %s45
      %p54 = scmp.eq.s32.totalorder %s37, 1
      %p55 = por %p53, %p54
      %p56 = scmp.ne.s32.totalorder %s45, %s46
      %p57 = scmp.eq.s32.totalorder %s37, 0
      %p58 = por %p56, %p57
      %p59 = scmp.ne.s32.totalorder %s45, %s46
      %p60 = scmp.eq.s32.totalorder %s38, 1
      %p61 = por %p59, %p60
      %p63 = scmp.ne.s32.totalorder %s46, %s62
      %p64 = scmp.eq.s32.totalorder %s38, 0
      %p65 = por %p63, %p64
      %s67 = sadd.s32 %s66, 1
      %p70 = scmp.eq.s32.totalorder %s32, 1
      %p71 = scmp.ne.s32.totalorder %s66, %s68
      %p72 = scmp.eq.s32.totalorder %s32, 0
      %p73 = por %p71, %p72
      %p74 = scmp.ne.s32.totalorder %s66, %s68
      %p75 = scmp.eq.s32.totalorder %s37, 1
      %p76 = por %p74, %p75
      %p77 = scmp.ne.s32.totalorder %s68, %s69
      %p78 = scmp.eq.s32.totalorder %s37, 0
      %p79 = por %p77, %p78
      %p80 = scmp.ne.s32.totalorder %s68, %s69
      %p81 = scmp.eq.s32.totalorder %s38, 1
      %p82 = por %p80, %p81
      %p84 = scmp.ne.s32.totalorder %s69, %s83
      %p85 = scmp.eq.s32.totalorder %s38, 0
      %p86 = por %p84, %p85
      %s88 = sadd.s32 %s87, 1
      %p91 = scmp.eq.s32.totalorder %s32, 1
      %p92 = scmp.ne.s32.totalorder %s87, %s89
      %p93 = scmp.eq.s32.totalorder %s32, 0
      %p94 = por %p92, %p93
      %p95 = scmp.ne.s32.totalorder %s87, %s89
      %p96 = scmp.eq.s32.totalorder %s37, 1
      %p97 = por %p95, %p96
      %p98 = scmp.ne.s32.totalorder %s89, %s90
      %p99 = scmp.eq.s32.totalorder %s37, 0
      %p100 = por %p98, %p99
      %p101 = scmp.ne.s32.totalorder %s89, %s90
      %p102 = scmp.eq.s32.totalorder %s38, 1
      %p103 = por %p101, %p102
      %p105 = scmp.ne.s32.totalorder %s90, %s104
      %p106 = scmp.eq.s32.totalorder %s38, 0
      %p107 = por %p105, %p106
      %s109 = sadd.s32 %s108, 1
      %p112 = scmp.eq.s32.totalorder %s32, 1
      %p113 = scmp.ne.s32.totalorder %s108, %s110
      %p114 = scmp.eq.s32.totalorder %s32, 0
      %p115 = por %p113, %p114
      %p116 = scmp.ne.s32.totalorder %s108, %s110
      %p117 = scmp.eq.s32.totalorder %s37, 1
      %p118 = por %p116, %p117
      %p119 = scmp.ne.s32.totalorder %s110, %s111
      %p120 = scmp.eq.s32.totalorder %s37, 0
      %p121 = por %p119, %p120
      %p122 = scmp.ne.s32.totalorder %s110, %s111
      %p123 = scmp.eq.s32.totalorder %s38, 1
      %p124 = por %p122, %p123
      %p126 = scmp.ne.s32.totalorder %s111, %s125
      %p127 = scmp.eq.s32.totalorder %s38, 0
      %p128 = por %p126, %p127
      %s130 = sadd.s32 %s129, 1
      %p133 = scmp.eq.s32.totalorder %s32, 1
      %p134 = scmp.ne.s32.totalorder %s129, %s131
      %p135 = scmp.eq.s32.totalorder %s32, 0
      %p136 = por %p134, %p135
      %p137 = scmp.ne.s32.totalorder %s129, %s131
      %p138 = scmp.eq.s32.totalorder %s37, 1
      %p139 = por %p137, %p138
      %p140 = scmp.ne.s32.totalorder %s131, %s132
      %p141 = scmp.eq.s32.totalorder %s37, 0
      %p142 = por %p140, %p141
      %p143 = scmp.ne.s32.totalorder %s131, %s132
      %p144 = scmp.eq.s32.totalorder %s38, 1
      %p145 = por %p143, %p144
      %p147 = scmp.ne.s32.totalorder %s132, %s146
      %p148 = scmp.eq.s32.totalorder %s38, 0
      %p149 = por %p147, %p148
      %s151 = sadd.s32 %s150, 1
      %p154 = scmp.eq.s32.totalorder %s32, 1
      %p155 = scmp.ne.s32.totalorder %s150, %s152
      %p156 = scmp.eq.s32.totalorder %s32, 0
      %p157 = por %p155, %p156
      %p158 = scmp.ne.s32.totalorder %s150, %s152
      %p159 = scmp.eq.s32.totalorder %s37, 1
      %p160 = por %p158, %p159
      %p161 = scmp.ne.s32.totalorder %s152, %s153
      %p162 = scmp.eq.s32.totalorder %s37, 0
      %p163 = por %p161, %p162
      %p164 = scmp.ne.s32.totalorder %s152, %s153
      %p165 = scmp.eq.s32.totalorder %s38, 1
      %p166 = por %p164, %p165
      %p168 = scmp.ne.s32.totalorder %s153, %s167
      %p169 = scmp.eq.s32.totalorder %s38, 0
      %p170 = por %p168, %p169
      %s172 = sadd.s32 %s171, 1
      %p175 = scmp.eq.s32.totalorder %s32, 1
      %p176 = scmp.ne.s32.totalorder %s171, %s173
      %p177 = scmp.eq.s32.totalorder %s32, 0
      %p178 = por %p176, %p177
      %p179 = scmp.ne.s32.totalorder %s171, %s173
      %p180 = scmp.eq.s32.totalorder %s37, 1
      %p181 = por %p179, %p180
      %p182 = scmp.ne.s32.totalorder %s173, %s174
      %p183 = scmp.eq.s32.totalorder %s37, 0
      %p184 = por %p182, %p183
      %p185 = scmp.ne.s32.totalorder %s173, %s174
      %p186 = scmp.eq.s32.totalorder %s38, 1
      %p187 = por %p185, %p186
      %p189 = scmp.ne.s32.totalorder %s174, %s188
      %p190 = scmp.eq.s32.totalorder %s38, 0
      %p191 = por %p189, %p190
      %s193 = sadd.s32 %s192, 1
      %p196 = scmp.eq.s32.totalorder %s32, 1
      %p197 = scmp.ne.s32.totalorder %s192, %s194
      %p198 = scmp.eq.s32.totalorder %s32, 0
      %p199 = por %p197, %p198
      %p200 = scmp.ne.s32.totalorder %s192, %s194
      %p201 = scmp.eq.s32.totalorder %s37, 1
      %p202 = por %p200, %p201
      %p203 = scmp.ne.s32.totalorder %s194, %s195
      %p204 = scmp.eq.s32.totalorder %s37, 0
      %p205 = por %p203, %p204
      %p206 = scmp.ne.s32.totalorder %s194, %s195
      %p207 = scmp.eq.s32.totalorder %s38, 1
      %p208 = por %p206, %p207
      %p210 = scmp.ne.s32.totalorder %s195, %s209
      %p211 = scmp.eq.s32.totalorder %s38, 0
      %p212 = por %p210, %p211
      %s214 = sadd.s32 %s213, 1
      %p217 = scmp.eq.s32.totalorder %s32, 1
      %p218 = scmp.ne.s32.totalorder %s213, %s215
      %p219 = scmp.eq.s32.totalorder %s32, 0
      %p220 = por %p218, %p219
      %p221 = scmp.ne.s32.totalorder %s213, %s215
      %p222 = scmp.eq.s32.totalorder %s37, 1
      %p223 = por %p221, %p222
      %p224 = scmp.ne.s32.totalorder %s215, %s216
      %p225 = scmp.eq.s32.totalorder %s37, 0
      %p226 = por %p224, %p225
      %p227 = scmp.ne.s32.totalorder %s215, %s216
      %p228 = scmp.eq.s32.totalorder %s38, 1
      %p229 = por %p227, %p228
      %p231 = scmp.ne.s32.totalorder %s216, %s230
      %p232 = scmp.eq.s32.totalorder %s38, 0
      %p233 = por %p231, %p232
      %s235 = sadd.s32 %s234, 1
      %p238 = scmp.eq.s32.totalorder %s32, 1
      %p239 = scmp.ne.s32.totalorder %s234, %s236
      %p240 = scmp.eq.s32.totalorder %s32, 0
      %p241 = por %p239, %p240
      %p242 = scmp.ne.s32.totalorder %s234, %s236
      %p243 = scmp.eq.s32.totalorder %s37, 1
      %p244 = por %p242, %p243
      %p245 = scmp.ne.s32.totalorder %s236, %s237
      %p246 = scmp.eq.s32.totalorder %s37, 0
      %p247 = por %p245, %p246
      %p248 = scmp.ne.s32.totalorder %s236, %s237
      %p249 = scmp.eq.s32.totalorder %s38, 1
      %p250 = por %p248, %p249
      %p252 = scmp.ne.s32.totalorder %s237, %s251
      %p253 = scmp.eq.s32.totalorder %s38, 0
      %p254 = por %p252, %p253
      %s256 = sadd.s32 %s255, 1
      %p259 = scmp.eq.s32.totalorder %s32, 1
      %p260 = scmp.ne.s32.totalorder %s255, %s257
      %p261 = scmp.eq.s32.totalorder %s32, 0
      %p262 = por %p260, %p261
      %p263 = scmp.ne.s32.totalorder %s255, %s257
      %p264 = scmp.eq.s32.totalorder %s37, 1
      %p265 = por %p263, %p264
      %p266 = scmp.ne.s32.totalorder %s257, %s258
      %p267 = scmp.eq.s32.totalorder %s37, 0
      %p268 = por %p266, %p267
      %p269 = scmp.ne.s32.totalorder %s257, %s258
      %p270 = scmp.eq.s32.totalorder %s38, 1
      %p271 = por %p269, %p270
      %p273 = scmp.ne.s32.totalorder %s258, %s272
      %p274 = scmp.eq.s32.totalorder %s38, 0
      %p275 = por %p273, %p274
      %s277 = sadd.s32 %s276, 1
      %p280 = scmp.eq.s32.totalorder %s32, 1
      %p281 = scmp.ne.s32.totalorder %s276, %s278
      %p282 = scmp.eq.s32.totalorder %s32, 0
      %p283 = por %p281, %p282
      %p284 = scmp.ne.s32.totalorder %s276, %s278
      %p285 = scmp.eq.s32.totalorder %s37, 1
      %p286 = por %p284, %p285
      %p287 = scmp.ne.s32.totalorder %s278, %s279
      %p288 = scmp.eq.s32.totalorder %s37, 0
      %p289 = por %p287, %p288
      %p290 = scmp.ne.s32.totalorder %s278, %s279
      %p291 = scmp.eq.s32.totalorder %s38, 1
      %p292 = por %p290, %p291
      %p294 = scmp.ne.s32.totalorder %s279, %s293
      %p295 = scmp.eq.s32.totalorder %s38, 0
      %p296 = por %p294, %p295
      %s298 = sadd.s32 %s297, 1
      %p301 = scmp.eq.s32.totalorder %s32, 1
      %p302 = scmp.ne.s32.totalorder %s297, %s299
      %p303 = scmp.eq.s32.totalorder %s32, 0
      %p304 = por %p302, %p303
      %p305 = scmp.ne.s32.totalorder %s297, %s299
      %p306 = scmp.eq.s32.totalorder %s37, 1
      %p307 = por %p305, %p306
      %p308 = scmp.ne.s32.totalorder %s299, %s300
      %p309 = scmp.eq.s32.totalorder %s37, 0
      %p310 = por %p308, %p309
      %p311 = scmp.ne.s32.totalorder %s299, %s300
      %p312 = scmp.eq.s32.totalorder %s38, 1
      %p313 = por %p311, %p312
      %p315 = scmp.ne.s32.totalorder %s300, %s314
      %p316 = scmp.eq.s32.totalorder %s38, 0
      %p317 = por %p315, %p316
      %s318 = ssub.s32 %s32, %s39
      %p319 = scmp.eq.s32.totalorder %s318, 0
      %s321 = sadd.s32 %s320, 1
      %s322 = scalar_select %p319, %s320, %s321
      %p325 = pneg %p319
      %p326 = scmp.eq.s32.totalorder %s32, 1
      %p327 = por %p325, %p326
      %p328 = scmp.ne.s32.totalorder %s320, %s323
      %p329 = scmp.eq.s32.totalorder %s32, 0
      %p330 = por %p328, %p329
      %p331 = scmp.ne.s32.totalorder %s320, %s323
      %p332 = scmp.eq.s32.totalorder %s37, 1
      %p333 = por %p331, %p332
      %p334 = scmp.ne.s32.totalorder %s323, %s324
      %p335 = scmp.eq.s32.totalorder %s37, 0
      %p336 = por %p334, %p335
      %p337 = scmp.ne.s32.totalorder %s323, %s324
      %p338 = scmp.eq.s32.totalorder %s38, 1
      %p339 = por %p337, %p338
      %p341 = scmp.ne.s32.totalorder %s324, %s340
      %p342 = scmp.eq.s32.totalorder %s38, 0
      %p343 = por %p341, %p342
      %s344 = ssub.s32 %s32, %s39
      %p345 = scmp.eq.s32.totalorder %s344, 0
      %s347 = sadd.s32 %s346, 1
      %s348 = scalar_select %p345, %s346, %s347
      %p351 = pneg %p345
      %p352 = scmp.eq.s32.totalorder %s32, 1
      %p353 = por %p351, %p352
      %p354 = scmp.ne.s32.totalorder %s346, %s349
      %p355 = scmp.eq.s32.totalorder %s32, 0
      %p356 = por %p354, %p355
      %p357 = scmp.ne.s32.totalorder %s346, %s349
      %p358 = scmp.eq.s32.totalorder %s37, 1
      %p359 = por %p357, %p358
      %p360 = scmp.ne.s32.totalorder %s349, %s350
      %p361 = scmp.eq.s32.totalorder %s37, 0
      %p362 = por %p360, %p361
      %p363 = scmp.ne.s32.totalorder %s349, %s350
      %p364 = scmp.eq.s32.totalorder %s38, 1
      %p365 = por %p363, %p364
      %p367 = scmp.ne.s32.totalorder %s350, %s366
      %p368 = scmp.eq.s32.totalorder %s38, 0
      %p369 = por %p367, %p368
      %p370 = scmp.le.s32.totalorder 1, %s32
      %p371 = scmp.lt.s32.totalorder %s32, 3
      %p372 = pnand %p370, %p371
      %p373 = pneg %p372
      // Predicated region
      $region9: #{tpu_custom_call.1} parent=5 // pred_check
        _
      $region10: #{tpu_custom_call.1} parent=5 // pred_check_branch
        %375 = sbr.rel (%p372) target = $region12
      $region11: #{tpu_custom_call.1} parent=5 // pred_region
        %s376 = ssub.s32 %s32, 1
        // Predicated region
        $region13: #{tpu_custom_call.1} parent=11 // pred_check
          %p377 = pneg %p79
        $region14: #{tpu_custom_call.1} parent=11 // pred_check_branch
          %379 = sbr.rel (%p377) target = $region16
        $region15: #{tpu_custom_call.1} parent=11 // pred_region
          %s381 = ssub.s32 3072, 3072
          %382 = vsyncadd [#allocation6], %s381
          %s383 = sshll.u32 [#allocation5], 4
          %s384 = int_to_ptr.vmem [resolvable:$true] %s383
          %389 = dma.hbm_to_vmem [thread:$0]  %s1, 3072, %s384, [#allocation6], 192, 192, 12
        $region16: #{tpu_custom_call.1} parent=11 // pred_fallthru
          _
        // Predicated region
        $region17: #{tpu_custom_call.1} parent=11 // pred_check
          %p390 = pneg %p100
        $region18: #{tpu_custom_call.1} parent=11 // pred_check_branch
          %392 = sbr.rel (%p390) target = $region20
        $region19: #{tpu_custom_call.1} parent=11 // pred_region
          _
        $region20: #{tpu_custom_call.1} parent=11 // pred_fallthru
          _
        // Predicated region
        $region21: #{tpu_custom_call.1} parent=11 // pred_check
          %p393 = pneg %p121
        $region22: #{tpu_custom_call.1} parent=11 // pred_check_branch
          %395 = sbr.rel (%p393) target = $region24
        $region23: #{tpu_custom_call.1} parent=11 // pred_region
          %s397 = ssub.s32 1024, 1024
          %398 = vsyncadd [#allocation6], %s397
          %s399 = sshll.u32 [#allocation7], 4
          %s400 = int_to_ptr.vmem [resolvable:$true] %s399
          %405 = dma.hbm_to_vmem [thread:$0]  %s3, 1024, %s400, [#allocation6], 64, 64, 4
        $region24: #{tpu_custom_call.1} parent=11 // pred_fallthru
          _
        // Predicated region
        $region25: #{tpu_custom_call.1} parent=11 // pred_check
          %p406 = pneg %p142
        $region26: #{tpu_custom_call.1} parent=11 // pred_check_branch
          %408 = sbr.rel (%p406) target = $region28
        $region27: #{tpu_custom_call.1} parent=11 // pred_region
          _
        $region28: #{tpu_custom_call.1} parent=11 // pred_fallthru
          _
        // Predicated region
        $region29: #{tpu_custom_call.1} parent=11 // pred_check
          %p409 = pneg %p163
        $region30: #{tpu_custom_call.1} parent=11 // pred_check_branch
          %411 = sbr.rel (%p409) target = $region32
        $region31: #{tpu_custom_call.1} parent=11 // pred_region
          _
        $region32: #{tpu_custom_call.1} parent=11 // pred_fallthru
          _
        // Predicated region
        $region33: #{tpu_custom_call.1} parent=11 // pred_check
          %p412 = pneg %p184
        $region34: #{tpu_custom_call.1} parent=11 // pred_check_branch
          %414 = sbr.rel (%p412) target = $region36
        $region35: #{tpu_custom_call.1} parent=11 // pred_region
          _
        $region36: #{tpu_custom_call.1} parent=11 // pred_fallthru
          _
        // Predicated region
        $region37: #{tpu_custom_call.1} parent=11 // pred_check
          %p415 = pneg %p205
        $region38: #{tpu_custom_call.1} parent=11 // pred_check_branch
          %417 = sbr.rel (%p415) target = $region40
        $region39: #{tpu_custom_call.1} parent=11 // pred_region
          %s419 = ssub.s32 2048, 2048
          %420 = vsyncadd [#allocation9], %s419
          %s421 = sshll.u32 [#allocation8], 4
          %s422 = int_to_ptr.vmem [resolvable:$true] %s421
          %427 = dma.hbm_to_vmem [thread:$0]  %s7, 2048, %s422, [#allocation9], 128, 128, 8
        $region40: #{tpu_custom_call.1} parent=11 // pred_fallthru
          _
        // Predicated region
        $region41: #{tpu_custom_call.1} parent=11 // pred_check
          %p428 = pneg %p226
        $region42: #{tpu_custom_call.1} parent=11 // pred_check_branch
          %430 = sbr.rel (%p428) target = $region44
        $region43: #{tpu_custom_call.1} parent=11 // pred_region
          _
        $region44: #{tpu_custom_call.1} parent=11 // pred_fallthru
          _
        // Predicated region
        $region45: #{tpu_custom_call.1} parent=11 // pred_check
          %p431 = pneg %p247
        $region46: #{tpu_custom_call.1} parent=11 // pred_check_branch
          %433 = sbr.rel (%p431) target = $region48
        $region47: #{tpu_custom_call.1} parent=11 // pred_region
          %s435 = ssub.s32 2048, 2048
          %436 = vsyncadd [#allocation9], %s435
          %s437 = sshll.u32 [#allocation10], 4
          %s438 = int_to_ptr.vmem [resolvable:$true] %s437
          %443 = dma.hbm_to_vmem [thread:$0]  %s9, 2048, %s438, [#allocation9], 64, 64, 4
        $region48: #{tpu_custom_call.1} parent=11 // pred_fallthru
          _
        // Predicated region
        $region49: #{tpu_custom_call.1} parent=11 // pred_check
          %p444 = pneg %p268
        $region50: #{tpu_custom_call.1} parent=11 // pred_check_branch
          %446 = sbr.rel (%p444) target = $region52
        $region51: #{tpu_custom_call.1} parent=11 // pred_region
          _
        $region52: #{tpu_custom_call.1} parent=11 // pred_fallthru
          _
        // Predicated region
        $region53: #{tpu_custom_call.1} parent=11 // pred_check
          %p447 = pneg %p289
        $region54: #{tpu_custom_call.1} parent=11 // pred_check_branch
          %449 = sbr.rel (%p447) target = $region56
        $region55: #{tpu_custom_call.1} parent=11 // pred_region
          _
        $region56: #{tpu_custom_call.1} parent=11 // pred_fallthru
          _
        // Predicated region
        $region57: #{tpu_custom_call.1} parent=11 // pred_check
          %p450 = pneg %p310
        $region58: #{tpu_custom_call.1} parent=11 // pred_check_branch
          %452 = sbr.rel (%p450) target = $region60
        $region59: #{tpu_custom_call.1} parent=11 // pred_region
          _
        $region60: #{tpu_custom_call.1} parent=11 // pred_fallthru
          _
      $region12: #{tpu_custom_call.1} parent=5 // pred_fallthru
        _
      %p453 = scmp.lt.s32.totalorder %s32, 2
      // Predicated region
      $region61: #{tpu_custom_call.1} parent=5 // pred_check
        %p454 = pneg %p453
      $region62: #{tpu_custom_call.1} parent=5 // pred_check_branch
        %456 = sbr.rel (%p454) target = $region64
      $region63: #{tpu_custom_call.1} parent=5 // pred_region
        // Predicated region
        $region65: #{tpu_custom_call.1} parent=63 // pred_check
          %p457 = pneg %p52
        $region66: #{tpu_custom_call.1} parent=63 // pred_check_branch
          %459 = sbr.rel (%p457) target = $region68
        $region67: #{tpu_custom_call.1} parent=63 // pred_region
          %s460 = sand.u32 %s42, 1
          %s461 = scalar_lea.sflag [#allocation3], %s460
          %s462 = sand.u32 %s42, 1
          %s463 = smul.addr %s462, 128
          %s464 = scalar_lea.vmem [#allocation2], %s463
          %s466 = ssub.s32 2048, 2048
          %467 = vsyncadd %s461, %s466
          %s468 = smul.addr %s32, 16
          %s469 = smul.addr %s468, 128
          %s470 = scalar_lea.hbm %s0, %s469
          %s471 = sshll.u32 %s464, 4
          %s472 = int_to_ptr.vmem [resolvable:$true] %s471
          %477 = dma.hbm_to_vmem [thread:$0]  %s470, 2048, %s472, %s461, 128, 128, 8
        $region68: #{tpu_custom_call.1} parent=63 // pred_fallthru
          _
      $region64: #{tpu_custom_call.1} parent=5 // pred_fallthru
        _
      %p478 = scmp.le.s32.totalorder 1, %s32
      %p479 = scmp.lt.s32.totalorder %s32, 3
      %p480 = pnand %p478, %p479
      %p481 = pneg %p480
      // Predicated region
      $region69: #{tpu_custom_call.1} parent=5 // pred_check
        _
      $region70: #{tpu_custom_call.1} parent=5 // pred_check_branch
        %483 = sbr.rel (%p480) target = $region72
      $region71: #{tpu_custom_call.1} parent=5 // pred_region
        %s484 = ssub.s32 %s32, 1
        %s485 = sand.u32 %s45, 1
        %s486 = scalar_lea.sflag [#allocation3], %s485
        %s487 = sand.u32 %s45, 1
        %s488 = smul.addr %s487, 128
        %s489 = scalar_lea.vmem [#allocation2], %s488
        // Predicated region
        $region73: #{tpu_custom_call.1} parent=71 // pred_check
          %p490 = pneg %p58
        $region74: #{tpu_custom_call.1} parent=71 // pred_check_branch
          %492 = sbr.rel (%p490) target = $region76
        $region75: #{tpu_custom_call.1} parent=71 // pred_region
          %493 = dma.done %s486, 2048
        $region76: #{tpu_custom_call.1} parent=71 // pred_fallthru
          _
        // Predicated region
        $region77: #{tpu_custom_call.1} parent=71 // pred_check
          %p494 = pneg %p79
        $region78: #{tpu_custom_call.1} parent=71 // pred_check_branch
          %496 = sbr.rel (%p494) target = $region80
        $region79: #{tpu_custom_call.1} parent=71 // pred_region
          %497 = dma.done [#allocation6], 3072
        $region80: #{tpu_custom_call.1} parent=71 // pred_fallthru
          _
        // Predicated region
        $region81: #{tpu_custom_call.1} parent=71 // pred_check
          %p498 = pneg %p121
        $region82: #{tpu_custom_call.1} parent=71 // pred_check_branch
          %500 = sbr.rel (%p498) target = $region84
        $region83: #{tpu_custom_call.1} parent=71 // pred_region
          %501 = dma.done [#allocation6], 1024
        $region84: #{tpu_custom_call.1} parent=71 // pred_fallthru
          _
        // Predicated region
        $region85: #{tpu_custom_call.1} parent=71 // pred_check
          %p502 = pneg %p205
        $region86: #{tpu_custom_call.1} parent=71 // pred_check_branch
          %504 = sbr.rel (%p502) target = $region88
        $region87: #{tpu_custom_call.1} parent=71 // pred_region
          %505 = dma.done [#allocation9], 2048
        $region88: #{tpu_custom_call.1} parent=71 // pred_fallthru
          _
        // Predicated region
        $region89: #{tpu_custom_call.1} parent=71 // pred_check
          %p506 = pneg %p247
        $region90: #{tpu_custom_call.1} parent=71 // pred_check_branch
          %508 = sbr.rel (%p506) target = $region92
        $region91: #{tpu_custom_call.1} parent=71 // pred_region
          %509 = dma.done [#allocation9], 2048
        $region92: #{tpu_custom_call.1} parent=71 // pred_fallthru
          _
        %s510 = sand.u32 %s45, 1
        %s511 = scalar_lea.sflag [#allocation3], %s510
        %s512 = sand.u32 %s45, 1
        %s513 = smul.addr %s512, 128
        %s514 = scalar_lea.vmem [#allocation2], %s513
        %p515 = pneg %p58
        %p516 = pneg %p55
        %p517 = pneg %p79
        %p518 = pneg %p76
        %p519 = pneg %p100
        %p520 = pneg %p97
        %p521 = pneg %p121
        %p522 = pneg %p118
        %p523 = pneg %p142
        %p524 = pneg %p139
        %p525 = pneg %p163
        %p526 = pneg %p160
        %p527 = pneg %p184
        %p528 = pneg %p181
        %p529 = pneg %p205
        %p530 = pneg %p202
        %p531 = pneg %p226
        %p532 = pneg %p223
        %p533 = pneg %p247
        %p534 = pneg %p244
        %p535 = pneg %p268
        %p536 = pneg %p265
        %p537 = pneg %p289
        %p538 = pneg %p286
        %p539 = pneg %p310
        %p540 = pneg %p307
        %p541 = pneg %p336
        %p542 = pneg %p333
        %s543 = sand.u32 %s323, 1
        %s544 = scalar_lea.sflag [#allocation4], %s543
        %s545 = sand.u32 %s323, 1
        %s546 = smul.addr %s545, 128
        %s547 = scalar_lea.vmem [#allocation11], %s546
        %p548 = pneg %p362
        %p549 = pneg %p359
        %s550 = sand.u32 %s349, 1
        %s551 = scalar_lea.sflag [#allocation13], %s550
        %s552 = sand.u32 %s349, 1
        %s553 = smul.addr %s552, 256
        %s554 = scalar_lea.vmem [#allocation12], %s553
        %v556 = vld [vmem:[%s489] sm:$0xff]
        %v557 = vld [vmem:[%s489 + $0x8] sm:$0xff]
        %v558 = vld [vmem:[%s489 + $0x10] sm:$0xff]
        %v559 = vld [vmem:[%s489 + $0x18] sm:$0xff]
        %v560 = vld [vmem:[%s489 + $0x20] sm:$0xff]
        %v561 = vld [vmem:[%s489 + $0x28] sm:$0xff]
        %v562 = vld [vmem:[%s489 + $0x30] sm:$0xff]
        %v563 = vld [vmem:[%s489 + $0x38] sm:$0xff]
        %v564 = vld [vmem:[%s489 + $0x40] sm:$0xff]
        %v565 = vld [vmem:[%s489 + $0x48] sm:$0xff]
        %v566 = vld [vmem:[%s489 + $0x50] sm:$0xff]
        %v567 = vld [vmem:[%s489 + $0x58] sm:$0xff]
        %v568 = vld [vmem:[%s489 + $0x60] sm:$0xff]
        %v569 = vld [vmem:[%s489 + $0x68] sm:$0xff]
        %v570 = vld [vmem:[%s489 + $0x70] sm:$0xff]
        %v571 = vld [vmem:[%s489 + $0x78] sm:$0xff]
        %v572 = vpack.c.bf16 %v557, %v556
        %v573 = vpack.c.bf16 %v559, %v558
        %v574 = vpack.c.bf16 %v561, %v560
        %v575 = vpack.c.bf16 %v563, %v562
        %v576 = vpack.c.bf16 %v565, %v564
        %v577 = vpack.c.bf16 %v567, %v566
        %v578 = vpack.c.bf16 %v569, %v568
        %v579 = vpack.c.bf16 %v571, %v570
        %v580 = vld [vmem:[#allocation5] sm:$0xff]
        %v581 = vld [vmem:[#allocation5 + $0x8] sm:$0xf]
        %v582 = vld [vmem:[#allocation5 + $0xc] sm:$0xff]
        %v583 = vld [vmem:[#allocation5 + $0x14] sm:$0xf]
        %v584 = vld [vmem:[#allocation5 + $0x18] sm:$0xff]
        %v585 = vld [vmem:[#allocation5 + $0x20] sm:$0xf]
        %v586 = vld [vmem:[#allocation5 + $0x24] sm:$0xff]
        %v587 = vld [vmem:[#allocation5 + $0x2c] sm:$0xf]
        %v588 = vld [vmem:[#allocation5 + $0x30] sm:$0xff]
        %v589 = vld [vmem:[#allocation5 + $0x38] sm:$0xf]
        %v590 = vld [vmem:[#allocation5 + $0x3c] sm:$0xff]
        %v591 = vld [vmem:[#allocation5 + $0x44] sm:$0xf]
        %v592 = vld [vmem:[#allocation5 + $0x48] sm:$0xff]
        %v593 = vld [vmem:[#allocation5 + $0x50] sm:$0xf]
        %v594 = vld [vmem:[#allocation5 + $0x54] sm:$0xff]
        %v595 = vld [vmem:[#allocation5 + $0x5c] sm:$0xf]
        %v596 = vld [vmem:[#allocation5 + $0x60] sm:$0xff]
        %v597 = vld [vmem:[#allocation5 + $0x68] sm:$0xf]
        %v598 = vld [vmem:[#allocation5 + $0x6c] sm:$0xff]
        %v599 = vld [vmem:[#allocation5 + $0x74] sm:$0xf]
        %v600 = vld [vmem:[#allocation5 + $0x78] sm:$0xff]
        %v601 = vld [vmem:[#allocation5 + $0x80] sm:$0xf]
        %v602 = vld [vmem:[#allocation5 + $0x84] sm:$0xff]
        %v603 = vld [vmem:[#allocation5 + $0x8c] sm:$0xf]
        %v604 = vld [vmem:[#allocation5 + $0x90] sm:$0xff]
        %v605 = vld [vmem:[#allocation5 + $0x98] sm:$0xf]
        %v606 = vld [vmem:[#allocation5 + $0x9c] sm:$0xff]
        %v607 = vld [vmem:[#allocation5 + $0xa4] sm:$0xf]
        %v608 = vld [vmem:[#allocation5 + $0xa8] sm:$0xff]
        %v609 = vld [vmem:[#allocation5 + $0xb0] sm:$0xf]
        %v610 = vld [vmem:[#allocation5 + $0xb4] sm:$0xff]
        %v611 = vld [vmem:[#allocation5 + $0xbc] sm:$0xf]
        %v612 = vld [vmem:[%s2] sm:$0x7]
        %v614 = vlaneseq
        %v615 = vshrl.u32 %v614, 7
        %v616 = vsub.s32 0, %v615
        %v617 = vrot.slane %v612, %v616
        %v618 = vlaneseq
        %v619 = vshrl.u32 %v618, 7
        %v620 = vsub.s32 1, %v619
        %v621 = vrot.slane %v612, %v620
        %v622 = vlaneseq
        %v623 = vshrl.u32 %v622, 7
        %v624 = vsub.s32 2, %v623
        %v625 = vrot.slane %v612, %v624
        %v661 = vunpack.c.l.b16 %v580
        %v662 = vunpack.c.h.b16 %v580
        %v663 = vunpack.c.l.b16 %v581
        %v664 = vunpack.c.l.b16 %v582
        %v665 = vunpack.c.h.b16 %v582
        %v666 = vunpack.c.l.b16 %v583
        %v667 = vunpack.c.l.b16 %v584
        %v668 = vunpack.c.h.b16 %v584
        %v669 = vunpack.c.l.b16 %v585
        %v670 = vunpack.c.l.b16 %v586
        %v671 = vunpack.c.h.b16 %v586
        %v672 = vunpack.c.l.b16 %v587
        %v673 = vunpack.c.l.b16 %v588
        %v674 = vunpack.c.h.b16 %v588
        %v675 = vunpack.c.l.b16 %v589
        %v676 = vunpack.c.l.b16 %v590
        %v677 = vunpack.c.h.b16 %v590
        %v678 = vunpack.c.l.b16 %v591
        %v679 = vunpack.c.l.b16 %v592
        %v680 = vunpack.c.h.b16 %v592
        %v681 = vunpack.c.l.b16 %v593
        %v682 = vunpack.c.l.b16 %v594
        %v683 = vunpack.c.h.b16 %v594
        %v684 = vunpack.c.l.b16 %v595
        %v685 = vunpack.c.l.b16 %v596
        %v686 = vunpack.c.h.b16 %v596
        %v687 = vunpack.c.l.b16 %v597
        %v688 = vunpack.c.l.b16 %v598
        %v689 = vunpack.c.h.b16 %v598
        %v690 = vunpack.c.l.b16 %v599
        %v691 = vunpack.c.l.b16 %v600
        %v692 = vunpack.c.h.b16 %v600
        %v693 = vunpack.c.l.b16 %v601
        %v694 = vunpack.c.l.b16 %v602
        %v695 = vunpack.c.h.b16 %v602
        %v696 = vunpack.c.l.b16 %v603
        %v697 = vunpack.c.l.b16 %v604
        %v698 = vunpack.c.h.b16 %v604
        %v699 = vunpack.c.l.b16 %v605
        %v700 = vunpack.c.l.b16 %v606
        %v701 = vunpack.c.h.b16 %v606
        %v702 = vunpack.c.l.b16 %v607
        %v703 = vunpack.c.l.b16 %v608
        %v704 = vunpack.c.h.b16 %v608
        %v705 = vunpack.c.l.b16 %v609
        %v706 = vunpack.c.l.b16 %v610
        %v707 = vunpack.c.h.b16 %v610
        %v708 = vunpack.c.l.b16 %v611
        %v709 = vpack.c.b16 %v664, %v661
        %v710 = vpack.c.b16 %v665, %v662
        %v711 = vpack.c.b16 %v666, %v663
        %v712 = vpack.c.b16 %v670, %v667
        %v713 = vpack.c.b16 %v671, %v668
        %v714 = vpack.c.b16 %v672, %v669
        %v715 = vpack.c.b16 %v676, %v673
        %v716 = vpack.c.b16 %v677, %v674
        %v717 = vpack.c.b16 %v678, %v675
        %v718 = vpack.c.b16 %v682, %v679
        %v719 = vpack.c.b16 %v683, %v680
        %v720 = vpack.c.b16 %v684, %v681
        %v721 = vpack.c.b16 %v688, %v685
        %v722 = vpack.c.b16 %v689, %v686
        %v723 = vpack.c.b16 %v690, %v687
        %v724 = vpack.c.b16 %v694, %v691
        %v725 = vpack.c.b16 %v695, %v692
        %v726 = vpack.c.b16 %v696, %v693
        %v727 = vpack.c.b16 %v700, %v697
        %v728 = vpack.c.b16 %v701, %v698
        %v729 = vpack.c.b16 %v702, %v699
        %v730 = vpack.c.b16 %v706, %v703
        %v731 = vpack.c.b16 %v707, %v704
        %v732 = vpack.c.b16 %v708, %v705
        %757 = vmatprep.subr.bf16.mxu0 %v710
        %758 = vmatpush1.bf16.msra.mxu0 %v709
        %759 = vmatprep.subr.bf16.mxu0 %v713
        %760 = vmatpush1.bf16.msra.mxu0 %v712
        %761 = vmatprep.subr.bf16.mxu0 %v716
        %762 = vmatpush1.bf16.msra.mxu0 %v715
        %763 = vmatprep.subr.bf16.mxu0 %v719
        %764 = vmatpush1.bf16.msra.mxu0 %v718
        %765 = vmatprep.subr.bf16.mxu0 %v722
        %766 = vmatpush1.bf16.msra.mxu0 %v721
        %767 = vmatprep.subr.bf16.mxu0 %v725
        %768 = vmatpush1.bf16.msra.mxu0 %v724
        %769 = vmatprep.subr.bf16.mxu0 %v728
        %770 = vmatpush1.bf16.msra.mxu0 %v727
        %771 = vmatprep.subr.bf16.mxu0 %v731
        %772 = vmatpush1.bf16.msra.mxu0 %v730
        %773 = vmatprep.subr.bf16.mxu0 0
        %774 = vmatpush1.bf16.msra.mxu0 0
        %775 = vmatprep.subr.bf16.mxu0 0
        %776 = vmatpush1.bf16.msra.mxu0 0
        %777 = vmatprep.subr.bf16.mxu0 0
        %778 = vmatpush1.bf16.msra.mxu0 0
        %779 = vmatprep.subr.bf16.mxu0 0
        %780 = vmatpush1.bf16.msra.mxu0 0
        %781 = vmatprep.subr.bf16.mxu0 0
        %782 = vmatpush1.bf16.msra.mxu0 0
        %783 = vmatprep.subr.bf16.mxu0 0
        %784 = vmatpush1.bf16.msra.mxu0 0
        %785 = vmatprep.subr.bf16.mxu0 0
        %786 = vmatpush1.bf16.msra.mxu0 0
        %787 = vmatprep.subr.bf16.mxu0 0
        %788 = vmatpush1.bf16.msra.mxu0 0
        %789 = vmatprep.mubr.bf16.mxu0 0
        %790 = vmatmul.mubr.bf16.gmra.mrb[0].mxu0 %v572
        %v791 = vpop.f32.mrb[0].mxu0
        %v792 = vadd.f32 %v617, %v791
        %v793 = vpop.f32.mrb[0].mxu0
        %v794 = vadd.f32 %v621, %v793
        %v795 = vpop.f32.mrb[0].mxu0
        %v796 = vadd.f32 %v617, %v795
        %v797 = vpop.f32.mrb[0].mxu0
        %v798 = vadd.f32 %v621, %v797
        %799 = vmatprep.mubr.bf16.mxu0 0
        %800 = vmatmul.mubr.bf16.gmra.mrb[0].mxu0 %v573
        %v801 = vpop.f32.mrb[0].mxu0
        %v802 = vadd.f32 %v617, %v801
        %v803 = vpop.f32.mrb[0].mxu0
        %v804 = vadd.f32 %v621, %v803
        %v805 = vpop.f32.mrb[0].mxu0
        %v806 = vadd.f32 %v617, %v805
        %v807 = vpop.f32.mrb[0].mxu0
        %v808 = vadd.f32 %v621, %v807
        %809 = vmatprep.mubr.bf16.mxu0 0
        %810 = vmatmul.mubr.bf16.gmra.mrb[0].mxu0 %v574
        %v811 = vpop.f32.mrb[0].mxu0
        %v812 = vadd.f32 %v617, %v811
        %v813 = vpop.f32.mrb[0].mxu0
        %v814 = vadd.f32 %v621, %v813
        %v815 = vpop.f32.mrb[0].mxu0
        %v816 = vadd.f32 %v617, %v815
        %v817 = vpop.f32.mrb[0].mxu0
        %v818 = vadd.f32 %v621, %v817
        %819 = vmatprep.mubr.bf16.mxu0 0
        %820 = vmatmul.mubr.bf16.gmra.mrb[0].mxu0 %v575
        %v821 = vpop.f32.mrb[0].mxu0
        %v822 = vadd.f32 %v617, %v821
        %v823 = vpop.f32.mrb[0].mxu0
        %v824 = vadd.f32 %v621, %v823
        %v825 = vpop.f32.mrb[0].mxu0
        %v826 = vadd.f32 %v617, %v825
        %v827 = vpop.f32.mrb[0].mxu0
        %v828 = vadd.f32 %v621, %v827
        %829 = vmatprep.mubr.bf16.mxu0 0
        %830 = vmatmul.mubr.bf16.gmra.mrb[0].mxu0 %v576
        %v831 = vpop.f32.mrb[0].mxu0
        %v832 = vadd.f32 %v617, %v831
        %v833 = vpop.f32.mrb[0].mxu0
        %v834 = vadd.f32 %v621, %v833
        %v835 = vpop.f32.mrb[0].mxu0
        %v836 = vadd.f32 %v617, %v835
        %v837 = vpop.f32.mrb[0].mxu0
        %v838 = vadd.f32 %v621, %v837
        %839 = vmatprep.mubr.bf16.mxu0 0
        %840 = vmatmul.mubr.bf16.gmra.mrb[0].mxu0 %v577
        %v841 = vpop.f32.mrb[0].mxu0
        %v842 = vadd.f32 %v617, %v841
        %v843 = vpop.f32.mrb[0].mxu0
        %v844 = vadd.f32 %v621, %v843
        %v845 = vpop.f32.mrb[0].mxu0
        %v846 = vadd.f32 %v617, %v845
        %v847 = vpop.f32.mrb[0].mxu0
        %v848 = vadd.f32 %v621, %v847
        %849 = vmatprep.mubr.bf16.mxu0 0
        %850 = vmatmul.mubr.bf16.gmra.mrb[0].mxu0 %v578
        %v851 = vpop.f32.mrb[0].mxu0
        %v852 = vadd.f32 %v617, %v851
        %v853 = vpop.f32.mrb[0].mxu0
        %v854 = vadd.f32 %v621, %v853
        %v855 = vpop.f32.mrb[0].mxu0
        %v856 = vadd.f32 %v617, %v855
        %v857 = vpop.f32.mrb[0].mxu0
        %v858 = vadd.f32 %v621, %v857
        %859 = vmatprep.mubr.bf16.mxu0 0
        %860 = vmatmul.mubr.bf16.gmra.mrb[0].mxu0 %v579
        %v861 = vpop.f32.mrb[0].mxu0
        %v862 = vadd.f32 %v617, %v861
        %v863 = vpop.f32.mrb[0].mxu0
        %v864 = vadd.f32 %v621, %v863
        %v865 = vpop.f32.mrb[0].mxu0
        %v866 = vadd.f32 %v617, %v865
        %v867 = vpop.f32.mrb[0].mxu0
        %v868 = vadd.f32 %v621, %v867
        %869 = vdwg.mxu0
        %870 = vmatprep.subr.bf16.mxu0 0
        %871 = vmatpush1.bf16.msra.mxu0 %v711
        %872 = vmatprep.subr.bf16.mxu0 0
        %873 = vmatpush1.bf16.msra.mxu0 %v714
        %874 = vmatprep.subr.bf16.mxu0 0
        %875 = vmatpush1.bf16.msra.mxu0 %v717
        %876 = vmatprep.subr.bf16.mxu0 0
        %877 = vmatpush1.bf16.msra.mxu0 %v720
        %878 = vmatprep.subr.bf16.mxu0 0
        %879 = vmatpush1.bf16.msra.mxu0 %v723
        %880 = vmatprep.subr.bf16.mxu0 0
        %881 = vmatpush1.bf16.msra.mxu0 %v726
        %882 = vmatprep.subr.bf16.mxu0 0
        %883 = vmatpush1.bf16.msra.mxu0 %v729
        %884 = vmatprep.subr.bf16.mxu0 0
        %885 = vmatpush1.bf16.msra.mxu0 %v732
        %886 = vmatprep.subr.bf16.mxu0 0
        %887 = vmatpush1.bf16.msra.mxu0 0
        %888 = vmatprep.subr.bf16.mxu0 0
        %889 = vmatpush1.bf16.msra.mxu0 0
        %890 = vmatprep.subr.bf16.mxu0 0
        %891 = vmatpush1.bf16.msra.mxu0 0
        %892 = vmatprep.subr.bf16.mxu0 0
        %893 = vmatpush1.bf16.msra.mxu0 0
        %894 = vmatprep.subr.bf16.mxu0 0
        %895 = vmatpush1.bf16.msra.mxu0 0
        %896 = vmatprep.subr.bf16.mxu0 0
        %897 = vmatpush1.bf16.msra.mxu0 0
        %898 = vmatprep.subr.bf16.mxu0 0
        %899 = vmatpush1.bf16.msra.mxu0 0
        %900 = vmatprep.subr.bf16.mxu0 0
        %901 = vmatpush1.bf16.msra.mxu0 0
        %902 = vmatprep.mubr.bf16.mxu0 0
        %903 = vmatmul.mubr.bf16.gmra.mrb[0].mxu0 %v572
        %v904 = vpop.f32.mrb[0].mxu0
        %v905 = vadd.f32 %v625, %v904
        %v906 = vpop.f32.mrb[0].mxu0
        %v907 = vpop.f32.mrb[0].mxu0
        %v908 = vadd.f32 %v625, %v907
        %v909 = vpop.f32.mrb[0].mxu0
        %910 = vmatprep.mubr.bf16.mxu0 0
        %911 = vmatmul.mubr.bf16.gmra.mrb[0].mxu0 %v573
        %v912 = vpop.f32.mrb[0].mxu0
        %v913 = vadd.f32 %v625, %v912
        %v914 = vpop.f32.mrb[0].mxu0
        %v915 = vpop.f32.mrb[0].mxu0
        %v916 = vadd.f32 %v625, %v915
        %v917 = vpop.f32.mrb[0].mxu0
        %918 = vmatprep.mubr.bf16.mxu0 0
        %919 = vmatmul.mubr.bf16.gmra.mrb[0].mxu0 %v574
        %v920 = vpop.f32.mrb[0].mxu0
        %v921 = vadd.f32 %v625, %v920
        %v922 = vpop.f32.mrb[0].mxu0
        %v923 = vpop.f32.mrb[0].mxu0
        %v924 = vadd.f32 %v625, %v923
        %v925 = vpop.f32.mrb[0].mxu0
        %926 = vmatprep.mubr.bf16.mxu0 0
        %927 = vmatmul.mubr.bf16.gmra.mrb[0].mxu0 %v575
        %v928 = vpop.f32.mrb[0].mxu0
        %v929 = vadd.f32 %v625, %v928
        %v930 = vpop.f32.mrb[0].mxu0
        %v931 = vpop.f32.mrb[0].mxu0
        %v932 = vadd.f32 %v625, %v931
        %v933 = vpop.f32.mrb[0].mxu0
        %934 = vmatprep.mubr.bf16.mxu0 0
        %935 = vmatmul.mubr.bf16.gmra.mrb[0].mxu0 %v576
        %v936 = vpop.f32.mrb[0].mxu0
        %v937 = vadd.f32 %v625, %v936
        %v938 = vpop.f32.mrb[0].mxu0
        %v939 = vpop.f32.mrb[0].mxu0
        %v940 = vadd.f32 %v625, %v939
        %v941 = vpop.f32.mrb[0].mxu0
        %942 = vmatprep.mubr.bf16.mxu0 0
        %943 = vmatmul.mubr.bf16.gmra.mrb[0].mxu0 %v577
        %v944 = vpop.f32.mrb[0].mxu0
        %v945 = vadd.f32 %v625, %v944
        %v946 = vpop.f32.mrb[0].mxu0
        %v947 = vpop.f32.mrb[0].mxu0
        %v948 = vadd.f32 %v625, %v947
        %v949 = vpop.f32.mrb[0].mxu0
        %950 = vmatprep.mubr.bf16.mxu0 0
        %951 = vmatmul.mubr.bf16.gmra.mrb[0].mxu0 %v578
        %v952 = vpop.f32.mrb[0].mxu0
        %v953 = vadd.f32 %v625, %v952
        %v954 = vpop.f32.mrb[0].mxu0
        %v955 = vpop.f32.mrb[0].mxu0
        %v956 = vadd.f32 %v625, %v955
        %v957 = vpop.f32.mrb[0].mxu0
        %958 = vmatprep.mubr.bf16.mxu0 0
        %959 = vmatmul.mubr.bf16.gmra.mrb[0].mxu0 %v579
        %v960 = vpop.f32.mrb[0].mxu0
        %v961 = vadd.f32 %v625, %v960
        %v962 = vpop.f32.mrb[0].mxu0
        %v963 = vpop.f32.mrb[0].mxu0
        %v964 = vadd.f32 %v625, %v963
        %v965 = vpop.f32.mrb[0].mxu0
        %966 = vdwg.mxu0
        %v967 = vmul.f32 %v792, 0.17677669
        %v968 = vmul.f32 %v796, 0.17677669
        %v969 = vmul.f32 %v802, 0.17677669
        %v970 = vmul.f32 %v806, 0.17677669
        %v971 = vmul.f32 %v812, 0.17677669
        %v972 = vmul.f32 %v816, 0.17677669
        %v973 = vmul.f32 %v822, 0.17677669
        %v974 = vmul.f32 %v826, 0.17677669
        %v975 = vmul.f32 %v832, 0.17677669
        %v976 = vmul.f32 %v836, 0.17677669
        %v977 = vmul.f32 %v842, 0.17677669
        %v978 = vmul.f32 %v846, 0.17677669
        %v979 = vmul.f32 %v852, 0.17677669
        %v980 = vmul.f32 %v856, 0.17677669
        %v981 = vmul.f32 %v862, 0.17677669
        %v982 = vmul.f32 %v866, 0.17677669
        %v983 = vpack.c.bf16 %v968, %v967
        %v984 = vpack.c.bf16 %v970, %v969
        %v985 = vpack.c.bf16 %v972, %v971
        %v986 = vpack.c.bf16 %v974, %v973
        %v987 = vpack.c.bf16 %v976, %v975
        %v988 = vpack.c.bf16 %v978, %v977
        %v989 = vpack.c.bf16 %v980, %v979
        %v990 = vpack.c.bf16 %v982, %v981
        %v991 = vpack.c.bf16 %v798, %v794
        %v992 = vpack.c.bf16 %v808, %v804
        %v993 = vpack.c.bf16 %v818, %v814
        %v994 = vpack.c.bf16 %v828, %v824
        %v995 = vpack.c.bf16 %v838, %v834
        %v996 = vpack.c.bf16 %v848, %v844
        %v997 = vpack.c.bf16 %v858, %v854
        %v998 = vpack.c.bf16 %v868, %v864
        %v999 = vpack.c.bf16 %v908, %v905
        %v1000 = vpack.c.bf16 %v916, %v913
        %v1001 = vpack.c.bf16 %v924, %v921
        %v1002 = vpack.c.bf16 %v932, %v929
        %v1003 = vpack.c.bf16 %v940, %v937
        %v1004 = vpack.c.bf16 %v948, %v945
        %v1005 = vpack.c.bf16 %v956, %v953
        %v1006 = vpack.c.bf16 %v964, %v961
        %vm1007 = vcmask 261120
        %v1009 = vsel %vm1007, %v983, 0
        %v1012 = vsel %vm1007, %v984, 0
        %v1015 = vsel %vm1007, %v985, 0
        %v1018 = vsel %vm1007, %v986, 0
        %v1021 = vsel %vm1007, %v987, 0
        %v1024 = vsel %vm1007, %v988, 0
        %v1027 = vsel %vm1007, %v989, 0
        %v1030 = vsel %vm1007, %v990, 0
        %v1033 = vsel %vm1007, %v991, 0
        %v1036 = vsel %vm1007, %v992, 0
        %v1039 = vsel %vm1007, %v993, 0
        %v1042 = vsel %vm1007, %v994, 0
        %v1045 = vsel %vm1007, %v995, 0
        %v1048 = vsel %vm1007, %v996, 0
        %v1051 = vsel %vm1007, %v997, 0
        %v1054 = vsel %vm1007, %v998, 0
        %1056 = vmatprep.subr.bf16.mxu0 0
        %1057 = vmatpush1.bf16.xpose.msra.mxu0 %v1033
        %1058 = vmatprep.subr.bf16.mxu0 0
        %1059 = vmatpush1.bf16.xpose.msra.mxu0 %v1036
        %1060 = vmatprep.subr.bf16.mxu0 0
        %1061 = vmatpush1.bf16.xpose.msra.mxu0 %v1039
        %1062 = vmatprep.subr.bf16.mxu0 0
        %1063 = vmatpush1.bf16.xpose.msra.mxu0 %v1042
        %1064 = vmatprep.subr.bf16.mxu0 0
        %1065 = vmatpush1.bf16.xpose.msra.mxu0 %v1045
        %1066 = vmatprep.subr.bf16.mxu0 0
        %1067 = vmatpush1.bf16.xpose.msra.mxu0 %v1048
        %1068 = vmatprep.subr.bf16.mxu0 0
        %1069 = vmatpush1.bf16.xpose.msra.mxu0 %v1051
        %1070 = vmatprep.subr.bf16.mxu0 0
        %1071 = vmatpush1.bf16.xpose.msra.mxu0 %v1054
        %1072 = vmatprep.subr.bf16.mxu0 0
        %1073 = vmatpush1.bf16.xpose.msra.mxu0 0
        %1074 = vmatprep.subr.bf16.mxu0 0
        %1075 = vmatpush1.bf16.xpose.msra.mxu0 0
        %1076 = vmatprep.subr.bf16.mxu0 0
        %1077 = vmatpush1.bf16.xpose.msra.mxu0 0
        %1078 = vmatprep.subr.bf16.mxu0 0
        %1079 = vmatpush1.bf16.xpose.msra.mxu0 0
        %1080 = vmatprep.subr.bf16.mxu0 0
        %1081 = vmatpush1.bf16.xpose.msra.mxu0 0
        %1082 = vmatprep.subr.bf16.mxu0 0
        %1083 = vmatpush1.bf16.xpose.msra.mxu0 0
        %1084 = vmatprep.subr.bf16.mxu0 0
        %1085 = vmatpush1.bf16.xpose.msra.mxu0 0
        %1086 = vmatprep.subr.bf16.mxu0 0
        %1087 = vmatpush1.bf16.xpose.msra.mxu0 0
        %1088 = vmatprep.mubr.bf16.mxu0 0
        %1089 = vmatmul.mubr.bf16.gmra.mrb[0].mxu0 %v1009
        %v1090 = vpop.f32.mrb[0].mxu0
        %v1091 = vadd.f32 0.0, %v1090
        %v1092 = vpop.f32.mrb[0].mxu0
        %v1093 = vpop.f32.mrb[0].mxu0
        %v1094 = vadd.f32 0.0, %v1093
        %v1095 = vpop.f32.mrb[0].mxu0
        %1096 = vmatprep.mubr.bf16.mxu0 0
        %1097 = vmatmul.mubr.bf16.gmra.mrb[0].mxu0 %v1012
        %v1098 = vpop.f32.mrb[0].mxu0
        %v1099 = vadd.f32 0.0, %v1098
        %v1100 = vpop.f32.mrb[0].mxu0
        %v1101 = vpop.f32.mrb[0].mxu0
        %v1102 = vadd.f32 0.0, %v1101
        %v1103 = vpop.f32.mrb[0].mxu0
        %1104 = vmatprep.mubr.bf16.mxu0 0
        %1105 = vmatmul.mubr.bf16.gmra.mrb[0].mxu0 %v1015
        %v1106 = vpop.f32.mrb[0].mxu0
        %v1107 = vadd.f32 0.0, %v1106
        %v1108 = vpop.f32.mrb[0].mxu0
        %v1109 = vpop.f32.mrb[0].mxu0
        %v1110 = vadd.f32 0.0, %v1109
        %v1111 = vpop.f32.mrb[0].mxu0
        %1112 = vmatprep.mubr.bf16.mxu0 0
        %1113 = vmatmul.mubr.bf16.gmra.mrb[0].mxu0 %v1018
        %v1114 = vpop.f32.mrb[0].mxu0
        %v1115 = vadd.f32 0.0, %v1114
        %v1116 = vpop.f32.mrb[0].mxu0
        %v1117 = vpop.f32.mrb[0].mxu0
        %v1118 = vadd.f32 0.0, %v1117
        %v1119 = vpop.f32.mrb[0].mxu0
        %1120 = vmatprep.mubr.bf16.mxu0 0
        %1121 = vmatmul.mubr.bf16.gmra.mrb[0].mxu0 %v1021
        %v1122 = vpop.f32.mrb[0].mxu0
        %v1123 = vadd.f32 0.0, %v1122
        %v1124 = vpop.f32.mrb[0].mxu0
        %v1125 = vpop.f32.mrb[0].mxu0
        %v1126 = vadd.f32 0.0, %v1125
        %v1127 = vpop.f32.mrb[0].mxu0
        %1128 = vmatprep.mubr.bf16.mxu0 0
        %1129 = vmatmul.mubr.bf16.gmra.mrb[0].mxu0 %v1024
        %v1130 = vpop.f32.mrb[0].mxu0
        %v1131 = vadd.f32 0.0, %v1130
        %v1132 = vpop.f32.mrb[0].mxu0
        %v1133 = vpop.f32.mrb[0].mxu0
        %v1134 = vadd.f32 0.0, %v1133
        %v1135 = vpop.f32.mrb[0].mxu0
        %1136 = vmatprep.mubr.bf16.mxu0 0
        %1137 = vmatmul.mubr.bf16.gmra.mrb[0].mxu0 %v1027
        %v1138 = vpop.f32.mrb[0].mxu0
        %v1139 = vadd.f32 0.0, %v1138
        %v1140 = vpop.f32.mrb[0].mxu0
        %v1141 = vpop.f32.mrb[0].mxu0
        %v1142 = vadd.f32 0.0, %v1141
        %v1143 = vpop.f32.mrb[0].mxu0
        %1144 = vmatprep.mubr.bf16.mxu0 0
        %1145 = vmatmul.mubr.bf16.gmra.mrb[0].mxu0 %v1030
        %v1146 = vpop.f32.mrb[0].mxu0
        %v1147 = vadd.f32 0.0, %v1146
        %v1148 = vpop.f32.mrb[0].mxu0
        %v1149 = vpop.f32.mrb[0].mxu0
        %v1150 = vadd.f32 0.0, %v1149
        %v1151 = vpop.f32.mrb[0].mxu0
        %1152 = vdwg.mxu0
        %1153 = vmax.xlane.f32.xlu0 %v1091
        %v1154 = vpop.xlane.xlu0 %1153
        %1155 = vmax.xlane.f32.xlu0 %v1094
        %v1156 = vpop.xlane.xlu0 %1155
        %1157 = vmax.xlane.f32.xlu0 %v1099
        %v1158 = vpop.xlane.xlu0 %1157
        %1159 = vmax.xlane.f32.xlu0 %v1102
        %v1160 = vpop.xlane.xlu0 %1159
        %1161 = vmax.xlane.f32.xlu0 %v1107
        %v1162 = vpop.xlane.xlu0 %1161
        %1163 = vmax.xlane.f32.xlu0 %v1110
        %v1164 = vpop.xlane.xlu0 %1163
        %1165 = vmax.xlane.f32.xlu0 %v1115
        %v1166 = vpop.xlane.xlu0 %1165
        %1167 = vmax.xlane.f32.xlu0 %v1118
        %v1168 = vpop.xlane.xlu0 %1167
        %1169 = vmax.xlane.f32.xlu0 %v1123
        %v1170 = vpop.xlane.xlu0 %1169
        %1171 = vmax.xlane.f32.xlu0 %v1126
        %v1172 = vpop.xlane.xlu0 %1171
        %1173 = vmax.xlane.f32.xlu0 %v1131
        %v1174 = vpop.xlane.xlu0 %1173
        %1175 = vmax.xlane.f32.xlu0 %v1134
        %v1176 = vpop.xlane.xlu0 %1175
        %1177 = vmax.xlane.f32.xlu0 %v1139
        %v1178 = vpop.xlane.xlu0 %1177
        %1179 = vmax.xlane.f32.xlu0 %v1142
        %v1180 = vpop.xlane.xlu0 %1179
        %1181 = vmax.xlane.f32.xlu0 %v1147
        %v1182 = vpop.xlane.xlu0 %1181
        %1183 = vmax.xlane.f32.xlu0 %v1150
        %v1184 = vpop.xlane.xlu0 %1183
        %v1185 = vsub.f32 %v1091, %v1154
        %v1186 = vsub.f32 %v1094, %v1156
        %v1187 = vsub.f32 %v1099, %v1158
        %v1188 = vsub.f32 %v1102, %v1160
        %v1189 = vsub.f32 %v1107, %v1162
        %v1190 = vsub.f32 %v1110, %v1164
        %v1191 = vsub.f32 %v1115, %v1166
        %v1192 = vsub.f32 %v1118, %v1168
        %v1193 = vsub.f32 %v1123, %v1170
        %v1194 = vsub.f32 %v1126, %v1172
        %v1195 = vsub.f32 %v1131, %v1174
        %v1196 = vsub.f32 %v1134, %v1176
        %v1197 = vsub.f32 %v1139, %v1178
        %v1198 = vsub.f32 %v1142, %v1180
        %v1199 = vsub.f32 %v1147, %v1182
        %v1200 = vsub.f32 %v1150, %v1184
        %v1201 = vmul.f32 %v1185, 1.442695
        %v1202 = vpow.pop %v1201
        %v1203 = vmul.f32 %v1186, 1.442695
        %v1204 = vpow.pop %v1203
        %v1205 = vmul.f32 %v1187, 1.442695
        %v1206 = vpow.pop %v1205
        %v1207 = vmul.f32 %v1188, 1.442695
        %v1208 = vpow.pop %v1207
        %v1209 = vmul.f32 %v1189, 1.442695
        %v1210 = vpow.pop %v1209
        %v1211 = vmul.f32 %v1190, 1.442695
        %v1212 = vpow.pop %v1211
        %v1213 = vmul.f32 %v1191, 1.442695
        %v1214 = vpow.pop %v1213
        %v1215 = vmul.f32 %v1192, 1.442695
        %v1216 = vpow.pop %v1215
        %v1217 = vmul.f32 %v1193, 1.442695
        %v1218 = vpow.pop %v1217
        %v1219 = vmul.f32 %v1194, 1.442695
        %v1220 = vpow.pop %v1219
        %v1221 = vmul.f32 %v1195, 1.442695
        %v1222 = vpow.pop %v1221
        %v1223 = vmul.f32 %v1196, 1.442695
        %v1224 = vpow.pop %v1223
        %v1225 = vmul.f32 %v1197, 1.442695
        %v1226 = vpow.pop %v1225
        %v1227 = vmul.f32 %v1198, 1.442695
        %v1228 = vpow.pop %v1227
        %v1229 = vmul.f32 %v1199, 1.442695
        %v1230 = vpow.pop %v1229
        %v1231 = vmul.f32 %v1200, 1.442695
        %v1232 = vpow.pop %v1231
        %1233 = vadd.xlane.f32.xlu0 %v1202
        %v1234 = vpop.xlane.xlu0 %1233
        %1235 = vadd.xlane.f32.xlu0 %v1204
        %v1236 = vpop.xlane.xlu0 %1235
        %1237 = vadd.xlane.f32.xlu0 %v1206
        %v1238 = vpop.xlane.xlu0 %1237
        %1239 = vadd.xlane.f32.xlu0 %v1208
        %v1240 = vpop.xlane.xlu0 %1239
        %1241 = vadd.xlane.f32.xlu0 %v1210
        %v1242 = vpop.xlane.xlu0 %1241
        %1243 = vadd.xlane.f32.xlu0 %v1212
        %v1244 = vpop.xlane.xlu0 %1243
        %1245 = vadd.xlane.f32.xlu0 %v1214
        %v1246 = vpop.xlane.xlu0 %1245
        %1247 = vadd.xlane.f32.xlu0 %v1216
        %v1248 = vpop.xlane.xlu0 %1247
        %1249 = vadd.xlane.f32.xlu0 %v1218
        %v1250 = vpop.xlane.xlu0 %1249
        %1251 = vadd.xlane.f32.xlu0 %v1220
        %v1252 = vpop.xlane.xlu0 %1251
        %1253 = vadd.xlane.f32.xlu0 %v1222
        %v1254 = vpop.xlane.xlu0 %1253
        %1255 = vadd.xlane.f32.xlu0 %v1224
        %v1256 = vpop.xlane.xlu0 %1255
        %1257 = vadd.xlane.f32.xlu0 %v1226
        %v1258 = vpop.xlane.xlu0 %1257
        %1259 = vadd.xlane.f32.xlu0 %v1228
        %v1260 = vpop.xlane.xlu0 %1259
        %1261 = vadd.xlane.f32.xlu0 %v1230
        %v1262 = vpop.xlane.xlu0 %1261
        %1263 = vadd.xlane.f32.xlu0 %v1232
        %v1264 = vpop.xlane.xlu0 %1263
        %v1265 = vrcp.pop %v1234
        %v1266 = vmul.f32 %v1202, %v1265
        %v1267 = vrcp.pop %v1236
        %v1268 = vmul.f32 %v1204, %v1267
        %v1269 = vrcp.pop %v1238
        %v1270 = vmul.f32 %v1206, %v1269
        %v1271 = vrcp.pop %v1240
        %v1272 = vmul.f32 %v1208, %v1271
        %v1273 = vrcp.pop %v1242
        %v1274 = vmul.f32 %v1210, %v1273
        %v1275 = vrcp.pop %v1244
        %v1276 = vmul.f32 %v1212, %v1275
        %v1277 = vrcp.pop %v1246
        %v1278 = vmul.f32 %v1214, %v1277
        %v1279 = vrcp.pop %v1248
        %v1280 = vmul.f32 %v1216, %v1279
        %v1281 = vrcp.pop %v1250
        %v1282 = vmul.f32 %v1218, %v1281
        %v1283 = vrcp.pop %v1252
        %v1284 = vmul.f32 %v1220, %v1283
        %v1285 = vrcp.pop %v1254
        %v1286 = vmul.f32 %v1222, %v1285
        %v1287 = vrcp.pop %v1256
        %v1288 = vmul.f32 %v1224, %v1287
        %v1289 = vrcp.pop %v1258
        %v1290 = vmul.f32 %v1226, %v1289
        %v1291 = vrcp.pop %v1260
        %v1292 = vmul.f32 %v1228, %v1291
        %v1293 = vrcp.pop %v1262
        %v1294 = vmul.f32 %v1230, %v1293
        %v1295 = vrcp.pop %v1264
        %v1296 = vmul.f32 %v1232, %v1295
        %v1297 = vpack.c.bf16 %v1268, %v1266
        %v1298 = vpack.c.bf16 %v1272, %v1270
        %v1299 = vpack.c.bf16 %v1276, %v1274
        %v1300 = vpack.c.bf16 %v1280, %v1278
        %v1301 = vpack.c.bf16 %v1284, %v1282
        %v1302 = vpack.c.bf16 %v1288, %v1286
        %v1303 = vpack.c.bf16 %v1292, %v1290
        %v1304 = vpack.c.bf16 %v1296, %v1294
        %v1313 = vunpack.c.l.b16 %v1297
        %v1314 = vunpack.c.h.b16 %v1297
        %v1315 = vunpack.c.l.b16 %v1298
        %v1316 = vunpack.c.h.b16 %v1298
        %v1317 = vunpack.c.l.b16 %v1299
        %v1318 = vunpack.c.h.b16 %v1299
        %v1319 = vunpack.c.l.b16 %v1300
        %v1320 = vunpack.c.h.b16 %v1300
        %v1321 = vunpack.c.l.b16 %v1301
        %v1322 = vunpack.c.h.b16 %v1301
        %v1323 = vunpack.c.l.b16 %v1302
        %v1324 = vunpack.c.h.b16 %v1302
        %v1325 = vunpack.c.l.b16 %v1303
        %v1326 = vunpack.c.h.b16 %v1303
        %v1327 = vunpack.c.l.b16 %v1304
        %v1328 = vunpack.c.h.b16 %v1304
        %v1329 = vpack.c.b16 %v1313, %v1313
        %v1330 = vpack.c.b16 %v1314, %v1314
        %v1331 = vpack.c.b16 %v1315, %v1315
        %v1332 = vpack.c.b16 %v1316, %v1316
        %v1333 = vpack.c.b16 %v1317, %v1317
        %v1334 = vpack.c.b16 %v1318, %v1318
        %v1335 = vpack.c.b16 %v1319, %v1319
        %v1336 = vpack.c.b16 %v1320, %v1320
        %v1337 = vpack.c.b16 %v1321, %v1321
        %v1338 = vpack.c.b16 %v1322, %v1322
        %v1339 = vpack.c.b16 %v1323, %v1323
        %v1340 = vpack.c.b16 %v1324, %v1324
        %v1341 = vpack.c.b16 %v1325, %v1325
        %v1342 = vpack.c.b16 %v1326, %v1326
        %v1343 = vpack.c.b16 %v1327, %v1327
        %v1344 = vpack.c.b16 %v1328, %v1328
        %1361 = vst [vmem:[%s554] sm:$0xf] %v1329
        %1362 = vst [vmem:[%s554 + $0x4] sm:$0xf] %v1330
        %1363 = vst [vmem:[%s554 + $0x8] sm:$0xf] %v1331
        %1364 = vst [vmem:[%s554 + $0xc] sm:$0xf] %v1332
        %1365 = vst [vmem:[%s554 + $0x10] sm:$0xf] %v1333
        %1366 = vst [vmem:[%s554 + $0x14] sm:$0xf] %v1334
        %1367 = vst [vmem:[%s554 + $0x18] sm:$0xf] %v1335
        %1368 = vst [vmem:[%s554 + $0x1c] sm:$0xf] %v1336
        %1369 = vst [vmem:[%s554 + $0x20] sm:$0xf] %v1337
        %1370 = vst [vmem:[%s554 + $0x24] sm:$0xf] %v1338
        %1371 = vst [vmem:[%s554 + $0x28] sm:$0xf] %v1339
        %1372 = vst [vmem:[%s554 + $0x2c] sm:$0xf] %v1340
        %1373 = vst [vmem:[%s554 + $0x30] sm:$0xf] %v1341
        %1374 = vst [vmem:[%s554 + $0x34] sm:$0xf] %v1342
        %1375 = vst [vmem:[%s554 + $0x38] sm:$0xf] %v1343
        %1376 = vst [vmem:[%s554 + $0x3c] sm:$0xf] %v1344
        %1377 = vmatprep.subr.bf16.mxu0 0
        %1378 = vmatpush1.bf16.msra.mxu0 %v999
        %1379 = vmatprep.subr.bf16.mxu0 0
        %1380 = vmatpush1.bf16.msra.mxu0 %v1000
        %1381 = vmatprep.subr.bf16.mxu0 0
        %1382 = vmatpush1.bf16.msra.mxu0 %v1001
        %1383 = vmatprep.subr.bf16.mxu0 0
        %1384 = vmatpush1.bf16.msra.mxu0 %v1002
        %1385 = vmatprep.subr.bf16.mxu0 0
        %1386 = vmatpush1.bf16.msra.mxu0 %v1003
        %1387 = vmatprep.subr.bf16.mxu0 0
        %1388 = vmatpush1.bf16.msra.mxu0 %v1004
        %1389 = vmatprep.subr.bf16.mxu0 0
        %1390 = vmatpush1.bf16.msra.mxu0 %v1005
        %1391 = vmatprep.subr.bf16.mxu0 0
        %1392 = vmatpush1.bf16.msra.mxu0 %v1006
        %1393 = vmatprep.subr.bf16.mxu0 0
        %1394 = vmatpush1.bf16.msra.mxu0 0
        %1395 = vmatprep.subr.bf16.mxu0 0
        %1396 = vmatpush1.bf16.msra.mxu0 0
        %1397 = vmatprep.subr.bf16.mxu0 0
        %1398 = vmatpush1.bf16.msra.mxu0 0
        %1399 = vmatprep.subr.bf16.mxu0 0
        %1400 = vmatpush1.bf16.msra.mxu0 0
        %1401 = vmatprep.subr.bf16.mxu0 0
        %1402 = vmatpush1.bf16.msra.mxu0 0
        %1403 = vmatprep.subr.bf16.mxu0 0
        %1404 = vmatpush1.bf16.msra.mxu0 0
        %1405 = vmatprep.subr.bf16.mxu0 0
        %1406 = vmatpush1.bf16.msra.mxu0 0
        %1407 = vmatprep.subr.bf16.mxu0 0
        %1408 = vmatpush1.bf16.msra.mxu0 0
        %1409 = vmatprep.mubr.bf16.mxu0 0
        %1410 = vmatmul.mubr.bf16.gmra.mrb[0].mxu0 %v1297
        %v1411 = vpop.f32.mrb[0].mxu0
        %v1412 = vadd.f32 0.0, %v1411
        %v1413 = vpop.f32.mrb[0].mxu0
        %v1414 = vpop.f32.mrb[0].mxu0
        %v1415 = vadd.f32 0.0, %v1414
        %v1416 = vpop.f32.mrb[0].mxu0
        %1417 = vmatprep.mubr.bf16.mxu0 0
        %1418 = vmatmul.mubr.bf16.gmra.mrb[0].mxu0 %v1298
        %v1419 = vpop.f32.mrb[0].mxu0
        %v1420 = vadd.f32 0.0, %v1419
        %v1421 = vpop.f32.mrb[0].mxu0
        %v1422 = vpop.f32.mrb[0].mxu0
        %v1423 = vadd.f32 0.0, %v1422
        %v1424 = vpop.f32.mrb[0].mxu0
        %1425 = vmatprep.mubr.bf16.mxu0 0
        %1426 = vmatmul.mubr.bf16.gmra.mrb[0].mxu0 %v1299
        %v1427 = vpop.f32.mrb[0].mxu0
        %v1428 = vadd.f32 0.0, %v1427
        %v1429 = vpop.f32.mrb[0].mxu0
        %v1430 = vpop.f32.mrb[0].mxu0
        %v1431 = vadd.f32 0.0, %v1430
        %v1432 = vpop.f32.mrb[0].mxu0
        %1433 = vmatprep.mubr.bf16.mxu0 0
        %1434 = vmatmul.mubr.bf16.gmra.mrb[0].mxu0 %v1300
        %v1435 = vpop.f32.mrb[0].mxu0
        %v1436 = vadd.f32 0.0, %v1435
        %v1437 = vpop.f32.mrb[0].mxu0
        %v1438 = vpop.f32.mrb[0].mxu0
        %v1439 = vadd.f32 0.0, %v1438
        %v1440 = vpop.f32.mrb[0].mxu0
        %1441 = vmatprep.mubr.bf16.mxu0 0
        %1442 = vmatmul.mubr.bf16.gmra.mrb[0].mxu0 %v1301
        %v1443 = vpop.f32.mrb[0].mxu0
        %v1444 = vadd.f32 0.0, %v1443
        %v1445 = vpop.f32.mrb[0].mxu0
        %v1446 = vpop.f32.mrb[0].mxu0
        %v1447 = vadd.f32 0.0, %v1446
        %v1448 = vpop.f32.mrb[0].mxu0
        %1449 = vmatprep.mubr.bf16.mxu0 0
        %1450 = vmatmul.mubr.bf16.gmra.mrb[0].mxu0 %v1302
        %v1451 = vpop.f32.mrb[0].mxu0
        %v1452 = vadd.f32 0.0, %v1451
        %v1453 = vpop.f32.mrb[0].mxu0
        %v1454 = vpop.f32.mrb[0].mxu0
        %v1455 = vadd.f32 0.0, %v1454
        %v1456 = vpop.f32.mrb[0].mxu0
        %1457 = vmatprep.mubr.bf16.mxu0 0
        %1458 = vmatmul.mubr.bf16.gmra.mrb[0].mxu0 %v1303
        %v1459 = vpop.f32.mrb[0].mxu0
        %v1460 = vadd.f32 0.0, %v1459
        %v1461 = vpop.f32.mrb[0].mxu0
        %v1462 = vpop.f32.mrb[0].mxu0
        %v1463 = vadd.f32 0.0, %v1462
        %v1464 = vpop.f32.mrb[0].mxu0
        %1465 = vmatprep.mubr.bf16.mxu0 0
        %1466 = vmatmul.mubr.bf16.gmra.mrb[0].mxu0 %v1304
        %v1467 = vpop.f32.mrb[0].mxu0
        %v1468 = vadd.f32 0.0, %v1467
        %v1469 = vpop.f32.mrb[0].mxu0
        %v1470 = vpop.f32.mrb[0].mxu0
        %v1471 = vadd.f32 0.0, %v1470
        %v1472 = vpop.f32.mrb[0].mxu0
        %1473 = vdwg.mxu0
        %1482 = vrot.lane.b32.xlu0 %v983, 96
        %v1483 = vpop.permute.xlu0 %1482
        %1484 = vrot.lane.b32.xlu0 %v984, 96
        %v1485 = vpop.permute.xlu0 %1484
        %1486 = vrot.lane.b32.xlu0 %v985, 96
        %v1487 = vpop.permute.xlu0 %1486
        %1488 = vrot.lane.b32.xlu0 %v986, 96
        %v1489 = vpop.permute.xlu0 %1488
        %1490 = vrot.lane.b32.xlu0 %v987, 96
        %v1491 = vpop.permute.xlu0 %1490
        %1492 = vrot.lane.b32.xlu0 %v988, 96
        %v1493 = vpop.permute.xlu0 %1492
        %1494 = vrot.lane.b32.xlu0 %v989, 96
        %v1495 = vpop.permute.xlu0 %1494
        %1496 = vrot.lane.b32.xlu0 %v990, 96
        %v1497 = vpop.permute.xlu0 %1496
        %1506 = vrot.lane.b32.xlu0 %v991, 96
        %v1507 = vpop.permute.xlu0 %1506
        %1508 = vrot.lane.b32.xlu0 %v992, 96
        %v1509 = vpop.permute.xlu0 %1508
        %1510 = vrot.lane.b32.xlu0 %v993, 96
        %v1511 = vpop.permute.xlu0 %1510
        %1512 = vrot.lane.b32.xlu0 %v994, 96
        %v1513 = vpop.permute.xlu0 %1512
        %1514 = vrot.lane.b32.xlu0 %v995, 96
        %v1515 = vpop.permute.xlu0 %1514
        %1516 = vrot.lane.b32.xlu0 %v996, 96
        %v1517 = vpop.permute.xlu0 %1516
        %1518 = vrot.lane.b32.xlu0 %v997, 96
        %v1519 = vpop.permute.xlu0 %1518
        %1520 = vrot.lane.b32.xlu0 %v998, 96
        %v1521 = vpop.permute.xlu0 %1520
        %v1523 = vsel %vm1007, %v1483, 0
        %v1526 = vsel %vm1007, %v1485, 0
        %v1529 = vsel %vm1007, %v1487, 0
        %v1532 = vsel %vm1007, %v1489, 0
        %v1535 = vsel %vm1007, %v1491, 0
        %v1538 = vsel %vm1007, %v1493, 0
        %v1541 = vsel %vm1007, %v1495, 0
        %v1544 = vsel %vm1007, %v1497, 0
        %v1547 = vsel %vm1007, %v1507, 0
        %v1550 = vsel %vm1007, %v1509, 0
        %v1553 = vsel %vm1007, %v1511, 0
        %v1556 = vsel %vm1007, %v1513, 0
        %v1559 = vsel %vm1007, %v1515, 0
        %v1562 = vsel %vm1007, %v1517, 0
        %v1565 = vsel %vm1007, %v1519, 0
        %v1568 = vsel %vm1007, %v1521, 0
        %1570 = vmatprep.subr.bf16.mxu0 0
        %1571 = vmatpush1.bf16.xpose.msra.mxu0 %v1547
        %1572 = vmatprep.subr.bf16.mxu0 0
        %1573 = vmatpush1.bf16.xpose.msra.mxu0 %v1550
        %1574 = vmatprep.subr.bf16.mxu0 0
        %1575 = vmatpush1.bf16.xpose.msra.mxu0 %v1553
        %1576 = vmatprep.subr.bf16.mxu0 0
        %1577 = vmatpush1.bf16.xpose.msra.mxu0 %v1556
        %1578 = vmatprep.subr.bf16.mxu0 0
        %1579 = vmatpush1.bf16.xpose.msra.mxu0 %v1559
        %1580 = vmatprep.subr.bf16.mxu0 0
        %1581 = vmatpush1.bf16.xpose.msra.mxu0 %v1562
        %1582 = vmatprep.subr.bf16.mxu0 0
        %1583 = vmatpush1.bf16.xpose.msra.mxu0 %v1565
        %1584 = vmatprep.subr.bf16.mxu0 0
        %1585 = vmatpush1.bf16.xpose.msra.mxu0 %v1568
        %1586 = vmatprep.subr.bf16.mxu0 0
        %1587 = vmatpush1.bf16.xpose.msra.mxu0 0
        %1588 = vmatprep.subr.bf16.mxu0 0
        %1589 = vmatpush1.bf16.xpose.msra.mxu0 0
        %1590 = vmatprep.subr.bf16.mxu0 0
        %1591 = vmatpush1.bf16.xpose.msra.mxu0 0
        %1592 = vmatprep.subr.bf16.mxu0 0
        %1593 = vmatpush1.bf16.xpose.msra.mxu0 0
        %1594 = vmatprep.subr.bf16.mxu0 0
        %1595 = vmatpush1.bf16.xpose.msra.mxu0 0
        %1596 = vmatprep.subr.bf16.mxu0 0
        %1597 = vmatpush1.bf16.xpose.msra.mxu0 0
        %1598 = vmatprep.subr.bf16.mxu0 0
        %1599 = vmatpush1.bf16.xpose.msra.mxu0 0
        %1600 = vmatprep.subr.bf16.mxu0 0
        %1601 = vmatpush1.bf16.xpose.msra.mxu0 0
        %1602 = vmatprep.mubr.bf16.mxu0 0
        %1603 = vmatmul.mubr.bf16.gmra.mrb[0].mxu0 %v1523
        %v1604 = vpop.f32.mrb[0].mxu0
        %v1605 = vadd.f32 0.0, %v1604
        %v1606 = vpop.f32.mrb[0].mxu0
        %v1607 = vpop.f32.mrb[0].mxu0
        %v1608 = vadd.f32 0.0, %v1607
        %v1609 = vpop.f32.mrb[0].mxu0
        %1610 = vmatprep.mubr.bf16.mxu0 0
        %1611 = vmatmul.mubr.bf16.gmra.mrb[0].mxu0 %v1526
        %v1612 = vpop.f32.mrb[0].mxu0
        %v1613 = vadd.f32 0.0, %v1612
        %v1614 = vpop.f32.mrb[0].mxu0
        %v1615 = vpop.f32.mrb[0].mxu0
        %v1616 = vadd.f32 0.0, %v1615
        %v1617 = vpop.f32.mrb[0].mxu0
        %1618 = vmatprep.mubr.bf16.mxu0 0
        %1619 = vmatmul.mubr.bf16.gmra.mrb[0].mxu0 %v1529
        %v1620 = vpop.f32.mrb[0].mxu0
        %v1621 = vadd.f32 0.0, %v1620
        %v1622 = vpop.f32.mrb[0].mxu0
        %v1623 = vpop.f32.mrb[0].mxu0
        %v1624 = vadd.f32 0.0, %v1623
        %v1625 = vpop.f32.mrb[0].mxu0
        %1626 = vmatprep.mubr.bf16.mxu0 0
        %1627 = vmatmul.mubr.bf16.gmra.mrb[0].mxu0 %v1532
        %v1628 = vpop.f32.mrb[0].mxu0
        %v1629 = vadd.f32 0.0, %v1628
        %v1630 = vpop.f32.mrb[0].mxu0
        %v1631 = vpop.f32.mrb[0].mxu0
        %v1632 = vadd.f32 0.0, %v1631
        %v1633 = vpop.f32.mrb[0].mxu0
        %1634 = vmatprep.mubr.bf16.mxu0 0
        %1635 = vmatmul.mubr.bf16.gmra.mrb[0].mxu0 %v1535
        %v1636 = vpop.f32.mrb[0].mxu0
        %v1637 = vadd.f32 0.0, %v1636
        %v1638 = vpop.f32.mrb[0].mxu0
        %v1639 = vpop.f32.mrb[0].mxu0
        %v1640 = vadd.f32 0.0, %v1639
        %v1641 = vpop.f32.mrb[0].mxu0
        %1642 = vmatprep.mubr.bf16.mxu0 0
        %1643 = vmatmul.mubr.bf16.gmra.mrb[0].mxu0 %v1538
        %v1644 = vpop.f32.mrb[0].mxu0
        %v1645 = vadd.f32 0.0, %v1644
        %v1646 = vpop.f32.mrb[0].mxu0
        %v1647 = vpop.f32.mrb[0].mxu0
        %v1648 = vadd.f32 0.0, %v1647
        %v1649 = vpop.f32.mrb[0].mxu0
        %1650 = vmatprep.mubr.bf16.mxu0 0
        %1651 = vmatmul.mubr.bf16.gmra.mrb[0].mxu0 %v1541
        %v1652 = vpop.f32.mrb[0].mxu0
        %v1653 = vadd.f32 0.0, %v1652
        %v1654 = vpop.f32.mrb[0].mxu0
        %v1655 = vpop.f32.mrb[0].mxu0
        %v1656 = vadd.f32 0.0, %v1655
        %v1657 = vpop.f32.mrb[0].mxu0
        %1658 = vmatprep.mubr.bf16.mxu0 0
        %1659 = vmatmul.mubr.bf16.gmra.mrb[0].mxu0 %v1544
        %v1660 = vpop.f32.mrb[0].mxu0
        %v1661 = vadd.f32 0.0, %v1660
        %v1662 = vpop.f32.mrb[0].mxu0
        %v1663 = vpop.f32.mrb[0].mxu0
        %v1664 = vadd.f32 0.0, %v1663
        %v1665 = vpop.f32.mrb[0].mxu0
        %1666 = vdwg.mxu0
        %1667 = vmax.xlane.f32.xlu0 %v1605
        %v1668 = vpop.xlane.xlu0 %1667
        %1669 = vmax.xlane.f32.xlu0 %v1608
        %v1670 = vpop.xlane.xlu0 %1669
        %1671 = vmax.xlane.f32.xlu0 %v1613
        %v1672 = vpop.xlane.xlu0 %1671
        %1673 = vmax.xlane.f32.xlu0 %v1616
        %v1674 = vpop.xlane.xlu0 %1673
        %1675 = vmax.xlane.f32.xlu0 %v1621
        %v1676 = vpop.xlane.xlu0 %1675
        %1677 = vmax.xlane.f32.xlu0 %v1624
        %v1678 = vpop.xlane.xlu0 %1677
        %1679 = vmax.xlane.f32.xlu0 %v1629
        %v1680 = vpop.xlane.xlu0 %1679
        %1681 = vmax.xlane.f32.xlu0 %v1632
        %v1682 = vpop.xlane.xlu0 %1681
        %1683 = vmax.xlane.f32.xlu0 %v1637
        %v1684 = vpop.xlane.xlu0 %1683
        %1685 = vmax.xlane.f32.xlu0 %v1640
        %v1686 = vpop.xlane.xlu0 %1685
        %1687 = vmax.xlane.f32.xlu0 %v1645
        %v1688 = vpop.xlane.xlu0 %1687
        %1689 = vmax.xlane.f32.xlu0 %v1648
        %v1690 = vpop.xlane.xlu0 %1689
        %1691 = vmax.xlane.f32.xlu0 %v1653
        %v1692 = vpop.xlane.xlu0 %1691
        %1693 = vmax.xlane.f32.xlu0 %v1656
        %v1694 = vpop.xlane.xlu0 %1693
        %1695 = vmax.xlane.f32.xlu0 %v1661
        %v1696 = vpop.xlane.xlu0 %1695
        %1697 = vmax.xlane.f32.xlu0 %v1664
        %v1698 = vpop.xlane.xlu0 %1697
        %v1699 = vsub.f32 %v1605, %v1668
        %v1700 = vsub.f32 %v1608, %v1670
        %v1701 = vsub.f32 %v1613, %v1672
        %v1702 = vsub.f32 %v1616, %v1674
        %v1703 = vsub.f32 %v1621, %v1676
        %v1704 = vsub.f32 %v1624, %v1678
        %v1705 = vsub.f32 %v1629, %v1680
        %v1706 = vsub.f32 %v1632, %v1682
        %v1707 = vsub.f32 %v1637, %v1684
        %v1708 = vsub.f32 %v1640, %v1686
        %v1709 = vsub.f32 %v1645, %v1688
        %v1710 = vsub.f32 %v1648, %v1690
        %v1711 = vsub.f32 %v1653, %v1692
        %v1712 = vsub.f32 %v1656, %v1694
        %v1713 = vsub.f32 %v1661, %v1696
        %v1714 = vsub.f32 %v1664, %v1698
        %v1715 = vmul.f32 %v1699, 1.442695
        %v1716 = vpow.pop %v1715
        %v1717 = vmul.f32 %v1700, 1.442695
        %v1718 = vpow.pop %v1717
        %v1719 = vmul.f32 %v1701, 1.442695
        %v1720 = vpow.pop %v1719
        %v1721 = vmul.f32 %v1702, 1.442695
        %v1722 = vpow.pop %v1721
        %v1723 = vmul.f32 %v1703, 1.442695
        %v1724 = vpow.pop %v1723
        %v1725 = vmul.f32 %v1704, 1.442695
        %v1726 = vpow.pop %v1725
        %v1727 = vmul.f32 %v1705, 1.442695
        %v1728 = vpow.pop %v1727
        %v1729 = vmul.f32 %v1706, 1.442695
        %v1730 = vpow.pop %v1729
        %v1731 = vmul.f32 %v1707, 1.442695
        %v1732 = vpow.pop %v1731
        %v1733 = vmul.f32 %v1708, 1.442695
        %v1734 = vpow.pop %v1733
        %v1735 = vmul.f32 %v1709, 1.442695
        %v1736 = vpow.pop %v1735
        %v1737 = vmul.f32 %v1710, 1.442695
        %v1738 = vpow.pop %v1737
        %v1739 = vmul.f32 %v1711, 1.442695
        %v1740 = vpow.pop %v1739
        %v1741 = vmul.f32 %v1712, 1.442695
        %v1742 = vpow.pop %v1741
        %v1743 = vmul.f32 %v1713, 1.442695
        %v1744 = vpow.pop %v1743
        %v1745 = vmul.f32 %v1714, 1.442695
        %v1746 = vpow.pop %v1745
        %1747 = vadd.xlane.f32.xlu0 %v1716
        %v1748 = vpop.xlane.xlu0 %1747
        %1749 = vadd.xlane.f32.xlu0 %v1718
        %v1750 = vpop.xlane.xlu0 %1749
        %1751 = vadd.xlane.f32.xlu0 %v1720
        %v1752 = vpop.xlane.xlu0 %1751
        %1753 = vadd.xlane.f32.xlu0 %v1722
        %v1754 = vpop.xlane.xlu0 %1753
        %1755 = vadd.xlane.f32.xlu0 %v1724
        %v1756 = vpop.xlane.xlu0 %1755
        %1757 = vadd.xlane.f32.xlu0 %v1726
        %v1758 = vpop.xlane.xlu0 %1757
        %1759 = vadd.xlane.f32.xlu0 %v1728
        %v1760 = vpop.xlane.xlu0 %1759
        %1761 = vadd.xlane.f32.xlu0 %v1730
        %v1762 = vpop.xlane.xlu0 %1761
        %1763 = vadd.xlane.f32.xlu0 %v1732
        %v1764 = vpop.xlane.xlu0 %1763
        %1765 = vadd.xlane.f32.xlu0 %v1734
        %v1766 = vpop.xlane.xlu0 %1765
        %1767 = vadd.xlane.f32.xlu0 %v1736
        %v1768 = vpop.xlane.xlu0 %1767
        %1769 = vadd.xlane.f32.xlu0 %v1738
        %v1770 = vpop.xlane.xlu0 %1769
        %1771 = vadd.xlane.f32.xlu0 %v1740
        %v1772 = vpop.xlane.xlu0 %1771
        %1773 = vadd.xlane.f32.xlu0 %v1742
        %v1774 = vpop.xlane.xlu0 %1773
        %1775 = vadd.xlane.f32.xlu0 %v1744
        %v1776 = vpop.xlane.xlu0 %1775
        %1777 = vadd.xlane.f32.xlu0 %v1746
        %v1778 = vpop.xlane.xlu0 %1777
        %v1779 = vrcp.pop %v1748
        %v1780 = vmul.f32 %v1716, %v1779
        %v1781 = vrcp.pop %v1750
        %v1782 = vmul.f32 %v1718, %v1781
        %v1783 = vrcp.pop %v1752
        %v1784 = vmul.f32 %v1720, %v1783
        %v1785 = vrcp.pop %v1754
        %v1786 = vmul.f32 %v1722, %v1785
        %v1787 = vrcp.pop %v1756
        %v1788 = vmul.f32 %v1724, %v1787
        %v1789 = vrcp.pop %v1758
        %v1790 = vmul.f32 %v1726, %v1789
        %v1791 = vrcp.pop %v1760
        %v1792 = vmul.f32 %v1728, %v1791
        %v1793 = vrcp.pop %v1762
        %v1794 = vmul.f32 %v1730, %v1793
        %v1795 = vrcp.pop %v1764
        %v1796 = vmul.f32 %v1732, %v1795
        %v1797 = vrcp.pop %v1766
        %v1798 = vmul.f32 %v1734, %v1797
        %v1799 = vrcp.pop %v1768
        %v1800 = vmul.f32 %v1736, %v1799
        %v1801 = vrcp.pop %v1770
        %v1802 = vmul.f32 %v1738, %v1801
        %v1803 = vrcp.pop %v1772
        %v1804 = vmul.f32 %v1740, %v1803
        %v1805 = vrcp.pop %v1774
        %v1806 = vmul.f32 %v1742, %v1805
        %v1807 = vrcp.pop %v1776
        %v1808 = vmul.f32 %v1744, %v1807
        %v1809 = vrcp.pop %v1778
        %v1810 = vmul.f32 %v1746, %v1809
        %v1811 = vpack.c.bf16 %v1782, %v1780
        %v1812 = vpack.c.bf16 %v1786, %v1784
        %v1813 = vpack.c.bf16 %v1790, %v1788
        %v1814 = vpack.c.bf16 %v1794, %v1792
        %v1815 = vpack.c.bf16 %v1798, %v1796
        %v1816 = vpack.c.bf16 %v1802, %v1800
        %v1817 = vpack.c.bf16 %v1806, %v1804
        %v1818 = vpack.c.bf16 %v1810, %v1808
        %v1827 = vunpack.c.l.b16 %v1811
        %v1828 = vunpack.c.h.b16 %v1811
        %v1829 = vunpack.c.l.b16 %v1812
        %v1830 = vunpack.c.h.b16 %v1812
        %v1831 = vunpack.c.l.b16 %v1813
        %v1832 = vunpack.c.h.b16 %v1813
        %v1833 = vunpack.c.l.b16 %v1814
        %v1834 = vunpack.c.h.b16 %v1814
        %v1835 = vunpack.c.l.b16 %v1815
        %v1836 = vunpack.c.h.b16 %v1815
        %v1837 = vunpack.c.l.b16 %v1816
        %v1838 = vunpack.c.h.b16 %v1816
        %v1839 = vunpack.c.l.b16 %v1817
        %v1840 = vunpack.c.h.b16 %v1817
        %v1841 = vunpack.c.l.b16 %v1818
        %v1842 = vunpack.c.h.b16 %v1818
        %v1843 = vpack.c.b16 %v1827, %v1827
        %v1844 = vpack.c.b16 %v1828, %v1828
        %v1845 = vpack.c.b16 %v1829, %v1829
        %v1846 = vpack.c.b16 %v1830, %v1830
        %v1847 = vpack.c.b16 %v1831, %v1831
        %v1848 = vpack.c.b16 %v1832, %v1832
        %v1849 = vpack.c.b16 %v1833, %v1833
        %v1850 = vpack.c.b16 %v1834, %v1834
        %v1851 = vpack.c.b16 %v1835, %v1835
        %v1852 = vpack.c.b16 %v1836, %v1836
        %v1853 = vpack.c.b16 %v1837, %v1837
        %v1854 = vpack.c.b16 %v1838, %v1838
        %v1855 = vpack.c.b16 %v1839, %v1839
        %v1856 = vpack.c.b16 %v1840, %v1840
        %v1857 = vpack.c.b16 %v1841, %v1841
        %v1858 = vpack.c.b16 %v1842, %v1842
        %s1875 = scalar_lea.vmem %s554, 64 [#allocation12]
        %1876 = vst [vmem:[%s1875] sm:$0xf] %v1843
        %1877 = vst [vmem:[%s1875 + $0x4] sm:$0xf] %v1844
        %1878 = vst [vmem:[%s1875 + $0x8] sm:$0xf] %v1845
        %1879 = vst [vmem:[%s1875 + $0xc] sm:$0xf] %v1846
        %1880 = vst [vmem:[%s1875 + $0x10] sm:$0xf] %v1847
        %1881 = vst [vmem:[%s1875 + $0x14] sm:$0xf] %v1848
        %1882 = vst [vmem:[%s1875 + $0x18] sm:$0xf] %v1849
        %1883 = vst [vmem:[%s1875 + $0x1c] sm:$0xf] %v1850
        %1884 = vst [vmem:[%s1875 + $0x20] sm:$0xf] %v1851
        %1885 = vst [vmem:[%s1875 + $0x24] sm:$0xf] %v1852
        %1886 = vst [vmem:[%s1875 + $0x28] sm:$0xf] %v1853
        %1887 = vst [vmem:[%s1875 + $0x2c] sm:$0xf] %v1854
        %1888 = vst [vmem:[%s1875 + $0x30] sm:$0xf] %v1855
        %1889 = vst [vmem:[%s1875 + $0x34] sm:$0xf] %v1856
        %1890 = vst [vmem:[%s1875 + $0x38] sm:$0xf] %v1857
        %1891 = vst [vmem:[%s1875 + $0x3c] sm:$0xf] %v1858
        %1900 = vrot.lane.b32.xlu0 %v999, 96
        %v1901 = vpop.permute.xlu0 %1900
        %1902 = vrot.lane.b32.xlu0 %v1000, 96
        %v1903 = vpop.permute.xlu0 %1902
        %1904 = vrot.lane.b32.xlu0 %v1001, 96
        %v1905 = vpop.permute.xlu0 %1904
        %1906 = vrot.lane.b32.xlu0 %v1002, 96
        %v1907 = vpop.permute.xlu0 %1906
        %1908 = vrot.lane.b32.xlu0 %v1003, 96
        %v1909 = vpop.permute.xlu0 %1908
        %1910 = vrot.lane.b32.xlu0 %v1004, 96
        %v1911 = vpop.permute.xlu0 %1910
        %1912 = vrot.lane.b32.xlu0 %v1005, 96
        %v1913 = vpop.permute.xlu0 %1912
        %1914 = vrot.lane.b32.xlu0 %v1006, 96
        %v1915 = vpop.permute.xlu0 %1914
        %1924 = vmatprep.subr.bf16.mxu0 0
        %1925 = vmatpush1.bf16.msra.mxu0 %v1901
        %1926 = vmatprep.subr.bf16.mxu0 0
        %1927 = vmatpush1.bf16.msra.mxu0 %v1903
        %1928 = vmatprep.subr.bf16.mxu0 0
        %1929 = vmatpush1.bf16.msra.mxu0 %v1905
        %1930 = vmatprep.subr.bf16.mxu0 0
        %1931 = vmatpush1.bf16.msra.mxu0 %v1907
        %1932 = vmatprep.subr.bf16.mxu0 0
        %1933 = vmatpush1.bf16.msra.mxu0 %v1909
        %1934 = vmatprep.subr.bf16.mxu0 0
        %1935 = vmatpush1.bf16.msra.mxu0 %v1911
        %1936 = vmatprep.subr.bf16.mxu0 0
        %1937 = vmatpush1.bf16.msra.mxu0 %v1913
        %1938 = vmatprep.subr.bf16.mxu0 0
        %1939 = vmatpush1.bf16.msra.mxu0 %v1915
        %1940 = vmatprep.subr.bf16.mxu0 0
        %1941 = vmatpush1.bf16.msra.mxu0 0
        %1942 = vmatprep.subr.bf16.mxu0 0
        %1943 = vmatpush1.bf16.msra.mxu0 0
        %1944 = vmatprep.subr.bf16.mxu0 0
        %1945 = vmatpush1.bf16.msra.mxu0 0
        %1946 = vmatprep.subr.bf16.mxu0 0
        %1947 = vmatpush1.bf16.msra.mxu0 0
        %1948 = vmatprep.subr.bf16.mxu0 0
        %1949 = vmatpush1.bf16.msra.mxu0 0
        %1950 = vmatprep.subr.bf16.mxu0 0
        %1951 = vmatpush1.bf16.msra.mxu0 0
        %1952 = vmatprep.subr.bf16.mxu0 0
        %1953 = vmatpush1.bf16.msra.mxu0 0
        %1954 = vmatprep.subr.bf16.mxu0 0
        %1955 = vmatpush1.bf16.msra.mxu0 0
        %1956 = vmatprep.mubr.bf16.mxu0 0
        %1957 = vmatmul.mubr.bf16.gmra.mrb[0].mxu0 %v1811
        %v1958 = vpop.f32.mrb[0].mxu0
        %v1959 = vadd.f32 0.0, %v1958
        %v1960 = vpop.f32.mrb[0].mxu0
        %v1961 = vpop.f32.mrb[0].mxu0
        %v1962 = vadd.f32 0.0, %v1961
        %v1963 = vpop.f32.mrb[0].mxu0
        %1964 = vmatprep.mubr.bf16.mxu0 0
        %1965 = vmatmul.mubr.bf16.gmra.mrb[0].mxu0 %v1812
        %v1966 = vpop.f32.mrb[0].mxu0
        %v1967 = vadd.f32 0.0, %v1966
        %v1968 = vpop.f32.mrb[0].mxu0
        %v1969 = vpop.f32.mrb[0].mxu0
        %v1970 = vadd.f32 0.0, %v1969
        %v1971 = vpop.f32.mrb[0].mxu0
        %1972 = vmatprep.mubr.bf16.mxu0 0
        %1973 = vmatmul.mubr.bf16.gmra.mrb[0].mxu0 %v1813
        %v1974 = vpop.f32.mrb[0].mxu0
        %v1975 = vadd.f32 0.0, %v1974
        %v1976 = vpop.f32.mrb[0].mxu0
        %v1977 = vpop.f32.mrb[0].mxu0
        %v1978 = vadd.f32 0.0, %v1977
        %v1979 = vpop.f32.mrb[0].mxu0
        %1980 = vmatprep.mubr.bf16.mxu0 0
        %1981 = vmatmul.mubr.bf16.gmra.mrb[0].mxu0 %v1814
        %v1982 = vpop.f32.mrb[0].mxu0
        %v1983 = vadd.f32 0.0, %v1982
        %v1984 = vpop.f32.mrb[0].mxu0
        %v1985 = vpop.f32.mrb[0].mxu0
        %v1986 = vadd.f32 0.0, %v1985
        %v1987 = vpop.f32.mrb[0].mxu0
        %1988 = vmatprep.mubr.bf16.mxu0 0
        %1989 = vmatmul.mubr.bf16.gmra.mrb[0].mxu0 %v1815
        %v1990 = vpop.f32.mrb[0].mxu0
        %v1991 = vadd.f32 0.0, %v1990
        %v1992 = vpop.f32.mrb[0].mxu0
        %v1993 = vpop.f32.mrb[0].mxu0
        %v1994 = vadd.f32 0.0, %v1993
        %v1995 = vpop.f32.mrb[0].mxu0
        %1996 = vmatprep.mubr.bf16.mxu0 0
        %1997 = vmatmul.mubr.bf16.gmra.mrb[0].mxu0 %v1816
        %v1998 = vpop.f32.mrb[0].mxu0
        %v1999 = vadd.f32 0.0, %v1998
        %v2000 = vpop.f32.mrb[0].mxu0
        %v2001 = vpop.f32.mrb[0].mxu0
        %v2002 = vadd.f32 0.0, %v2001
        %v2003 = vpop.f32.mrb[0].mxu0
        %2004 = vmatprep.mubr.bf16.mxu0 0
        %2005 = vmatmul.mubr.bf16.gmra.mrb[0].mxu0 %v1817
        %v2006 = vpop.f32.mrb[0].mxu0
        %v2007 = vadd.f32 0.0, %v2006
        %v2008 = vpop.f32.mrb[0].mxu0
        %v2009 = vpop.f32.mrb[0].mxu0
        %v2010 = vadd.f32 0.0, %v2009
        %v2011 = vpop.f32.mrb[0].mxu0
        %2012 = vmatprep.mubr.bf16.mxu0 0
        %2013 = vmatmul.mubr.bf16.gmra.mrb[0].mxu0 %v1818
        %v2014 = vpop.f32.mrb[0].mxu0
        %v2015 = vadd.f32 0.0, %v2014
        %v2016 = vpop.f32.mrb[0].mxu0
        %v2017 = vpop.f32.mrb[0].mxu0
        %v2018 = vadd.f32 0.0, %v2017
        %v2019 = vpop.f32.mrb[0].mxu0
        %2020 = vdwg.mxu0
        %2021 = vrot.lane.b32.xlu0 %v983, 64
        %v2022 = vpop.permute.xlu0 %2021
        %2023 = vrot.lane.b32.xlu0 %v984, 64
        %v2024 = vpop.permute.xlu0 %2023
        %2025 = vrot.lane.b32.xlu0 %v985, 64
        %v2026 = vpop.permute.xlu0 %2025
        %2027 = vrot.lane.b32.xlu0 %v986, 64
        %v2028 = vpop.permute.xlu0 %2027
        %2029 = vrot.lane.b32.xlu0 %v987, 64
        %v2030 = vpop.permute.xlu0 %2029
        %2031 = vrot.lane.b32.xlu0 %v988, 64
        %v2032 = vpop.permute.xlu0 %2031
        %2033 = vrot.lane.b32.xlu0 %v989, 64
        %v2034 = vpop.permute.xlu0 %2033
        %2035 = vrot.lane.b32.xlu0 %v990, 64
        %v2036 = vpop.permute.xlu0 %2035
        %2037 = vrot.lane.b32.xlu0 %v991, 64
        %v2038 = vpop.permute.xlu0 %2037
        %2039 = vrot.lane.b32.xlu0 %v992, 64
        %v2040 = vpop.permute.xlu0 %2039
        %2041 = vrot.lane.b32.xlu0 %v993, 64
        %v2042 = vpop.permute.xlu0 %2041
        %2043 = vrot.lane.b32.xlu0 %v994, 64
        %v2044 = vpop.permute.xlu0 %2043
        %2045 = vrot.lane.b32.xlu0 %v995, 64
        %v2046 = vpop.permute.xlu0 %2045
        %2047 = vrot.lane.b32.xlu0 %v996, 64
        %v2048 = vpop.permute.xlu0 %2047
        %2049 = vrot.lane.b32.xlu0 %v997, 64
        %v2050 = vpop.permute.xlu0 %2049
        %2051 = vrot.lane.b32.xlu0 %v998, 64
        %v2052 = vpop.permute.xlu0 %2051
        %v2054 = vsel %vm1007, %v2022, 0
        %v2057 = vsel %vm1007, %v2024, 0
        %v2060 = vsel %vm1007, %v2026, 0
        %v2063 = vsel %vm1007, %v2028, 0
        %v2066 = vsel %vm1007, %v2030, 0
        %v2069 = vsel %vm1007, %v2032, 0
        %v2072 = vsel %vm1007, %v2034, 0
        %v2075 = vsel %vm1007, %v2036, 0
        %v2078 = vsel %vm1007, %v2038, 0
        %v2081 = vsel %vm1007, %v2040, 0
        %v2084 = vsel %vm1007, %v2042, 0
        %v2087 = vsel %vm1007, %v2044, 0
        %v2090 = vsel %vm1007, %v2046, 0
        %v2093 = vsel %vm1007, %v2048, 0
        %v2096 = vsel %vm1007, %v2050, 0
        %v2099 = vsel %vm1007, %v2052, 0
        %2101 = vmatprep.subr.bf16.mxu0 0
        %2102 = vmatpush1.bf16.xpose.msra.mxu0 %v2078
        %2103 = vmatprep.subr.bf16.mxu0 0
        %2104 = vmatpush1.bf16.xpose.msra.mxu0 %v2081
        %2105 = vmatprep.subr.bf16.mxu0 0
        %2106 = vmatpush1.bf16.xpose.msra.mxu0 %v2084
        %2107 = vmatprep.subr.bf16.mxu0 0
        %2108 = vmatpush1.bf16.xpose.msra.mxu0 %v2087
        %2109 = vmatprep.subr.bf16.mxu0 0
        %2110 = vmatpush1.bf16.xpose.msra.mxu0 %v2090
        %2111 = vmatprep.subr.bf16.mxu0 0
        %2112 = vmatpush1.bf16.xpose.msra.mxu0 %v2093
        %2113 = vmatprep.subr.bf16.mxu0 0
        %2114 = vmatpush1.bf16.xpose.msra.mxu0 %v2096
        %2115 = vmatprep.subr.bf16.mxu0 0
        %2116 = vmatpush1.bf16.xpose.msra.mxu0 %v2099
        %2117 = vmatprep.subr.bf16.mxu0 0
        %2118 = vmatpush1.bf16.xpose.msra.mxu0 0
        %2119 = vmatprep.subr.bf16.mxu0 0
        %2120 = vmatpush1.bf16.xpose.msra.mxu0 0
        %2121 = vmatprep.subr.bf16.mxu0 0
        %2122 = vmatpush1.bf16.xpose.msra.mxu0 0
        %2123 = vmatprep.subr.bf16.mxu0 0
        %2124 = vmatpush1.bf16.xpose.msra.mxu0 0
        %2125 = vmatprep.subr.bf16.mxu0 0
        %2126 = vmatpush1.bf16.xpose.msra.mxu0 0
        %2127 = vmatprep.subr.bf16.mxu0 0
        %2128 = vmatpush1.bf16.xpose.msra.mxu0 0
        %2129 = vmatprep.subr.bf16.mxu0 0
        %2130 = vmatpush1.bf16.xpose.msra.mxu0 0
        %2131 = vmatprep.subr.bf16.mxu0 0
        %2132 = vmatpush1.bf16.xpose.msra.mxu0 0
        %2133 = vmatprep.mubr.bf16.mxu0 0
        %2134 = vmatmul.mubr.bf16.gmra.mrb[0].mxu0 %v2054
        %v2135 = vpop.f32.mrb[0].mxu0
        %v2136 = vadd.f32 0.0, %v2135
        %v2137 = vpop.f32.mrb[0].mxu0
        %v2138 = vpop.f32.mrb[0].mxu0
        %v2139 = vadd.f32 0.0, %v2138
        %v2140 = vpop.f32.mrb[0].mxu0
        %2141 = vmatprep.mubr.bf16.mxu0 0
        %2142 = vmatmul.mubr.bf16.gmra.mrb[0].mxu0 %v2057
        %v2143 = vpop.f32.mrb[0].mxu0
        %v2144 = vadd.f32 0.0, %v2143
        %v2145 = vpop.f32.mrb[0].mxu0
        %v2146 = vpop.f32.mrb[0].mxu0
        %v2147 = vadd.f32 0.0, %v2146
        %v2148 = vpop.f32.mrb[0].mxu0
        %2149 = vmatprep.mubr.bf16.mxu0 0
        %2150 = vmatmul.mubr.bf16.gmra.mrb[0].mxu0 %v2060
        %v2151 = vpop.f32.mrb[0].mxu0
        %v2152 = vadd.f32 0.0, %v2151
        %v2153 = vpop.f32.mrb[0].mxu0
        %v2154 = vpop.f32.mrb[0].mxu0
        %v2155 = vadd.f32 0.0, %v2154
        %v2156 = vpop.f32.mrb[0].mxu0
        %2157 = vmatprep.mubr.bf16.mxu0 0
        %2158 = vmatmul.mubr.bf16.gmra.mrb[0].mxu0 %v2063
        %v2159 = vpop.f32.mrb[0].mxu0
        %v2160 = vadd.f32 0.0, %v2159
        %v2161 = vpop.f32.mrb[0].mxu0
        %v2162 = vpop.f32.mrb[0].mxu0
        %v2163 = vadd.f32 0.0, %v2162
        %v2164 = vpop.f32.mrb[0].mxu0
        %2165 = vmatprep.mubr.bf16.mxu0 0
        %2166 = vmatmul.mubr.bf16.gmra.mrb[0].mxu0 %v2066
        %v2167 = vpop.f32.mrb[0].mxu0
        %v2168 = vadd.f32 0.0, %v2167
        %v2169 = vpop.f32.mrb[0].mxu0
        %v2170 = vpop.f32.mrb[0].mxu0
        %v2171 = vadd.f32 0.0, %v2170
        %v2172 = vpop.f32.mrb[0].mxu0
        %2173 = vmatprep.mubr.bf16.mxu0 0
        %2174 = vmatmul.mubr.bf16.gmra.mrb[0].mxu0 %v2069
        %v2175 = vpop.f32.mrb[0].mxu0
        %v2176 = vadd.f32 0.0, %v2175
        %v2177 = vpop.f32.mrb[0].mxu0
        %v2178 = vpop.f32.mrb[0].mxu0
        %v2179 = vadd.f32 0.0, %v2178
        %v2180 = vpop.f32.mrb[0].mxu0
        %2181 = vmatprep.mubr.bf16.mxu0 0
        %2182 = vmatmul.mubr.bf16.gmra.mrb[0].mxu0 %v2072
        %v2183 = vpop.f32.mrb[0].mxu0
        %v2184 = vadd.f32 0.0, %v2183
        %v2185 = vpop.f32.mrb[0].mxu0
        %v2186 = vpop.f32.mrb[0].mxu0
        %v2187 = vadd.f32 0.0, %v2186
        %v2188 = vpop.f32.mrb[0].mxu0
        %2189 = vmatprep.mubr.bf16.mxu0 0
        %2190 = vmatmul.mubr.bf16.gmra.mrb[0].mxu0 %v2075
        %v2191 = vpop.f32.mrb[0].mxu0
        %v2192 = vadd.f32 0.0, %v2191
        %v2193 = vpop.f32.mrb[0].mxu0
        %v2194 = vpop.f32.mrb[0].mxu0
        %v2195 = vadd.f32 0.0, %v2194
        %v2196 = vpop.f32.mrb[0].mxu0
        %2197 = vdwg.mxu0
        %2198 = vmax.xlane.f32.xlu0 %v2136
        %v2199 = vpop.xlane.xlu0 %2198
        %2200 = vmax.xlane.f32.xlu0 %v2139
        %v2201 = vpop.xlane.xlu0 %2200
        %2202 = vmax.xlane.f32.xlu0 %v2144
        %v2203 = vpop.xlane.xlu0 %2202
        %2204 = vmax.xlane.f32.xlu0 %v2147
        %v2205 = vpop.xlane.xlu0 %2204
        %2206 = vmax.xlane.f32.xlu0 %v2152
        %v2207 = vpop.xlane.xlu0 %2206
        %2208 = vmax.xlane.f32.xlu0 %v2155
        %v2209 = vpop.xlane.xlu0 %2208
        %2210 = vmax.xlane.f32.xlu0 %v2160
        %v2211 = vpop.xlane.xlu0 %2210
        %2212 = vmax.xlane.f32.xlu0 %v2163
        %v2213 = vpop.xlane.xlu0 %2212
        %2214 = vmax.xlane.f32.xlu0 %v2168
        %v2215 = vpop.xlane.xlu0 %2214
        %2216 = vmax.xlane.f32.xlu0 %v2171
        %v2217 = vpop.xlane.xlu0 %2216
        %2218 = vmax.xlane.f32.xlu0 %v2176
        %v2219 = vpop.xlane.xlu0 %2218
        %2220 = vmax.xlane.f32.xlu0 %v2179
        %v2221 = vpop.xlane.xlu0 %2220
        %2222 = vmax.xlane.f32.xlu0 %v2184
        %v2223 = vpop.xlane.xlu0 %2222
        %2224 = vmax.xlane.f32.xlu0 %v2187
        %v2225 = vpop.xlane.xlu0 %2224
        %2226 = vmax.xlane.f32.xlu0 %v2192
        %v2227 = vpop.xlane.xlu0 %2226
        %2228 = vmax.xlane.f32.xlu0 %v2195
        %v2229 = vpop.xlane.xlu0 %2228
        %v2230 = vsub.f32 %v2136, %v2199
        %v2231 = vsub.f32 %v2139, %v2201
        %v2232 = vsub.f32 %v2144, %v2203
        %v2233 = vsub.f32 %v2147, %v2205
        %v2234 = vsub.f32 %v2152, %v2207
        %v2235 = vsub.f32 %v2155, %v2209
        %v2236 = vsub.f32 %v2160, %v2211
        %v2237 = vsub.f32 %v2163, %v2213
        %v2238 = vsub.f32 %v2168, %v2215
        %v2239 = vsub.f32 %v2171, %v2217
        %v2240 = vsub.f32 %v2176, %v2219
        %v2241 = vsub.f32 %v2179, %v2221
        %v2242 = vsub.f32 %v2184, %v2223
        %v2243 = vsub.f32 %v2187, %v2225
        %v2244 = vsub.f32 %v2192, %v2227
        %v2245 = vsub.f32 %v2195, %v2229
        %v2246 = vmul.f32 %v2230, 1.442695
        %v2247 = vpow.pop %v2246
        %v2248 = vmul.f32 %v2231, 1.442695
        %v2249 = vpow.pop %v2248
        %v2250 = vmul.f32 %v2232, 1.442695
        %v2251 = vpow.pop %v2250
        %v2252 = vmul.f32 %v2233, 1.442695
        %v2253 = vpow.pop %v2252
        %v2254 = vmul.f32 %v2234, 1.442695
        %v2255 = vpow.pop %v2254
        %v2256 = vmul.f32 %v2235, 1.442695
        %v2257 = vpow.pop %v2256
        %v2258 = vmul.f32 %v2236, 1.442695
        %v2259 = vpow.pop %v2258
        %v2260 = vmul.f32 %v2237, 1.442695
        %v2261 = vpow.pop %v2260
        %v2262 = vmul.f32 %v2238, 1.442695
        %v2263 = vpow.pop %v2262
        %v2264 = vmul.f32 %v2239, 1.442695
        %v2265 = vpow.pop %v2264
        %v2266 = vmul.f32 %v2240, 1.442695
        %v2267 = vpow.pop %v2266
        %v2268 = vmul.f32 %v2241, 1.442695
        %v2269 = vpow.pop %v2268
        %v2270 = vmul.f32 %v2242, 1.442695
        %v2271 = vpow.pop %v2270
        %v2272 = vmul.f32 %v2243, 1.442695
        %v2273 = vpow.pop %v2272
        %v2274 = vmul.f32 %v2244, 1.442695
        %v2275 = vpow.pop %v2274
        %v2276 = vmul.f32 %v2245, 1.442695
        %v2277 = vpow.pop %v2276
        %2278 = vadd.xlane.f32.xlu0 %v2247
        %v2279 = vpop.xlane.xlu0 %2278
        %2280 = vadd.xlane.f32.xlu0 %v2249
        %v2281 = vpop.xlane.xlu0 %2280
        %2282 = vadd.xlane.f32.xlu0 %v2251
        %v2283 = vpop.xlane.xlu0 %2282
        %2284 = vadd.xlane.f32.xlu0 %v2253
        %v2285 = vpop.xlane.xlu0 %2284
        %2286 = vadd.xlane.f32.xlu0 %v2255
        %v2287 = vpop.xlane.xlu0 %2286
        %2288 = vadd.xlane.f32.xlu0 %v2257
        %v2289 = vpop.xlane.xlu0 %2288
        %2290 = vadd.xlane.f32.xlu0 %v2259
        %v2291 = vpop.xlane.xlu0 %2290
        %2292 = vadd.xlane.f32.xlu0 %v2261
        %v2293 = vpop.xlane.xlu0 %2292
        %2294 = vadd.xlane.f32.xlu0 %v2263
        %v2295 = vpop.xlane.xlu0 %2294
        %2296 = vadd.xlane.f32.xlu0 %v2265
        %v2297 = vpop.xlane.xlu0 %2296
        %2298 = vadd.xlane.f32.xlu0 %v2267
        %v2299 = vpop.xlane.xlu0 %2298
        %2300 = vadd.xlane.f32.xlu0 %v2269
        %v2301 = vpop.xlane.xlu0 %2300
        %2302 = vadd.xlane.f32.xlu0 %v2271
        %v2303 = vpop.xlane.xlu0 %2302
        %2304 = vadd.xlane.f32.xlu0 %v2273
        %v2305 = vpop.xlane.xlu0 %2304
        %2306 = vadd.xlane.f32.xlu0 %v2275
        %v2307 = vpop.xlane.xlu0 %2306
        %2308 = vadd.xlane.f32.xlu0 %v2277
        %v2309 = vpop.xlane.xlu0 %2308
        %v2310 = vrcp.pop %v2279
        %v2311 = vmul.f32 %v2247, %v2310
        %v2312 = vrcp.pop %v2281
        %v2313 = vmul.f32 %v2249, %v2312
        %v2314 = vrcp.pop %v2283
        %v2315 = vmul.f32 %v2251, %v2314
        %v2316 = vrcp.pop %v2285
        %v2317 = vmul.f32 %v2253, %v2316
        %v2318 = vrcp.pop %v2287
        %v2319 = vmul.f32 %v2255, %v2318
        %v2320 = vrcp.pop %v2289
        %v2321 = vmul.f32 %v2257, %v2320
        %v2322 = vrcp.pop %v2291
        %v2323 = vmul.f32 %v2259, %v2322
        %v2324 = vrcp.pop %v2293
        %v2325 = vmul.f32 %v2261, %v2324
        %v2326 = vrcp.pop %v2295
        %v2327 = vmul.f32 %v2263, %v2326
        %v2328 = vrcp.pop %v2297
        %v2329 = vmul.f32 %v2265, %v2328
        %v2330 = vrcp.pop %v2299
        %v2331 = vmul.f32 %v2267, %v2330
        %v2332 = vrcp.pop %v2301
        %v2333 = vmul.f32 %v2269, %v2332
        %v2334 = vrcp.pop %v2303
        %v2335 = vmul.f32 %v2271, %v2334
        %v2336 = vrcp.pop %v2305
        %v2337 = vmul.f32 %v2273, %v2336
        %v2338 = vrcp.pop %v2307
        %v2339 = vmul.f32 %v2275, %v2338
        %v2340 = vrcp.pop %v2309
        %v2341 = vmul.f32 %v2277, %v2340
        %v2342 = vpack.c.bf16 %v2313, %v2311
        %v2343 = vpack.c.bf16 %v2317, %v2315
        %v2344 = vpack.c.bf16 %v2321, %v2319
        %v2345 = vpack.c.bf16 %v2325, %v2323
        %v2346 = vpack.c.bf16 %v2329, %v2327
        %v2347 = vpack.c.bf16 %v2333, %v2331
        %v2348 = vpack.c.bf16 %v2337, %v2335
        %v2349 = vpack.c.bf16 %v2341, %v2339
        %v2358 = vunpack.c.l.b16 %v2342
        %v2359 = vunpack.c.h.b16 %v2342
        %v2360 = vunpack.c.l.b16 %v2343
        %v2361 = vunpack.c.h.b16 %v2343
        %v2362 = vunpack.c.l.b16 %v2344
        %v2363 = vunpack.c.h.b16 %v2344
        %v2364 = vunpack.c.l.b16 %v2345
        %v2365 = vunpack.c.h.b16 %v2345
        %v2366 = vunpack.c.l.b16 %v2346
        %v2367 = vunpack.c.h.b16 %v2346
        %v2368 = vunpack.c.l.b16 %v2347
        %v2369 = vunpack.c.h.b16 %v2347
        %v2370 = vunpack.c.l.b16 %v2348
        %v2371 = vunpack.c.h.b16 %v2348
        %v2372 = vunpack.c.l.b16 %v2349
        %v2373 = vunpack.c.h.b16 %v2349
        %v2374 = vpack.c.b16 %v2358, %v2358
        %v2375 = vpack.c.b16 %v2359, %v2359
        %v2376 = vpack.c.b16 %v2360, %v2360
        %v2377 = vpack.c.b16 %v2361, %v2361
        %v2378 = vpack.c.b16 %v2362, %v2362
        %v2379 = vpack.c.b16 %v2363, %v2363
        %v2380 = vpack.c.b16 %v2364, %v2364
        %v2381 = vpack.c.b16 %v2365, %v2365
        %v2382 = vpack.c.b16 %v2366, %v2366
        %v2383 = vpack.c.b16 %v2367, %v2367
        %v2384 = vpack.c.b16 %v2368, %v2368
        %v2385 = vpack.c.b16 %v2369, %v2369
        %v2386 = vpack.c.b16 %v2370, %v2370
        %v2387 = vpack.c.b16 %v2371, %v2371
        %v2388 = vpack.c.b16 %v2372, %v2372
        %v2389 = vpack.c.b16 %v2373, %v2373
        %s2406 = scalar_lea.vmem %s554, 128 [#allocation12]
        %2407 = vst [vmem:[%s2406] sm:$0xf] %v2374
        %2408 = vst [vmem:[%s2406 + $0x4] sm:$0xf] %v2375
        %2409 = vst [vmem:[%s2406 + $0x8] sm:$0xf] %v2376
        %2410 = vst [vmem:[%s2406 + $0xc] sm:$0xf] %v2377
        %2411 = vst [vmem:[%s2406 + $0x10] sm:$0xf] %v2378
        %2412 = vst [vmem:[%s2406 + $0x14] sm:$0xf] %v2379
        %2413 = vst [vmem:[%s2406 + $0x18] sm:$0xf] %v2380
        %2414 = vst [vmem:[%s2406 + $0x1c] sm:$0xf] %v2381
        %2415 = vst [vmem:[%s2406 + $0x20] sm:$0xf] %v2382
        %2416 = vst [vmem:[%s2406 + $0x24] sm:$0xf] %v2383
        %2417 = vst [vmem:[%s2406 + $0x28] sm:$0xf] %v2384
        %2418 = vst [vmem:[%s2406 + $0x2c] sm:$0xf] %v2385
        %2419 = vst [vmem:[%s2406 + $0x30] sm:$0xf] %v2386
        %2420 = vst [vmem:[%s2406 + $0x34] sm:$0xf] %v2387
        %2421 = vst [vmem:[%s2406 + $0x38] sm:$0xf] %v2388
        %2422 = vst [vmem:[%s2406 + $0x3c] sm:$0xf] %v2389
        %2423 = vrot.lane.b32.xlu0 %v999, 64
        %v2424 = vpop.permute.xlu0 %2423
        %2425 = vrot.lane.b32.xlu0 %v1000, 64
        %v2426 = vpop.permute.xlu0 %2425
        %2427 = vrot.lane.b32.xlu0 %v1001, 64
        %v2428 = vpop.permute.xlu0 %2427
        %2429 = vrot.lane.b32.xlu0 %v1002, 64
        %v2430 = vpop.permute.xlu0 %2429
        %2431 = vrot.lane.b32.xlu0 %v1003, 64
        %v2432 = vpop.permute.xlu0 %2431
        %2433 = vrot.lane.b32.xlu0 %v1004, 64
        %v2434 = vpop.permute.xlu0 %2433
        %2435 = vrot.lane.b32.xlu0 %v1005, 64
        %v2436 = vpop.permute.xlu0 %2435
        %2437 = vrot.lane.b32.xlu0 %v1006, 64
        %v2438 = vpop.permute.xlu0 %2437
        %2447 = vmatprep.subr.bf16.mxu0 0
        %2448 = vmatpush1.bf16.msra.mxu0 %v2424
        %2449 = vmatprep.subr.bf16.mxu0 0
        %2450 = vmatpush1.bf16.msra.mxu0 %v2426
        %2451 = vmatprep.subr.bf16.mxu0 0
        %2452 = vmatpush1.bf16.msra.mxu0 %v2428
        %2453 = vmatprep.subr.bf16.mxu0 0
        %2454 = vmatpush1.bf16.msra.mxu0 %v2430
        %2455 = vmatprep.subr.bf16.mxu0 0
        %2456 = vmatpush1.bf16.msra.mxu0 %v2432
        %2457 = vmatprep.subr.bf16.mxu0 0
        %2458 = vmatpush1.bf16.msra.mxu0 %v2434
        %2459 = vmatprep.subr.bf16.mxu0 0
        %2460 = vmatpush1.bf16.msra.mxu0 %v2436
        %2461 = vmatprep.subr.bf16.mxu0 0
        %2462 = vmatpush1.bf16.msra.mxu0 %v2438
        %2463 = vmatprep.subr.bf16.mxu0 0
        %2464 = vmatpush1.bf16.msra.mxu0 0
        %2465 = vmatprep.subr.bf16.mxu0 0
        %2466 = vmatpush1.bf16.msra.mxu0 0
        %2467 = vmatprep.subr.bf16.mxu0 0
        %2468 = vmatpush1.bf16.msra.mxu0 0
        %2469 = vmatprep.subr.bf16.mxu0 0
        %2470 = vmatpush1.bf16.msra.mxu0 0
        %2471 = vmatprep.subr.bf16.mxu0 0
        %2472 = vmatpush1.bf16.msra.mxu0 0
        %2473 = vmatprep.subr.bf16.mxu0 0
        %2474 = vmatpush1.bf16.msra.mxu0 0
        %2475 = vmatprep.subr.bf16.mxu0 0
        %2476 = vmatpush1.bf16.msra.mxu0 0
        %2477 = vmatprep.subr.bf16.mxu0 0
        %2478 = vmatpush1.bf16.msra.mxu0 0
        %2479 = vmatprep.mubr.bf16.mxu0 0
        %2480 = vmatmul.mubr.bf16.gmra.mrb[0].mxu0 %v2342
        %v2481 = vpop.f32.mrb[0].mxu0
        %v2482 = vadd.f32 0.0, %v2481
        %v2483 = vpop.f32.mrb[0].mxu0
        %v2484 = vpop.f32.mrb[0].mxu0
        %v2485 = vadd.f32 0.0, %v2484
        %v2486 = vpop.f32.mrb[0].mxu0
        %2487 = vmatprep.mubr.bf16.mxu0 0
        %2488 = vmatmul.mubr.bf16.gmra.mrb[0].mxu0 %v2343
        %v2489 = vpop.f32.mrb[0].mxu0
        %v2490 = vadd.f32 0.0, %v2489
        %v2491 = vpop.f32.mrb[0].mxu0
        %v2492 = vpop.f32.mrb[0].mxu0
        %v2493 = vadd.f32 0.0, %v2492
        %v2494 = vpop.f32.mrb[0].mxu0
        %2495 = vmatprep.mubr.bf16.mxu0 0
        %2496 = vmatmul.mubr.bf16.gmra.mrb[0].mxu0 %v2344
        %v2497 = vpop.f32.mrb[0].mxu0
        %v2498 = vadd.f32 0.0, %v2497
        %v2499 = vpop.f32.mrb[0].mxu0
        %v2500 = vpop.f32.mrb[0].mxu0
        %v2501 = vadd.f32 0.0, %v2500
        %v2502 = vpop.f32.mrb[0].mxu0
        %2503 = vmatprep.mubr.bf16.mxu0 0
        %2504 = vmatmul.mubr.bf16.gmra.mrb[0].mxu0 %v2345
        %v2505 = vpop.f32.mrb[0].mxu0
        %v2506 = vadd.f32 0.0, %v2505
        %v2507 = vpop.f32.mrb[0].mxu0
        %v2508 = vpop.f32.mrb[0].mxu0
        %v2509 = vadd.f32 0.0, %v2508
        %v2510 = vpop.f32.mrb[0].mxu0
        %2511 = vmatprep.mubr.bf16.mxu0 0
        %2512 = vmatmul.mubr.bf16.gmra.mrb[0].mxu0 %v2346
        %v2513 = vpop.f32.mrb[0].mxu0
        %v2514 = vadd.f32 0.0, %v2513
        %v2515 = vpop.f32.mrb[0].mxu0
        %v2516 = vpop.f32.mrb[0].mxu0
        %v2517 = vadd.f32 0.0, %v2516
        %v2518 = vpop.f32.mrb[0].mxu0
        %2519 = vmatprep.mubr.bf16.mxu0 0
        %2520 = vmatmul.mubr.bf16.gmra.mrb[0].mxu0 %v2347
        %v2521 = vpop.f32.mrb[0].mxu0
        %v2522 = vadd.f32 0.0, %v2521
        %v2523 = vpop.f32.mrb[0].mxu0
        %v2524 = vpop.f32.mrb[0].mxu0
        %v2525 = vadd.f32 0.0, %v2524
        %v2526 = vpop.f32.mrb[0].mxu0
        %2527 = vmatprep.mubr.bf16.mxu0 0
        %2528 = vmatmul.mubr.bf16.gmra.mrb[0].mxu0 %v2348
        %v2529 = vpop.f32.mrb[0].mxu0
        %v2530 = vadd.f32 0.0, %v2529
        %v2531 = vpop.f32.mrb[0].mxu0
        %v2532 = vpop.f32.mrb[0].mxu0
        %v2533 = vadd.f32 0.0, %v2532
        %v2534 = vpop.f32.mrb[0].mxu0
        %2535 = vmatprep.mubr.bf16.mxu0 0
        %2536 = vmatmul.mubr.bf16.gmra.mrb[0].mxu0 %v2349
        %v2537 = vpop.f32.mrb[0].mxu0
        %v2538 = vadd.f32 0.0, %v2537
        %v2539 = vpop.f32.mrb[0].mxu0
        %v2540 = vpop.f32.mrb[0].mxu0
        %v2541 = vadd.f32 0.0, %v2540
        %v2542 = vpop.f32.mrb[0].mxu0
        %2543 = vdwg.mxu0
        %2544 = vrot.lane.b32.xlu0 %v983, 32
        %v2545 = vpop.permute.xlu0 %2544
        %2546 = vrot.lane.b32.xlu0 %v984, 32
        %v2547 = vpop.permute.xlu0 %2546
        %2548 = vrot.lane.b32.xlu0 %v985, 32
        %v2549 = vpop.permute.xlu0 %2548
        %2550 = vrot.lane.b32.xlu0 %v986, 32
        %v2551 = vpop.permute.xlu0 %2550
        %2552 = vrot.lane.b32.xlu0 %v987, 32
        %v2553 = vpop.permute.xlu0 %2552
        %2554 = vrot.lane.b32.xlu0 %v988, 32
        %v2555 = vpop.permute.xlu0 %2554
        %2556 = vrot.lane.b32.xlu0 %v989, 32
        %v2557 = vpop.permute.xlu0 %2556
        %2558 = vrot.lane.b32.xlu0 %v990, 32
        %v2559 = vpop.permute.xlu0 %2558
        %2560 = vrot.lane.b32.xlu0 %v991, 32
        %v2561 = vpop.permute.xlu0 %2560
        %2562 = vrot.lane.b32.xlu0 %v992, 32
        %v2563 = vpop.permute.xlu0 %2562
        %2564 = vrot.lane.b32.xlu0 %v993, 32
        %v2565 = vpop.permute.xlu0 %2564
        %2566 = vrot.lane.b32.xlu0 %v994, 32
        %v2567 = vpop.permute.xlu0 %2566
        %2568 = vrot.lane.b32.xlu0 %v995, 32
        %v2569 = vpop.permute.xlu0 %2568
        %2570 = vrot.lane.b32.xlu0 %v996, 32
        %v2571 = vpop.permute.xlu0 %2570
        %2572 = vrot.lane.b32.xlu0 %v997, 32
        %v2573 = vpop.permute.xlu0 %2572
        %2574 = vrot.lane.b32.xlu0 %v998, 32
        %v2575 = vpop.permute.xlu0 %2574
        %v2577 = vsel %vm1007, %v2545, 0
        %v2580 = vsel %vm1007, %v2547, 0
        %v2583 = vsel %vm1007, %v2549, 0
        %v2586 = vsel %vm1007, %v2551, 0
        %v2589 = vsel %vm1007, %v2553, 0
        %v2592 = vsel %vm1007, %v2555, 0
        %v2595 = vsel %vm1007, %v2557, 0
        %v2598 = vsel %vm1007, %v2559, 0
        %v2601 = vsel %vm1007, %v2561, 0
        %v2604 = vsel %vm1007, %v2563, 0
        %v2607 = vsel %vm1007, %v2565, 0
        %v2610 = vsel %vm1007, %v2567, 0
        %v2613 = vsel %vm1007, %v2569, 0
        %v2616 = vsel %vm1007, %v2571, 0
        %v2619 = vsel %vm1007, %v2573, 0
        %v2622 = vsel %vm1007, %v2575, 0
        %2624 = vmatprep.subr.bf16.mxu0 0
        %2625 = vmatpush1.bf16.xpose.msra.mxu0 %v2601
        %2626 = vmatprep.subr.bf16.mxu0 0
        %2627 = vmatpush1.bf16.xpose.msra.mxu0 %v2604
        %2628 = vmatprep.subr.bf16.mxu0 0
        %2629 = vmatpush1.bf16.xpose.msra.mxu0 %v2607
        %2630 = vmatprep.subr.bf16.mxu0 0
        %2631 = vmatpush1.bf16.xpose.msra.mxu0 %v2610
        %2632 = vmatprep.subr.bf16.mxu0 0
        %2633 = vmatpush1.bf16.xpose.msra.mxu0 %v2613
        %2634 = vmatprep.subr.bf16.mxu0 0
        %2635 = vmatpush1.bf16.xpose.msra.mxu0 %v2616
        %2636 = vmatprep.subr.bf16.mxu0 0
        %2637 = vmatpush1.bf16.xpose.msra.mxu0 %v2619
        %2638 = vmatprep.subr.bf16.mxu0 0
        %2639 = vmatpush1.bf16.xpose.msra.mxu0 %v2622
        %2640 = vmatprep.subr.bf16.mxu0 0
        %2641 = vmatpush1.bf16.xpose.msra.mxu0 0
        %2642 = vmatprep.subr.bf16.mxu0 0
        %2643 = vmatpush1.bf16.xpose.msra.mxu0 0
        %2644 = vmatprep.subr.bf16.mxu0 0
        %2645 = vmatpush1.bf16.xpose.msra.mxu0 0
        %2646 = vmatprep.subr.bf16.mxu0 0
        %2647 = vmatpush1.bf16.xpose.msra.mxu0 0
        %2648 = vmatprep.subr.bf16.mxu0 0
        %2649 = vmatpush1.bf16.xpose.msra.mxu0 0
        %2650 = vmatprep.subr.bf16.mxu0 0
        %2651 = vmatpush1.bf16.xpose.msra.mxu0 0
        %2652 = vmatprep.subr.bf16.mxu0 0
        %2653 = vmatpush1.bf16.xpose.msra.mxu0 0
        %2654 = vmatprep.subr.bf16.mxu0 0
        %2655 = vmatpush1.bf16.xpose.msra.mxu0 0
        %2656 = vmatprep.mubr.bf16.mxu0 0
        %2657 = vmatmul.mubr.bf16.gmra.mrb[0].mxu0 %v2577
        %v2658 = vpop.f32.mrb[0].mxu0
        %v2659 = vadd.f32 0.0, %v2658
        %v2660 = vpop.f32.mrb[0].mxu0
        %v2661 = vpop.f32.mrb[0].mxu0
        %v2662 = vadd.f32 0.0, %v2661
        %v2663 = vpop.f32.mrb[0].mxu0
        %2664 = vmatprep.mubr.bf16.mxu0 0
        %2665 = vmatmul.mubr.bf16.gmra.mrb[0].mxu0 %v2580
        %v2666 = vpop.f32.mrb[0].mxu0
        %v2667 = vadd.f32 0.0, %v2666
        %v2668 = vpop.f32.mrb[0].mxu0
        %v2669 = vpop.f32.mrb[0].mxu0
        %v2670 = vadd.f32 0.0, %v2669
        %v2671 = vpop.f32.mrb[0].mxu0
        %2672 = vmatprep.mubr.bf16.mxu0 0
        %2673 = vmatmul.mubr.bf16.gmra.mrb[0].mxu0 %v2583
        %v2674 = vpop.f32.mrb[0].mxu0
        %v2675 = vadd.f32 0.0, %v2674
        %v2676 = vpop.f32.mrb[0].mxu0
        %v2677 = vpop.f32.mrb[0].mxu0
        %v2678 = vadd.f32 0.0, %v2677
        %v2679 = vpop.f32.mrb[0].mxu0
        %2680 = vmatprep.mubr.bf16.mxu0 0
        %2681 = vmatmul.mubr.bf16.gmra.mrb[0].mxu0 %v2586
        %v2682 = vpop.f32.mrb[0].mxu0
        %v2683 = vadd.f32 0.0, %v2682
        %v2684 = vpop.f32.mrb[0].mxu0
        %v2685 = vpop.f32.mrb[0].mxu0
        %v2686 = vadd.f32 0.0, %v2685
        %v2687 = vpop.f32.mrb[0].mxu0
        %2688 = vmatprep.mubr.bf16.mxu0 0
        %2689 = vmatmul.mubr.bf16.gmra.mrb[0].mxu0 %v2589
        %v2690 = vpop.f32.mrb[0].mxu0
        %v2691 = vadd.f32 0.0, %v2690
        %v2692 = vpop.f32.mrb[0].mxu0
        %v2693 = vpop.f32.mrb[0].mxu0
        %v2694 = vadd.f32 0.0, %v2693
        %v2695 = vpop.f32.mrb[0].mxu0
        %2696 = vmatprep.mubr.bf16.mxu0 0
        %2697 = vmatmul.mubr.bf16.gmra.mrb[0].mxu0 %v2592
        %v2698 = vpop.f32.mrb[0].mxu0
        %v2699 = vadd.f32 0.0, %v2698
        %v2700 = vpop.f32.mrb[0].mxu0
        %v2701 = vpop.f32.mrb[0].mxu0
        %v2702 = vadd.f32 0.0, %v2701
        %v2703 = vpop.f32.mrb[0].mxu0
        %2704 = vmatprep.mubr.bf16.mxu0 0
        %2705 = vmatmul.mubr.bf16.gmra.mrb[0].mxu0 %v2595
        %v2706 = vpop.f32.mrb[0].mxu0
        %v2707 = vadd.f32 0.0, %v2706
        %v2708 = vpop.f32.mrb[0].mxu0
        %v2709 = vpop.f32.mrb[0].mxu0
        %v2710 = vadd.f32 0.0, %v2709
        %v2711 = vpop.f32.mrb[0].mxu0
        %2712 = vmatprep.mubr.bf16.mxu0 0
        %2713 = vmatmul.mubr.bf16.gmra.mrb[0].mxu0 %v2598
        %v2714 = vpop.f32.mrb[0].mxu0
        %v2715 = vadd.f32 0.0, %v2714
        %v2716 = vpop.f32.mrb[0].mxu0
        %v2717 = vpop.f32.mrb[0].mxu0
        %v2718 = vadd.f32 0.0, %v2717
        %v2719 = vpop.f32.mrb[0].mxu0
        %2720 = vdwg.mxu0
        %2721 = vmax.xlane.f32.xlu0 %v2659
        %v2722 = vpop.xlane.xlu0 %2721
        %2723 = vmax.xlane.f32.xlu0 %v2662
        %v2724 = vpop.xlane.xlu0 %2723
        %2725 = vmax.xlane.f32.xlu0 %v2667
        %v2726 = vpop.xlane.xlu0 %2725
        %2727 = vmax.xlane.f32.xlu0 %v2670
        %v2728 = vpop.xlane.xlu0 %2727
        %2729 = vmax.xlane.f32.xlu0 %v2675
        %v2730 = vpop.xlane.xlu0 %2729
        %2731 = vmax.xlane.f32.xlu0 %v2678
        %v2732 = vpop.xlane.xlu0 %2731
        %2733 = vmax.xlane.f32.xlu0 %v2683
        %v2734 = vpop.xlane.xlu0 %2733
        %2735 = vmax.xlane.f32.xlu0 %v2686
        %v2736 = vpop.xlane.xlu0 %2735
        %2737 = vmax.xlane.f32.xlu0 %v2691
        %v2738 = vpop.xlane.xlu0 %2737
        %2739 = vmax.xlane.f32.xlu0 %v2694
        %v2740 = vpop.xlane.xlu0 %2739
        %2741 = vmax.xlane.f32.xlu0 %v2699
        %v2742 = vpop.xlane.xlu0 %2741
        %2743 = vmax.xlane.f32.xlu0 %v2702
        %v2744 = vpop.xlane.xlu0 %2743
        %2745 = vmax.xlane.f32.xlu0 %v2707
        %v2746 = vpop.xlane.xlu0 %2745
        %2747 = vmax.xlane.f32.xlu0 %v2710
        %v2748 = vpop.xlane.xlu0 %2747
        %2749 = vmax.xlane.f32.xlu0 %v2715
        %v2750 = vpop.xlane.xlu0 %2749
        %2751 = vmax.xlane.f32.xlu0 %v2718
        %v2752 = vpop.xlane.xlu0 %2751
        %v2753 = vsub.f32 %v2659, %v2722
        %v2754 = vsub.f32 %v2662, %v2724
        %v2755 = vsub.f32 %v2667, %v2726
        %v2756 = vsub.f32 %v2670, %v2728
        %v2757 = vsub.f32 %v2675, %v2730
        %v2758 = vsub.f32 %v2678, %v2732
        %v2759 = vsub.f32 %v2683, %v2734
        %v2760 = vsub.f32 %v2686, %v2736
        %v2761 = vsub.f32 %v2691, %v2738
        %v2762 = vsub.f32 %v2694, %v2740
        %v2763 = vsub.f32 %v2699, %v2742
        %v2764 = vsub.f32 %v2702, %v2744
        %v2765 = vsub.f32 %v2707, %v2746
        %v2766 = vsub.f32 %v2710, %v2748
        %v2767 = vsub.f32 %v2715, %v2750
        %v2768 = vsub.f32 %v2718, %v2752
        %v2769 = vmul.f32 %v2753, 1.442695
        %v2770 = vpow.pop %v2769
        %v2771 = vmul.f32 %v2754, 1.442695
        %v2772 = vpow.pop %v2771
        %v2773 = vmul.f32 %v2755, 1.442695
        %v2774 = vpow.pop %v2773
        %v2775 = vmul.f32 %v2756, 1.442695
        %v2776 = vpow.pop %v2775
        %v2777 = vmul.f32 %v2757, 1.442695
        %v2778 = vpow.pop %v2777
        %v2779 = vmul.f32 %v2758, 1.442695
        %v2780 = vpow.pop %v2779
        %v2781 = vmul.f32 %v2759, 1.442695
        %v2782 = vpow.pop %v2781
        %v2783 = vmul.f32 %v2760, 1.442695
        %v2784 = vpow.pop %v2783
        %v2785 = vmul.f32 %v2761, 1.442695
        %v2786 = vpow.pop %v2785
        %v2787 = vmul.f32 %v2762, 1.442695
        %v2788 = vpow.pop %v2787
        %v2789 = vmul.f32 %v2763, 1.442695
        %v2790 = vpow.pop %v2789
        %v2791 = vmul.f32 %v2764, 1.442695
        %v2792 = vpow.pop %v2791
        %v2793 = vmul.f32 %v2765, 1.442695
        %v2794 = vpow.pop %v2793
        %v2795 = vmul.f32 %v2766, 1.442695
        %v2796 = vpow.pop %v2795
        %v2797 = vmul.f32 %v2767, 1.442695
        %v2798 = vpow.pop %v2797
        %v2799 = vmul.f32 %v2768, 1.442695
        %v2800 = vpow.pop %v2799
        %2801 = vadd.xlane.f32.xlu0 %v2770
        %v2802 = vpop.xlane.xlu0 %2801
        %2803 = vadd.xlane.f32.xlu0 %v2772
        %v2804 = vpop.xlane.xlu0 %2803
        %2805 = vadd.xlane.f32.xlu0 %v2774
        %v2806 = vpop.xlane.xlu0 %2805
        %2807 = vadd.xlane.f32.xlu0 %v2776
        %v2808 = vpop.xlane.xlu0 %2807
        %2809 = vadd.xlane.f32.xlu0 %v2778
        %v2810 = vpop.xlane.xlu0 %2809
        %2811 = vadd.xlane.f32.xlu0 %v2780
        %v2812 = vpop.xlane.xlu0 %2811
        %2813 = vadd.xlane.f32.xlu0 %v2782
        %v2814 = vpop.xlane.xlu0 %2813
        %2815 = vadd.xlane.f32.xlu0 %v2784
        %v2816 = vpop.xlane.xlu0 %2815
        %2817 = vadd.xlane.f32.xlu0 %v2786
        %v2818 = vpop.xlane.xlu0 %2817
        %2819 = vadd.xlane.f32.xlu0 %v2788
        %v2820 = vpop.xlane.xlu0 %2819
        %2821 = vadd.xlane.f32.xlu0 %v2790
        %v2822 = vpop.xlane.xlu0 %2821
        %2823 = vadd.xlane.f32.xlu0 %v2792
        %v2824 = vpop.xlane.xlu0 %2823
        %2825 = vadd.xlane.f32.xlu0 %v2794
        %v2826 = vpop.xlane.xlu0 %2825
        %2827 = vadd.xlane.f32.xlu0 %v2796
        %v2828 = vpop.xlane.xlu0 %2827
        %2829 = vadd.xlane.f32.xlu0 %v2798
        %v2830 = vpop.xlane.xlu0 %2829
        %2831 = vadd.xlane.f32.xlu0 %v2800
        %v2832 = vpop.xlane.xlu0 %2831
        %v2833 = vrcp.pop %v2802
        %v2834 = vmul.f32 %v2770, %v2833
        %v2835 = vrcp.pop %v2804
        %v2836 = vmul.f32 %v2772, %v2835
        %v2837 = vrcp.pop %v2806
        %v2838 = vmul.f32 %v2774, %v2837
        %v2839 = vrcp.pop %v2808
        %v2840 = vmul.f32 %v2776, %v2839
        %v2841 = vrcp.pop %v2810
        %v2842 = vmul.f32 %v2778, %v2841
        %v2843 = vrcp.pop %v2812
        %v2844 = vmul.f32 %v2780, %v2843
        %v2845 = vrcp.pop %v2814
        %v2846 = vmul.f32 %v2782, %v2845
        %v2847 = vrcp.pop %v2816
        %v2848 = vmul.f32 %v2784, %v2847
        %v2849 = vrcp.pop %v2818
        %v2850 = vmul.f32 %v2786, %v2849
        %v2851 = vrcp.pop %v2820
        %v2852 = vmul.f32 %v2788, %v2851
        %v2853 = vrcp.pop %v2822
        %v2854 = vmul.f32 %v2790, %v2853
        %v2855 = vrcp.pop %v2824
        %v2856 = vmul.f32 %v2792, %v2855
        %v2857 = vrcp.pop %v2826
        %v2858 = vmul.f32 %v2794, %v2857
        %v2859 = vrcp.pop %v2828
        %v2860 = vmul.f32 %v2796, %v2859
        %v2861 = vrcp.pop %v2830
        %v2862 = vmul.f32 %v2798, %v2861
        %v2863 = vrcp.pop %v2832
        %v2864 = vmul.f32 %v2800, %v2863
        %v2865 = vpack.c.bf16 %v2836, %v2834
        %v2866 = vpack.c.bf16 %v2840, %v2838
        %v2867 = vpack.c.bf16 %v2844, %v2842
        %v2868 = vpack.c.bf16 %v2848, %v2846
        %v2869 = vpack.c.bf16 %v2852, %v2850
        %v2870 = vpack.c.bf16 %v2856, %v2854
        %v2871 = vpack.c.bf16 %v2860, %v2858
        %v2872 = vpack.c.bf16 %v2864, %v2862
        %v2881 = vunpack.c.l.b16 %v2865
        %v2882 = vunpack.c.h.b16 %v2865
        %v2883 = vunpack.c.l.b16 %v2866
        %v2884 = vunpack.c.h.b16 %v2866
        %v2885 = vunpack.c.l.b16 %v2867
        %v2886 = vunpack.c.h.b16 %v2867
        %v2887 = vunpack.c.l.b16 %v2868
        %v2888 = vunpack.c.h.b16 %v2868
        %v2889 = vunpack.c.l.b16 %v2869
        %v2890 = vunpack.c.h.b16 %v2869
        %v2891 = vunpack.c.l.b16 %v2870
        %v2892 = vunpack.c.h.b16 %v2870
        %v2893 = vunpack.c.l.b16 %v2871
        %v2894 = vunpack.c.h.b16 %v2871
        %v2895 = vunpack.c.l.b16 %v2872
        %v2896 = vunpack.c.h.b16 %v2872
        %v2897 = vpack.c.b16 %v2881, %v2881
        %v2898 = vpack.c.b16 %v2882, %v2882
        %v2899 = vpack.c.b16 %v2883, %v2883
        %v2900 = vpack.c.b16 %v2884, %v2884
        %v2901 = vpack.c.b16 %v2885, %v2885
        %v2902 = vpack.c.b16 %v2886, %v2886
        %v2903 = vpack.c.b16 %v2887, %v2887
        %v2904 = vpack.c.b16 %v2888, %v2888
        %v2905 = vpack.c.b16 %v2889, %v2889
        %v2906 = vpack.c.b16 %v2890, %v2890
        %v2907 = vpack.c.b16 %v2891, %v2891
        %v2908 = vpack.c.b16 %v2892, %v2892
        %v2909 = vpack.c.b16 %v2893, %v2893
        %v2910 = vpack.c.b16 %v2894, %v2894
        %v2911 = vpack.c.b16 %v2895, %v2895
        %v2912 = vpack.c.b16 %v2896, %v2896
        %s2929 = scalar_lea.vmem %s554, 192 [#allocation12]
        %2930 = vst [vmem:[%s2929] sm:$0xf] %v2897
        %2931 = vst [vmem:[%s2929 + $0x4] sm:$0xf] %v2898
        %2932 = vst [vmem:[%s2929 + $0x8] sm:$0xf] %v2899
        %2933 = vst [vmem:[%s2929 + $0xc] sm:$0xf] %v2900
        %2934 = vst [vmem:[%s2929 + $0x10] sm:$0xf] %v2901
        %2935 = vst [vmem:[%s2929 + $0x14] sm:$0xf] %v2902
        %2936 = vst [vmem:[%s2929 + $0x18] sm:$0xf] %v2903
        %2937 = vst [vmem:[%s2929 + $0x1c] sm:$0xf] %v2904
        %2938 = vst [vmem:[%s2929 + $0x20] sm:$0xf] %v2905
        %2939 = vst [vmem:[%s2929 + $0x24] sm:$0xf] %v2906
        %2940 = vst [vmem:[%s2929 + $0x28] sm:$0xf] %v2907
        %2941 = vst [vmem:[%s2929 + $0x2c] sm:$0xf] %v2908
        %2942 = vst [vmem:[%s2929 + $0x30] sm:$0xf] %v2909
        %2943 = vst [vmem:[%s2929 + $0x34] sm:$0xf] %v2910
        %2944 = vst [vmem:[%s2929 + $0x38] sm:$0xf] %v2911
        %2945 = vst [vmem:[%s2929 + $0x3c] sm:$0xf] %v2912
        %2946 = vrot.lane.b32.xlu0 %v999, 32
        %v2947 = vpop.permute.xlu0 %2946
        %2948 = vrot.lane.b32.xlu0 %v1000, 32
        %v2949 = vpop.permute.xlu0 %2948
        %2950 = vrot.lane.b32.xlu0 %v1001, 32
        %v2951 = vpop.permute.xlu0 %2950
        %2952 = vrot.lane.b32.xlu0 %v1002, 32
        %v2953 = vpop.permute.xlu0 %2952
        %2954 = vrot.lane.b32.xlu0 %v1003, 32
        %v2955 = vpop.permute.xlu0 %2954
        %2956 = vrot.lane.b32.xlu0 %v1004, 32
        %v2957 = vpop.permute.xlu0 %2956
        %2958 = vrot.lane.b32.xlu0 %v1005, 32
        %v2959 = vpop.permute.xlu0 %2958
        %2960 = vrot.lane.b32.xlu0 %v1006, 32
        %v2961 = vpop.permute.xlu0 %2960
        %2970 = vmatprep.subr.bf16.mxu0 0
        %2971 = vmatpush1.bf16.msra.mxu0 %v2947
        %2972 = vmatprep.subr.bf16.mxu0 0
        %2973 = vmatpush1.bf16.msra.mxu0 %v2949
        %2974 = vmatprep.subr.bf16.mxu0 0
        %2975 = vmatpush1.bf16.msra.mxu0 %v2951
        %2976 = vmatprep.subr.bf16.mxu0 0
        %2977 = vmatpush1.bf16.msra.mxu0 %v2953
        %2978 = vmatprep.subr.bf16.mxu0 0
        %2979 = vmatpush1.bf16.msra.mxu0 %v2955
        %2980 = vmatprep.subr.bf16.mxu0 0
        %2981 = vmatpush1.bf16.msra.mxu0 %v2957
        %2982 = vmatprep.subr.bf16.mxu0 0
        %2983 = vmatpush1.bf16.msra.mxu0 %v2959
        %2984 = vmatprep.subr.bf16.mxu0 0
        %2985 = vmatpush1.bf16.msra.mxu0 %v2961
        %2986 = vmatprep.subr.bf16.mxu0 0
        %2987 = vmatpush1.bf16.msra.mxu0 0
        %2988 = vmatprep.subr.bf16.mxu0 0
        %2989 = vmatpush1.bf16.msra.mxu0 0
        %2990 = vmatprep.subr.bf16.mxu0 0
        %2991 = vmatpush1.bf16.msra.mxu0 0
        %2992 = vmatprep.subr.bf16.mxu0 0
        %2993 = vmatpush1.bf16.msra.mxu0 0
        %2994 = vmatprep.subr.bf16.mxu0 0
        %2995 = vmatpush1.bf16.msra.mxu0 0
        %2996 = vmatprep.subr.bf16.mxu0 0
        %2997 = vmatpush1.bf16.msra.mxu0 0
        %2998 = vmatprep.subr.bf16.mxu0 0
        %2999 = vmatpush1.bf16.msra.mxu0 0
        %3000 = vmatprep.subr.bf16.mxu0 0
        %3001 = vmatpush1.bf16.msra.mxu0 0
        %3002 = vmatprep.mubr.bf16.mxu0 0
        %3003 = vmatmul.mubr.bf16.gmra.mrb[0].mxu0 %v2865
        %v3004 = vpop.f32.mrb[0].mxu0
        %v3005 = vadd.f32 0.0, %v3004
        %v3006 = vpop.f32.mrb[0].mxu0
        %v3007 = vpop.f32.mrb[0].mxu0
        %v3008 = vadd.f32 0.0, %v3007
        %v3009 = vpop.f32.mrb[0].mxu0
        %3010 = vmatprep.mubr.bf16.mxu0 0
        %3011 = vmatmul.mubr.bf16.gmra.mrb[0].mxu0 %v2866
        %v3012 = vpop.f32.mrb[0].mxu0
        %v3013 = vadd.f32 0.0, %v3012
        %v3014 = vpop.f32.mrb[0].mxu0
        %v3015 = vpop.f32.mrb[0].mxu0
        %v3016 = vadd.f32 0.0, %v3015
        %v3017 = vpop.f32.mrb[0].mxu0
        %3018 = vmatprep.mubr.bf16.mxu0 0
        %3019 = vmatmul.mubr.bf16.gmra.mrb[0].mxu0 %v2867
        %v3020 = vpop.f32.mrb[0].mxu0
        %v3021 = vadd.f32 0.0, %v3020
        %v3022 = vpop.f32.mrb[0].mxu0
        %v3023 = vpop.f32.mrb[0].mxu0
        %v3024 = vadd.f32 0.0, %v3023
        %v3025 = vpop.f32.mrb[0].mxu0
        %3026 = vmatprep.mubr.bf16.mxu0 0
        %3027 = vmatmul.mubr.bf16.gmra.mrb[0].mxu0 %v2868
        %v3028 = vpop.f32.mrb[0].mxu0
        %v3029 = vadd.f32 0.0, %v3028
        %v3030 = vpop.f32.mrb[0].mxu0
        %v3031 = vpop.f32.mrb[0].mxu0
        %v3032 = vadd.f32 0.0, %v3031
        %v3033 = vpop.f32.mrb[0].mxu0
        %3034 = vmatprep.mubr.bf16.mxu0 0
        %3035 = vmatmul.mubr.bf16.gmra.mrb[0].mxu0 %v2869
        %v3036 = vpop.f32.mrb[0].mxu0
        %v3037 = vadd.f32 0.0, %v3036
        %v3038 = vpop.f32.mrb[0].mxu0
        %v3039 = vpop.f32.mrb[0].mxu0
        %v3040 = vadd.f32 0.0, %v3039
        %v3041 = vpop.f32.mrb[0].mxu0
        %3042 = vmatprep.mubr.bf16.mxu0 0
        %3043 = vmatmul.mubr.bf16.gmra.mrb[0].mxu0 %v2870
        %v3044 = vpop.f32.mrb[0].mxu0
        %v3045 = vadd.f32 0.0, %v3044
        %v3046 = vpop.f32.mrb[0].mxu0
        %v3047 = vpop.f32.mrb[0].mxu0
        %v3048 = vadd.f32 0.0, %v3047
        %v3049 = vpop.f32.mrb[0].mxu0
        %3050 = vmatprep.mubr.bf16.mxu0 0
        %3051 = vmatmul.mubr.bf16.gmra.mrb[0].mxu0 %v2871
        %v3052 = vpop.f32.mrb[0].mxu0
        %v3053 = vadd.f32 0.0, %v3052
        %v3054 = vpop.f32.mrb[0].mxu0
        %v3055 = vpop.f32.mrb[0].mxu0
        %v3056 = vadd.f32 0.0, %v3055
        %v3057 = vpop.f32.mrb[0].mxu0
        %3058 = vmatprep.mubr.bf16.mxu0 0
        %3059 = vmatmul.mubr.bf16.gmra.mrb[0].mxu0 %v2872
        %v3060 = vpop.f32.mrb[0].mxu0
        %v3061 = vadd.f32 0.0, %v3060
        %v3062 = vpop.f32.mrb[0].mxu0
        %v3063 = vpop.f32.mrb[0].mxu0
        %v3064 = vadd.f32 0.0, %v3063
        %v3065 = vpop.f32.mrb[0].mxu0
        %3066 = vdwg.mxu0
        %3083 = vrot.lane.b32.xlu0 %v1959, 32
        %v3084 = vpop.permute.xlu0 %3083
        %3085 = vrot.lane.b32.xlu0 %v1962, 32
        %v3086 = vpop.permute.xlu0 %3085
        %3087 = vrot.lane.b32.xlu0 %v1967, 32
        %v3088 = vpop.permute.xlu0 %3087
        %3089 = vrot.lane.b32.xlu0 %v1970, 32
        %v3090 = vpop.permute.xlu0 %3089
        %3091 = vrot.lane.b32.xlu0 %v1975, 32
        %v3092 = vpop.permute.xlu0 %3091
        %3093 = vrot.lane.b32.xlu0 %v1978, 32
        %v3094 = vpop.permute.xlu0 %3093
        %3095 = vrot.lane.b32.xlu0 %v1983, 32
        %v3096 = vpop.permute.xlu0 %3095
        %3097 = vrot.lane.b32.xlu0 %v1986, 32
        %v3098 = vpop.permute.xlu0 %3097
        %3099 = vrot.lane.b32.xlu0 %v1991, 32
        %v3100 = vpop.permute.xlu0 %3099
        %3101 = vrot.lane.b32.xlu0 %v1994, 32
        %v3102 = vpop.permute.xlu0 %3101
        %3103 = vrot.lane.b32.xlu0 %v1999, 32
        %v3104 = vpop.permute.xlu0 %3103
        %3105 = vrot.lane.b32.xlu0 %v2002, 32
        %v3106 = vpop.permute.xlu0 %3105
        %3107 = vrot.lane.b32.xlu0 %v2007, 32
        %v3108 = vpop.permute.xlu0 %3107
        %3109 = vrot.lane.b32.xlu0 %v2010, 32
        %v3110 = vpop.permute.xlu0 %3109
        %3111 = vrot.lane.b32.xlu0 %v2015, 32
        %v3112 = vpop.permute.xlu0 %3111
        %3113 = vrot.lane.b32.xlu0 %v2018, 32
        %v3114 = vpop.permute.xlu0 %3113
        %3147 = vrot.lane.b32.xlu0 %v2482, 64
        %v3148 = vpop.permute.xlu0 %3147
        %3149 = vrot.lane.b32.xlu0 %v2485, 64
        %v3150 = vpop.permute.xlu0 %3149
        %3151 = vrot.lane.b32.xlu0 %v2490, 64
        %v3152 = vpop.permute.xlu0 %3151
        %3153 = vrot.lane.b32.xlu0 %v2493, 64
        %v3154 = vpop.permute.xlu0 %3153
        %3155 = vrot.lane.b32.xlu0 %v2498, 64
        %v3156 = vpop.permute.xlu0 %3155
        %3157 = vrot.lane.b32.xlu0 %v2501, 64
        %v3158 = vpop.permute.xlu0 %3157
        %3159 = vrot.lane.b32.xlu0 %v2506, 64
        %v3160 = vpop.permute.xlu0 %3159
        %3161 = vrot.lane.b32.xlu0 %v2509, 64
        %v3162 = vpop.permute.xlu0 %3161
        %3163 = vrot.lane.b32.xlu0 %v2514, 64
        %v3164 = vpop.permute.xlu0 %3163
        %3165 = vrot.lane.b32.xlu0 %v2517, 64
        %v3166 = vpop.permute.xlu0 %3165
        %3167 = vrot.lane.b32.xlu0 %v2522, 64
        %v3168 = vpop.permute.xlu0 %3167
        %3169 = vrot.lane.b32.xlu0 %v2525, 64
        %v3170 = vpop.permute.xlu0 %3169
        %3171 = vrot.lane.b32.xlu0 %v2530, 64
        %v3172 = vpop.permute.xlu0 %3171
        %3173 = vrot.lane.b32.xlu0 %v2533, 64
        %v3174 = vpop.permute.xlu0 %3173
        %3175 = vrot.lane.b32.xlu0 %v2538, 64
        %v3176 = vpop.permute.xlu0 %3175
        %3177 = vrot.lane.b32.xlu0 %v2541, 64
        %v3178 = vpop.permute.xlu0 %3177
        %3211 = vrot.lane.b32.xlu0 %v3005, 96
        %v3212 = vpop.permute.xlu0 %3211
        %3213 = vrot.lane.b32.xlu0 %v3008, 96
        %v3214 = vpop.permute.xlu0 %3213
        %3215 = vrot.lane.b32.xlu0 %v3013, 96
        %v3216 = vpop.permute.xlu0 %3215
        %3217 = vrot.lane.b32.xlu0 %v3016, 96
        %v3218 = vpop.permute.xlu0 %3217
        %3219 = vrot.lane.b32.xlu0 %v3021, 96
        %v3220 = vpop.permute.xlu0 %3219
        %3221 = vrot.lane.b32.xlu0 %v3024, 96
        %v3222 = vpop.permute.xlu0 %3221
        %3223 = vrot.lane.b32.xlu0 %v3029, 96
        %v3224 = vpop.permute.xlu0 %3223
        %3225 = vrot.lane.b32.xlu0 %v3032, 96
        %v3226 = vpop.permute.xlu0 %3225
        %3227 = vrot.lane.b32.xlu0 %v3037, 96
        %v3228 = vpop.permute.xlu0 %3227
        %3229 = vrot.lane.b32.xlu0 %v3040, 96
        %v3230 = vpop.permute.xlu0 %3229
        %3231 = vrot.lane.b32.xlu0 %v3045, 96
        %v3232 = vpop.permute.xlu0 %3231
        %3233 = vrot.lane.b32.xlu0 %v3048, 96
        %v3234 = vpop.permute.xlu0 %3233
        %3235 = vrot.lane.b32.xlu0 %v3053, 96
        %v3236 = vpop.permute.xlu0 %3235
        %3237 = vrot.lane.b32.xlu0 %v3056, 96
        %v3238 = vpop.permute.xlu0 %3237
        %3239 = vrot.lane.b32.xlu0 %v3061, 96
        %v3240 = vpop.permute.xlu0 %3239
        %3241 = vrot.lane.b32.xlu0 %v3064, 96
        %v3242 = vpop.permute.xlu0 %3241
        %v3259 = vsel %vm1007, %v1412, %v3084
        %v3260 = vsel %vm1007, %v1415, %v3086
        %v3261 = vsel %vm1007, %v1420, %v3088
        %v3262 = vsel %vm1007, %v1423, %v3090
        %v3263 = vsel %vm1007, %v1428, %v3092
        %v3264 = vsel %vm1007, %v1431, %v3094
        %v3265 = vsel %vm1007, %v1436, %v3096
        %v3266 = vsel %vm1007, %v1439, %v3098
        %v3267 = vsel %vm1007, %v1444, %v3100
        %v3268 = vsel %vm1007, %v1447, %v3102
        %v3269 = vsel %vm1007, %v1452, %v3104
        %v3270 = vsel %vm1007, %v1455, %v3106
        %v3271 = vsel %vm1007, %v1460, %v3108
        %v3272 = vsel %vm1007, %v1463, %v3110
        %v3273 = vsel %vm1007, %v1468, %v3112
        %v3274 = vsel %vm1007, %v1471, %v3114
        %vm3275 = vcmask 523264
        %v3276 = vsel %vm3275, %v3259, %v3148
        %v3277 = vsel %vm3275, %v3260, %v3150
        %v3278 = vsel %vm3275, %v3261, %v3152
        %v3279 = vsel %vm3275, %v3262, %v3154
        %v3280 = vsel %vm3275, %v3263, %v3156
        %v3281 = vsel %vm3275, %v3264, %v3158
        %v3282 = vsel %vm3275, %v3265, %v3160
        %v3283 = vsel %vm3275, %v3266, %v3162
        %v3284 = vsel %vm3275, %v3267, %v3164
        %v3285 = vsel %vm3275, %v3268, %v3166
        %v3286 = vsel %vm3275, %v3269, %v3168
        %v3287 = vsel %vm3275, %v3270, %v3170
        %v3288 = vsel %vm3275, %v3271, %v3172
        %v3289 = vsel %vm3275, %v3272, %v3174
        %v3290 = vsel %vm3275, %v3273, %v3176
        %v3291 = vsel %vm3275, %v3274, %v3178
        %vm3292 = vcmask 785408
        %v3293 = vsel %vm3292, %v3276, %v3212
        %v3294 = vsel %vm3292, %v3277, %v3214
        %v3295 = vsel %vm3292, %v3278, %v3216
        %v3296 = vsel %vm3292, %v3279, %v3218
        %v3297 = vsel %vm3292, %v3280, %v3220
        %v3298 = vsel %vm3292, %v3281, %v3222
        %v3299 = vsel %vm3292, %v3282, %v3224
        %v3300 = vsel %vm3292, %v3283, %v3226
        %v3301 = vsel %vm3292, %v3284, %v3228
        %v3302 = vsel %vm3292, %v3285, %v3230
        %v3303 = vsel %vm3292, %v3286, %v3232
        %v3304 = vsel %vm3292, %v3287, %v3234
        %v3305 = vsel %vm3292, %v3288, %v3236
        %v3306 = vsel %vm3292, %v3289, %v3238
        %v3307 = vsel %vm3292, %v3290, %v3240
        %v3308 = vsel %vm3292, %v3291, %v3242
        %v3309 = vpack.c.bf16 %v3294, %v3293
        %v3310 = vpack.c.bf16 %v3296, %v3295
        %v3311 = vpack.c.bf16 %v3298, %v3297
        %v3312 = vpack.c.bf16 %v3300, %v3299
        %v3313 = vpack.c.bf16 %v3302, %v3301
        %v3314 = vpack.c.bf16 %v3304, %v3303
        %v3315 = vpack.c.bf16 %v3306, %v3305
        %v3316 = vpack.c.bf16 %v3308, %v3307
        %v3317 = vld [vmem:[#allocation7] sm:$0xf]
        %v3318 = vld [vmem:[#allocation7 + $0x4] sm:$0xf]
        %v3319 = vld [vmem:[#allocation7 + $0x8] sm:$0xf]
        %v3320 = vld [vmem:[#allocation7 + $0xc] sm:$0xf]
        %v3321 = vld [vmem:[#allocation7 + $0x10] sm:$0xf]
        %v3322 = vld [vmem:[#allocation7 + $0x14] sm:$0xf]
        %v3323 = vld [vmem:[#allocation7 + $0x18] sm:$0xf]
        %v3324 = vld [vmem:[#allocation7 + $0x1c] sm:$0xf]
        %v3325 = vld [vmem:[#allocation7 + $0x20] sm:$0xf]
        %v3326 = vld [vmem:[#allocation7 + $0x24] sm:$0xf]
        %v3327 = vld [vmem:[#allocation7 + $0x28] sm:$0xf]
        %v3328 = vld [vmem:[#allocation7 + $0x2c] sm:$0xf]
        %v3329 = vld [vmem:[#allocation7 + $0x30] sm:$0xf]
        %v3330 = vld [vmem:[#allocation7 + $0x34] sm:$0xf]
        %v3331 = vld [vmem:[#allocation7 + $0x38] sm:$0xf]
        %v3332 = vld [vmem:[#allocation7 + $0x3c] sm:$0xf]
        %v3333 = vld [vmem:[%s4] sm:$0x1]
        %v3335 = vlaneseq
        %v3336 = vshrl.u32 %v3335, 7
        %v3337 = vsub.s32 0, %v3336
        %v3338 = vrot.slane %v3333, %v3337
        %v3356 = vunpack.c.l.b16 %v3317
        %v3357 = vunpack.c.l.b16 %v3318
        %v3358 = vunpack.c.l.b16 %v3319
        %v3359 = vunpack.c.l.b16 %v3320
        %v3360 = vunpack.c.l.b16 %v3321
        %v3361 = vunpack.c.l.b16 %v3322
        %v3362 = vunpack.c.l.b16 %v3323
        %v3363 = vunpack.c.l.b16 %v3324
        %v3364 = vunpack.c.l.b16 %v3325
        %v3365 = vunpack.c.l.b16 %v3326
        %v3366 = vunpack.c.l.b16 %v3327
        %v3367 = vunpack.c.l.b16 %v3328
        %v3368 = vunpack.c.l.b16 %v3329
        %v3369 = vunpack.c.l.b16 %v3330
        %v3370 = vunpack.c.l.b16 %v3331
        %v3371 = vunpack.c.l.b16 %v3332
        %v3372 = vpack.c.b16 %v3357, %v3356
        %v3373 = vpack.c.b16 %v3359, %v3358
        %v3374 = vpack.c.b16 %v3361, %v3360
        %v3375 = vpack.c.b16 %v3363, %v3362
        %v3376 = vpack.c.b16 %v3365, %v3364
        %v3377 = vpack.c.b16 %v3367, %v3366
        %v3378 = vpack.c.b16 %v3369, %v3368
        %v3379 = vpack.c.b16 %v3371, %v3370
        %3388 = vmatprep.subr.bf16.mxu0 0
        %3389 = vmatpush1.bf16.msra.mxu0 %v3372
        %3390 = vmatprep.subr.bf16.mxu0 0
        %3391 = vmatpush1.bf16.msra.mxu0 %v3373
        %3392 = vmatprep.subr.bf16.mxu0 0
        %3393 = vmatpush1.bf16.msra.mxu0 %v3374
        %3394 = vmatprep.subr.bf16.mxu0 0
        %3395 = vmatpush1.bf16.msra.mxu0 %v3375
        %3396 = vmatprep.subr.bf16.mxu0 0
        %3397 = vmatpush1.bf16.msra.mxu0 %v3376
        %3398 = vmatprep.subr.bf16.mxu0 0
        %3399 = vmatpush1.bf16.msra.mxu0 %v3377
        %3400 = vmatprep.subr.bf16.mxu0 0
        %3401 = vmatpush1.bf16.msra.mxu0 %v3378
        %3402 = vmatprep.subr.bf16.mxu0 0
        %3403 = vmatpush1.bf16.msra.mxu0 %v3379
        %3404 = vmatprep.subr.bf16.mxu0 0
        %3405 = vmatpush1.bf16.msra.mxu0 0
        %3406 = vmatprep.subr.bf16.mxu0 0
        %3407 = vmatpush1.bf16.msra.mxu0 0
        %3408 = vmatprep.subr.bf16.mxu0 0
        %3409 = vmatpush1.bf16.msra.mxu0 0
        %3410 = vmatprep.subr.bf16.mxu0 0
        %3411 = vmatpush1.bf16.msra.mxu0 0
        %3412 = vmatprep.subr.bf16.mxu0 0
        %3413 = vmatpush1.bf16.msra.mxu0 0
        %3414 = vmatprep.subr.bf16.mxu0 0
        %3415 = vmatpush1.bf16.msra.mxu0 0
        %3416 = vmatprep.subr.bf16.mxu0 0
        %3417 = vmatpush1.bf16.msra.mxu0 0
        %3418 = vmatprep.subr.bf16.mxu0 0
        %3419 = vmatpush1.bf16.msra.mxu0 0
        %3420 = vmatprep.mubr.bf16.mxu0 0
        %3421 = vmatmul.mubr.bf16.gmra.mrb[0].mxu0 %v3309
        %v3422 = vpop.f32.mrb[0].mxu0
        %v3423 = vadd.f32 %v3338, %v3422
        %v3424 = vpop.f32.mrb[0].mxu0
        %v3425 = vpop.f32.mrb[0].mxu0
        %v3426 = vadd.f32 %v3338, %v3425
        %v3427 = vpop.f32.mrb[0].mxu0
        %3428 = vmatprep.mubr.bf16.mxu0 0
        %3429 = vmatmul.mubr.bf16.gmra.mrb[0].mxu0 %v3310
        %v3430 = vpop.f32.mrb[0].mxu0
        %v3431 = vadd.f32 %v3338, %v3430
        %v3432 = vpop.f32.mrb[0].mxu0
        %v3433 = vpop.f32.mrb[0].mxu0
        %v3434 = vadd.f32 %v3338, %v3433
        %v3435 = vpop.f32.mrb[0].mxu0
        %3436 = vmatprep.mubr.bf16.mxu0 0
        %3437 = vmatmul.mubr.bf16.gmra.mrb[0].mxu0 %v3311
        %v3438 = vpop.f32.mrb[0].mxu0
        %v3439 = vadd.f32 %v3338, %v3438
        %v3440 = vpop.f32.mrb[0].mxu0
        %v3441 = vpop.f32.mrb[0].mxu0
        %v3442 = vadd.f32 %v3338, %v3441
        %v3443 = vpop.f32.mrb[0].mxu0
        %3444 = vmatprep.mubr.bf16.mxu0 0
        %3445 = vmatmul.mubr.bf16.gmra.mrb[0].mxu0 %v3312
        %v3446 = vpop.f32.mrb[0].mxu0
        %v3447 = vadd.f32 %v3338, %v3446
        %v3448 = vpop.f32.mrb[0].mxu0
        %v3449 = vpop.f32.mrb[0].mxu0
        %v3450 = vadd.f32 %v3338, %v3449
        %v3451 = vpop.f32.mrb[0].mxu0
        %3452 = vmatprep.mubr.bf16.mxu0 0
        %3453 = vmatmul.mubr.bf16.gmra.mrb[0].mxu0 %v3313
        %v3454 = vpop.f32.mrb[0].mxu0
        %v3455 = vadd.f32 %v3338, %v3454
        %v3456 = vpop.f32.mrb[0].mxu0
        %v3457 = vpop.f32.mrb[0].mxu0
        %v3458 = vadd.f32 %v3338, %v3457
        %v3459 = vpop.f32.mrb[0].mxu0
        %3460 = vmatprep.mubr.bf16.mxu0 0
        %3461 = vmatmul.mubr.bf16.gmra.mrb[0].mxu0 %v3314
        %v3462 = vpop.f32.mrb[0].mxu0
        %v3463 = vadd.f32 %v3338, %v3462
        %v3464 = vpop.f32.mrb[0].mxu0
        %v3465 = vpop.f32.mrb[0].mxu0
        %v3466 = vadd.f32 %v3338, %v3465
        %v3467 = vpop.f32.mrb[0].mxu0
        %3468 = vmatprep.mubr.bf16.mxu0 0
        %3469 = vmatmul.mubr.bf16.gmra.mrb[0].mxu0 %v3315
        %v3470 = vpop.f32.mrb[0].mxu0
        %v3471 = vadd.f32 %v3338, %v3470
        %v3472 = vpop.f32.mrb[0].mxu0
        %v3473 = vpop.f32.mrb[0].mxu0
        %v3474 = vadd.f32 %v3338, %v3473
        %v3475 = vpop.f32.mrb[0].mxu0
        %3476 = vmatprep.mubr.bf16.mxu0 0
        %3477 = vmatmul.mubr.bf16.gmra.mrb[0].mxu0 %v3316
        %v3478 = vpop.f32.mrb[0].mxu0
        %v3479 = vadd.f32 %v3338, %v3478
        %v3480 = vpop.f32.mrb[0].mxu0
        %v3481 = vpop.f32.mrb[0].mxu0
        %v3482 = vadd.f32 %v3338, %v3481
        %v3483 = vpop.f32.mrb[0].mxu0
        %3484 = vdwg.mxu0
        %v3485 = vld [vmem:[%s5] sm:$0x1]
        %v3486 = vld [vmem:[%s6] sm:$0x1]
        %3487 = vadd.xlane.f32.xlu0 %v3423
        %v3488 = vpop.xlane.xlu0 %3487
        %3489 = vadd.xlane.f32.xlu0 %v3426
        %v3490 = vpop.xlane.xlu0 %3489
        %3491 = vadd.xlane.f32.xlu0 %v3431
        %v3492 = vpop.xlane.xlu0 %3491
        %3493 = vadd.xlane.f32.xlu0 %v3434
        %v3494 = vpop.xlane.xlu0 %3493
        %3495 = vadd.xlane.f32.xlu0 %v3439
        %v3496 = vpop.xlane.xlu0 %3495
        %3497 = vadd.xlane.f32.xlu0 %v3442
        %v3498 = vpop.xlane.xlu0 %3497
        %3499 = vadd.xlane.f32.xlu0 %v3447
        %v3500 = vpop.xlane.xlu0 %3499
        %3501 = vadd.xlane.f32.xlu0 %v3450
        %v3502 = vpop.xlane.xlu0 %3501
        %3503 = vadd.xlane.f32.xlu0 %v3455
        %v3504 = vpop.xlane.xlu0 %3503
        %3505 = vadd.xlane.f32.xlu0 %v3458
        %v3506 = vpop.xlane.xlu0 %3505
        %3507 = vadd.xlane.f32.xlu0 %v3463
        %v3508 = vpop.xlane.xlu0 %3507
        %3509 = vadd.xlane.f32.xlu0 %v3466
        %v3510 = vpop.xlane.xlu0 %3509
        %3511 = vadd.xlane.f32.xlu0 %v3471
        %v3512 = vpop.xlane.xlu0 %3511
        %3513 = vadd.xlane.f32.xlu0 %v3474
        %v3514 = vpop.xlane.xlu0 %3513
        %3515 = vadd.xlane.f32.xlu0 %v3479
        %v3516 = vpop.xlane.xlu0 %3515
        %3517 = vadd.xlane.f32.xlu0 %v3482
        %v3518 = vpop.xlane.xlu0 %3517
        %v3519 = vrcp.pop 128.0
        %v3520 = vmul.f32 %v3488, %v3519
        %v3521 = vmul.f32 %v3490, %v3519
        %v3522 = vmul.f32 %v3492, %v3519
        %v3523 = vmul.f32 %v3494, %v3519
        %v3524 = vmul.f32 %v3496, %v3519
        %v3525 = vmul.f32 %v3498, %v3519
        %v3526 = vmul.f32 %v3500, %v3519
        %v3527 = vmul.f32 %v3502, %v3519
        %v3528 = vmul.f32 %v3504, %v3519
        %v3529 = vmul.f32 %v3506, %v3519
        %v3530 = vmul.f32 %v3508, %v3519
        %v3531 = vmul.f32 %v3510, %v3519
        %v3532 = vmul.f32 %v3512, %v3519
        %v3533 = vmul.f32 %v3514, %v3519
        %v3534 = vmul.f32 %v3516, %v3519
        %v3535 = vmul.f32 %v3518, %v3519
        %v3536 = vsub.f32 %v3423, %v3520
        %v3537 = vsub.f32 %v3426, %v3521
        %v3538 = vsub.f32 %v3431, %v3522
        %v3539 = vsub.f32 %v3434, %v3523
        %v3540 = vsub.f32 %v3439, %v3524
        %v3541 = vsub.f32 %v3442, %v3525
        %v3542 = vsub.f32 %v3447, %v3526
        %v3543 = vsub.f32 %v3450, %v3527
        %v3544 = vsub.f32 %v3455, %v3528
        %v3545 = vsub.f32 %v3458, %v3529
        %v3546 = vsub.f32 %v3463, %v3530
        %v3547 = vsub.f32 %v3466, %v3531
        %v3548 = vsub.f32 %v3471, %v3532
        %v3549 = vsub.f32 %v3474, %v3533
        %v3550 = vsub.f32 %v3479, %v3534
        %v3551 = vsub.f32 %v3482, %v3535
        %v3552 = vmul.f32 %v3536, %v3536
        %v3553 = vmul.f32 %v3537, %v3537
        %v3554 = vmul.f32 %v3538, %v3538
        %v3555 = vmul.f32 %v3539, %v3539
        %v3556 = vmul.f32 %v3540, %v3540
        %v3557 = vmul.f32 %v3541, %v3541
        %v3558 = vmul.f32 %v3542, %v3542
        %v3559 = vmul.f32 %v3543, %v3543
        %v3560 = vmul.f32 %v3544, %v3544
        %v3561 = vmul.f32 %v3545, %v3545
        %v3562 = vmul.f32 %v3546, %v3546
        %v3563 = vmul.f32 %v3547, %v3547
        %v3564 = vmul.f32 %v3548, %v3548
        %v3565 = vmul.f32 %v3549, %v3549
        %v3566 = vmul.f32 %v3550, %v3550
        %v3567 = vmul.f32 %v3551, %v3551
        %3568 = vadd.xlane.f32.xlu0 %v3552
        %v3569 = vpop.xlane.xlu0 %3568
        %3570 = vadd.xlane.f32.xlu0 %v3553
        %v3571 = vpop.xlane.xlu0 %3570
        %3572 = vadd.xlane.f32.xlu0 %v3554
        %v3573 = vpop.xlane.xlu0 %3572
        %3574 = vadd.xlane.f32.xlu0 %v3555
        %v3575 = vpop.xlane.xlu0 %3574
        %3576 = vadd.xlane.f32.xlu0 %v3556
        %v3577 = vpop.xlane.xlu0 %3576
        %3578 = vadd.xlane.f32.xlu0 %v3557
        %v3579 = vpop.xlane.xlu0 %3578
        %3580 = vadd.xlane.f32.xlu0 %v3558
        %v3581 = vpop.xlane.xlu0 %3580
        %3582 = vadd.xlane.f32.xlu0 %v3559
        %v3583 = vpop.xlane.xlu0 %3582
        %3584 = vadd.xlane.f32.xlu0 %v3560
        %v3585 = vpop.xlane.xlu0 %3584
        %3586 = vadd.xlane.f32.xlu0 %v3561
        %v3587 = vpop.xlane.xlu0 %3586
        %3588 = vadd.xlane.f32.xlu0 %v3562
        %v3589 = vpop.xlane.xlu0 %3588
        %3590 = vadd.xlane.f32.xlu0 %v3563
        %v3591 = vpop.xlane.xlu0 %3590
        %3592 = vadd.xlane.f32.xlu0 %v3564
        %v3593 = vpop.xlane.xlu0 %3592
        %3594 = vadd.xlane.f32.xlu0 %v3565
        %v3595 = vpop.xlane.xlu0 %3594
        %3596 = vadd.xlane.f32.xlu0 %v3566
        %v3597 = vpop.xlane.xlu0 %3596
        %3598 = vadd.xlane.f32.xlu0 %v3567
        %v3599 = vpop.xlane.xlu0 %3598
        %v3600 = vmul.f32 %v3569, %v3519
        %v3601 = vmul.f32 %v3571, %v3519
        %v3602 = vmul.f32 %v3573, %v3519
        %v3603 = vmul.f32 %v3575, %v3519
        %v3604 = vmul.f32 %v3577, %v3519
        %v3605 = vmul.f32 %v3579, %v3519
        %v3606 = vmul.f32 %v3581, %v3519
        %v3607 = vmul.f32 %v3583, %v3519
        %v3608 = vmul.f32 %v3585, %v3519
        %v3609 = vmul.f32 %v3587, %v3519
        %v3610 = vmul.f32 %v3589, %v3519
        %v3611 = vmul.f32 %v3591, %v3519
        %v3612 = vmul.f32 %v3593, %v3519
        %v3613 = vmul.f32 %v3595, %v3519
        %v3614 = vmul.f32 %v3597, %v3519
        %v3615 = vmul.f32 %v3599, %v3519
        %v3616 = vadd.f32 %v3600, 1e-05
        %v3617 = vadd.f32 %v3601, 1e-05
        %v3618 = vadd.f32 %v3602, 1e-05
        %v3619 = vadd.f32 %v3603, 1e-05
        %v3620 = vadd.f32 %v3604, 1e-05
        %v3621 = vadd.f32 %v3605, 1e-05
        %v3622 = vadd.f32 %v3606, 1e-05
        %v3623 = vadd.f32 %v3607, 1e-05
        %v3624 = vadd.f32 %v3608, 1e-05
        %v3625 = vadd.f32 %v3609, 1e-05
        %v3626 = vadd.f32 %v3610, 1e-05
        %v3627 = vadd.f32 %v3611, 1e-05
        %v3628 = vadd.f32 %v3612, 1e-05
        %v3629 = vadd.f32 %v3613, 1e-05
        %v3630 = vadd.f32 %v3614, 1e-05
        %v3631 = vadd.f32 %v3615, 1e-05
        %v3632 = vrsqrt.pop %v3616
        %v3633 = vrsqrt.pop %v3617
        %v3634 = vrsqrt.pop %v3618
        %v3635 = vrsqrt.pop %v3619
        %v3636 = vrsqrt.pop %v3620
        %v3637 = vrsqrt.pop %v3621
        %v3638 = vrsqrt.pop %v3622
        %v3639 = vrsqrt.pop %v3623
        %v3640 = vrsqrt.pop %v3624
        %v3641 = vrsqrt.pop %v3625
        %v3642 = vrsqrt.pop %v3626
        %v3643 = vrsqrt.pop %v3627
        %v3644 = vrsqrt.pop %v3628
        %v3645 = vrsqrt.pop %v3629
        %v3646 = vrsqrt.pop %v3630
        %v3647 = vrsqrt.pop %v3631
        %v3648 = vmul.f32 %v3536, %v3632
        %v3649 = vmul.f32 %v3537, %v3633
        %v3650 = vmul.f32 %v3538, %v3634
        %v3651 = vmul.f32 %v3539, %v3635
        %v3652 = vmul.f32 %v3540, %v3636
        %v3653 = vmul.f32 %v3541, %v3637
        %v3654 = vmul.f32 %v3542, %v3638
        %v3655 = vmul.f32 %v3543, %v3639
        %v3656 = vmul.f32 %v3544, %v3640
        %v3657 = vmul.f32 %v3545, %v3641
        %v3658 = vmul.f32 %v3546, %v3642
        %v3659 = vmul.f32 %v3547, %v3643
        %v3660 = vmul.f32 %v3548, %v3644
        %v3661 = vmul.f32 %v3549, %v3645
        %v3662 = vmul.f32 %v3550, %v3646
        %v3663 = vmul.f32 %v3551, %v3647
        %v3665 = vlaneseq
        %v3666 = vshrl.u32 %v3665, 7
        %v3667 = vsub.s32 0, %v3666
        %v3668 = vrot.slane %v3485, %v3667
        %v3670 = vmul.f32 %v3648, %v3668
        %v3671 = vmul.f32 %v3649, %v3668
        %v3672 = vmul.f32 %v3650, %v3668
        %v3673 = vmul.f32 %v3651, %v3668
        %v3674 = vmul.f32 %v3652, %v3668
        %v3675 = vmul.f32 %v3653, %v3668
        %v3676 = vmul.f32 %v3654, %v3668
        %v3677 = vmul.f32 %v3655, %v3668
        %v3678 = vmul.f32 %v3656, %v3668
        %v3679 = vmul.f32 %v3657, %v3668
        %v3680 = vmul.f32 %v3658, %v3668
        %v3681 = vmul.f32 %v3659, %v3668
        %v3682 = vmul.f32 %v3660, %v3668
        %v3683 = vmul.f32 %v3661, %v3668
        %v3684 = vmul.f32 %v3662, %v3668
        %v3685 = vmul.f32 %v3663, %v3668
        %v3687 = vlaneseq
        %v3688 = vshrl.u32 %v3687, 7
        %v3689 = vsub.s32 0, %v3688
        %v3690 = vrot.slane %v3486, %v3689
        %v3692 = vadd.f32 %v3670, %v3690
        %v3693 = vadd.f32 %v3671, %v3690
        %v3694 = vadd.f32 %v3672, %v3690
        %v3695 = vadd.f32 %v3673, %v3690
        %v3696 = vadd.f32 %v3674, %v3690
        %v3697 = vadd.f32 %v3675, %v3690
        %v3698 = vadd.f32 %v3676, %v3690
        %v3699 = vadd.f32 %v3677, %v3690
        %v3700 = vadd.f32 %v3678, %v3690
        %v3701 = vadd.f32 %v3679, %v3690
        %v3702 = vadd.f32 %v3680, %v3690
        %v3703 = vadd.f32 %v3681, %v3690
        %v3704 = vadd.f32 %v3682, %v3690
        %v3705 = vadd.f32 %v3683, %v3690
        %v3706 = vadd.f32 %v3684, %v3690
        %v3707 = vadd.f32 %v3685, %v3690
        %v3708 = vadd.f32 %v556, %v3692
        %v3709 = vadd.f32 %v557, %v3693
        %v3710 = vadd.f32 %v558, %v3694
        %v3711 = vadd.f32 %v559, %v3695
        %v3712 = vadd.f32 %v560, %v3696
        %v3713 = vadd.f32 %v561, %v3697
        %v3714 = vadd.f32 %v562, %v3698
        %v3715 = vadd.f32 %v563, %v3699
        %v3716 = vadd.f32 %v564, %v3700
        %v3717 = vadd.f32 %v565, %v3701
        %v3718 = vadd.f32 %v566, %v3702
        %v3719 = vadd.f32 %v567, %v3703
        %v3720 = vadd.f32 %v568, %v3704
        %v3721 = vadd.f32 %v569, %v3705
        %v3722 = vadd.f32 %v570, %v3706
        %v3723 = vadd.f32 %v571, %v3707
        %v3724 = vpack.c.bf16 %v3709, %v3708
        %v3725 = vpack.c.bf16 %v3711, %v3710
        %v3726 = vpack.c.bf16 %v3713, %v3712
        %v3727 = vpack.c.bf16 %v3715, %v3714
        %v3728 = vpack.c.bf16 %v3717, %v3716
        %v3729 = vpack.c.bf16 %v3719, %v3718
        %v3730 = vpack.c.bf16 %v3721, %v3720
        %v3731 = vpack.c.bf16 %v3723, %v3722
        %v3732 = vld [vmem:[#allocation8] sm:$0xff]
        %v3733 = vld [vmem:[#allocation8 + $0x8] sm:$0xff]
        %v3734 = vld [vmem:[#allocation8 + $0x10] sm:$0xff]
        %v3735 = vld [vmem:[#allocation8 + $0x18] sm:$0xff]
        %v3736 = vld [vmem:[#allocation8 + $0x20] sm:$0xff]
        %v3737 = vld [vmem:[#allocation8 + $0x28] sm:$0xff]
        %v3738 = vld [vmem:[#allocation8 + $0x30] sm:$0xff]
        %v3739 = vld [vmem:[#allocation8 + $0x38] sm:$0xff]
        %v3740 = vld [vmem:[#allocation8 + $0x40] sm:$0xff]
        %v3741 = vld [vmem:[#allocation8 + $0x48] sm:$0xff]
        %v3742 = vld [vmem:[#allocation8 + $0x50] sm:$0xff]
        %v3743 = vld [vmem:[#allocation8 + $0x58] sm:$0xff]
        %v3744 = vld [vmem:[#allocation8 + $0x60] sm:$0xff]
        %v3745 = vld [vmem:[#allocation8 + $0x68] sm:$0xff]
        %v3746 = vld [vmem:[#allocation8 + $0x70] sm:$0xff]
        %v3747 = vld [vmem:[#allocation8 + $0x78] sm:$0xff]
        %v3748 = vld [vmem:[%s8] sm:$0x3]
        %v3750 = vlaneseq
        %v3751 = vshrl.u32 %v3750, 7
        %v3752 = vsub.s32 0, %v3751
        %v3753 = vrot.slane %v3748, %v3752
        %v3754 = vlaneseq
        %v3755 = vshrl.u32 %v3754, 7
        %v3756 = vsub.s32 1, %v3755
        %v3757 = vrot.slane %v3748, %v3756
        %v3776 = vunpack.c.l.b16 %v3732
        %v3777 = vunpack.c.h.b16 %v3732
        %v3778 = vunpack.c.l.b16 %v3733
        %v3779 = vunpack.c.h.b16 %v3733
        %v3780 = vunpack.c.l.b16 %v3734
        %v3781 = vunpack.c.h.b16 %v3734
        %v3782 = vunpack.c.l.b16 %v3735
        %v3783 = vunpack.c.h.b16 %v3735
        %v3784 = vunpack.c.l.b16 %v3736
        %v3785 = vunpack.c.h.b16 %v3736
        %v3786 = vunpack.c.l.b16 %v3737
        %v3787 = vunpack.c.h.b16 %v3737
        %v3788 = vunpack.c.l.b16 %v3738
        %v3789 = vunpack.c.h.b16 %v3738
        %v3790 = vunpack.c.l.b16 %v3739
        %v3791 = vunpack.c.h.b16 %v3739
        %v3792 = vunpack.c.l.b16 %v3740
        %v3793 = vunpack.c.h.b16 %v3740
        %v3794 = vunpack.c.l.b16 %v3741
        %v3795 = vunpack.c.h.b16 %v3741
        %v3796 = vunpack.c.l.b16 %v3742
        %v3797 = vunpack.c.h.b16 %v3742
        %v3798 = vunpack.c.l.b16 %v3743
        %v3799 = vunpack.c.h.b16 %v3743
        %v3800 = vunpack.c.l.b16 %v3744
        %v3801 = vunpack.c.h.b16 %v3744
        %v3802 = vunpack.c.l.b16 %v3745
        %v3803 = vunpack.c.h.b16 %v3745
        %v3804 = vunpack.c.l.b16 %v3746
        %v3805 = vunpack.c.h.b16 %v3746
        %v3806 = vunpack.c.l.b16 %v3747
        %v3807 = vunpack.c.h.b16 %v3747
        %v3808 = vpack.c.b16 %v3778, %v3776
        %v3809 = vpack.c.b16 %v3779, %v3777
        %v3810 = vpack.c.b16 %v3782, %v3780
        %v3811 = vpack.c.b16 %v3783, %v3781
        %v3812 = vpack.c.b16 %v3786, %v3784
        %v3813 = vpack.c.b16 %v3787, %v3785
        %v3814 = vpack.c.b16 %v3790, %v3788
        %v3815 = vpack.c.b16 %v3791, %v3789
        %v3816 = vpack.c.b16 %v3794, %v3792
        %v3817 = vpack.c.b16 %v3795, %v3793
        %v3818 = vpack.c.b16 %v3798, %v3796
        %v3819 = vpack.c.b16 %v3799, %v3797
        %v3820 = vpack.c.b16 %v3802, %v3800
        %v3821 = vpack.c.b16 %v3803, %v3801
        %v3822 = vpack.c.b16 %v3806, %v3804
        %v3823 = vpack.c.b16 %v3807, %v3805
        %3840 = vmatprep.subr.bf16.mxu0 %v3809
        %3841 = vmatpush1.bf16.msra.mxu0 %v3808
        %3842 = vmatprep.subr.bf16.mxu0 %v3811
        %3843 = vmatpush1.bf16.msra.mxu0 %v3810
        %3844 = vmatprep.subr.bf16.mxu0 %v3813
        %3845 = vmatpush1.bf16.msra.mxu0 %v3812
        %3846 = vmatprep.subr.bf16.mxu0 %v3815
        %3847 = vmatpush1.bf16.msra.mxu0 %v3814
        %3848 = vmatprep.subr.bf16.mxu0 %v3817
        %3849 = vmatpush1.bf16.msra.mxu0 %v3816
        %3850 = vmatprep.subr.bf16.mxu0 %v3819
        %3851 = vmatpush1.bf16.msra.mxu0 %v3818
        %3852 = vmatprep.subr.bf16.mxu0 %v3821
        %3853 = vmatpush1.bf16.msra.mxu0 %v3820
        %3854 = vmatprep.subr.bf16.mxu0 %v3823
        %3855 = vmatpush1.bf16.msra.mxu0 %v3822
        %3856 = vmatprep.subr.bf16.mxu0 0
        %3857 = vmatpush1.bf16.msra.mxu0 0
        %3858 = vmatprep.subr.bf16.mxu0 0
        %3859 = vmatpush1.bf16.msra.mxu0 0
        %3860 = vmatprep.subr.bf16.mxu0 0
        %3861 = vmatpush1.bf16.msra.mxu0 0
        %3862 = vmatprep.subr.bf16.mxu0 0
        %3863 = vmatpush1.bf16.msra.mxu0 0
        %3864 = vmatprep.subr.bf16.mxu0 0
        %3865 = vmatpush1.bf16.msra.mxu0 0
        %3866 = vmatprep.subr.bf16.mxu0 0
        %3867 = vmatpush1.bf16.msra.mxu0 0
        %3868 = vmatprep.subr.bf16.mxu0 0
        %3869 = vmatpush1.bf16.msra.mxu0 0
        %3870 = vmatprep.subr.bf16.mxu0 0
        %3871 = vmatpush1.bf16.msra.mxu0 0
        %3872 = vmatprep.mubr.bf16.mxu0 0
        %3873 = vmatmul.mubr.bf16.gmra.mrb[0].mxu0 %v3724
        %v3874 = vpop.f32.mrb[0].mxu0
        %v3875 = vadd.f32 %v3753, %v3874
        %v3876 = vpop.f32.mrb[0].mxu0
        %v3877 = vadd.f32 %v3757, %v3876
        %v3878 = vpop.f32.mrb[0].mxu0
        %v3879 = vadd.f32 %v3753, %v3878
        %v3880 = vpop.f32.mrb[0].mxu0
        %v3881 = vadd.f32 %v3757, %v3880
        %3882 = vmatprep.mubr.bf16.mxu0 0
        %3883 = vmatmul.mubr.bf16.gmra.mrb[0].mxu0 %v3725
        %v3884 = vpop.f32.mrb[0].mxu0
        %v3885 = vadd.f32 %v3753, %v3884
        %v3886 = vpop.f32.mrb[0].mxu0
        %v3887 = vadd.f32 %v3757, %v3886
        %v3888 = vpop.f32.mrb[0].mxu0
        %v3889 = vadd.f32 %v3753, %v3888
        %v3890 = vpop.f32.mrb[0].mxu0
        %v3891 = vadd.f32 %v3757, %v3890
        %3892 = vmatprep.mubr.bf16.mxu0 0
        %3893 = vmatmul.mubr.bf16.gmra.mrb[0].mxu0 %v3726
        %v3894 = vpop.f32.mrb[0].mxu0
        %v3895 = vadd.f32 %v3753, %v3894
        %v3896 = vpop.f32.mrb[0].mxu0
        %v3897 = vadd.f32 %v3757, %v3896
        %v3898 = vpop.f32.mrb[0].mxu0
        %v3899 = vadd.f32 %v3753, %v3898
        %v3900 = vpop.f32.mrb[0].mxu0
        %v3901 = vadd.f32 %v3757, %v3900
        %3902 = vmatprep.mubr.bf16.mxu0 0
        %3903 = vmatmul.mubr.bf16.gmra.mrb[0].mxu0 %v3727
        %v3904 = vpop.f32.mrb[0].mxu0
        %v3905 = vadd.f32 %v3753, %v3904
        %v3906 = vpop.f32.mrb[0].mxu0
        %v3907 = vadd.f32 %v3757, %v3906
        %v3908 = vpop.f32.mrb[0].mxu0
        %v3909 = vadd.f32 %v3753, %v3908
        %v3910 = vpop.f32.mrb[0].mxu0
        %v3911 = vadd.f32 %v3757, %v3910
        %3912 = vmatprep.mubr.bf16.mxu0 0
        %3913 = vmatmul.mubr.bf16.gmra.mrb[0].mxu0 %v3728
        %v3914 = vpop.f32.mrb[0].mxu0
        %v3915 = vadd.f32 %v3753, %v3914
        %v3916 = vpop.f32.mrb[0].mxu0
        %v3917 = vadd.f32 %v3757, %v3916
        %v3918 = vpop.f32.mrb[0].mxu0
        %v3919 = vadd.f32 %v3753, %v3918
        %v3920 = vpop.f32.mrb[0].mxu0
        %v3921 = vadd.f32 %v3757, %v3920
        %3922 = vmatprep.mubr.bf16.mxu0 0
        %3923 = vmatmul.mubr.bf16.gmra.mrb[0].mxu0 %v3729
        %v3924 = vpop.f32.mrb[0].mxu0
        %v3925 = vadd.f32 %v3753, %v3924
        %v3926 = vpop.f32.mrb[0].mxu0
        %v3927 = vadd.f32 %v3757, %v3926
        %v3928 = vpop.f32.mrb[0].mxu0
        %v3929 = vadd.f32 %v3753, %v3928
        %v3930 = vpop.f32.mrb[0].mxu0
        %v3931 = vadd.f32 %v3757, %v3930
        %3932 = vmatprep.mubr.bf16.mxu0 0
        %3933 = vmatmul.mubr.bf16.gmra.mrb[0].mxu0 %v3730
        %v3934 = vpop.f32.mrb[0].mxu0
        %v3935 = vadd.f32 %v3753, %v3934
        %v3936 = vpop.f32.mrb[0].mxu0
        %v3937 = vadd.f32 %v3757, %v3936
        %v3938 = vpop.f32.mrb[0].mxu0
        %v3939 = vadd.f32 %v3753, %v3938
        %v3940 = vpop.f32.mrb[0].mxu0
        %v3941 = vadd.f32 %v3757, %v3940
        %3942 = vmatprep.mubr.bf16.mxu0 0
        %3943 = vmatmul.mubr.bf16.gmra.mrb[0].mxu0 %v3731
        %v3944 = vpop.f32.mrb[0].mxu0
        %v3945 = vadd.f32 %v3753, %v3944
        %v3946 = vpop.f32.mrb[0].mxu0
        %v3947 = vadd.f32 %v3757, %v3946
        %v3948 = vpop.f32.mrb[0].mxu0
        %v3949 = vadd.f32 %v3753, %v3948
        %v3950 = vpop.f32.mrb[0].mxu0
        %v3951 = vadd.f32 %v3757, %v3950
        %3952 = vdwg.mxu0
        %v3953 = vmul.f32 %v3875, 0.5
        %v3954 = vmul.f32 %v3877, 0.5
        %v3955 = vmul.f32 %v3879, 0.5
        %v3956 = vmul.f32 %v3881, 0.5
        %v3957 = vmul.f32 %v3885, 0.5
        %v3958 = vmul.f32 %v3887, 0.5
        %v3959 = vmul.f32 %v3889, 0.5
        %v3960 = vmul.f32 %v3891, 0.5
        %v3961 = vmul.f32 %v3895, 0.5
        %v3962 = vmul.f32 %v3897, 0.5
        %v3963 = vmul.f32 %v3899, 0.5
        %v3964 = vmul.f32 %v3901, 0.5
        %v3965 = vmul.f32 %v3905, 0.5
        %v3966 = vmul.f32 %v3907, 0.5
        %v3967 = vmul.f32 %v3909, 0.5
        %v3968 = vmul.f32 %v3911, 0.5
        %v3969 = vmul.f32 %v3915, 0.5
        %v3970 = vmul.f32 %v3917, 0.5
        %v3971 = vmul.f32 %v3919, 0.5
        %v3972 = vmul.f32 %v3921, 0.5
        %v3973 = vmul.f32 %v3925, 0.5
        %v3974 = vmul.f32 %v3927, 0.5
        %v3975 = vmul.f32 %v3929, 0.5
        %v3976 = vmul.f32 %v3931, 0.5
        %v3977 = vmul.f32 %v3935, 0.5
        %v3978 = vmul.f32 %v3937, 0.5
        %v3979 = vmul.f32 %v3939, 0.5
        %v3980 = vmul.f32 %v3941, 0.5
        %v3981 = vmul.f32 %v3945, 0.5
        %v3982 = vmul.f32 %v3947, 0.5
        %v3983 = vmul.f32 %v3949, 0.5
        %v3984 = vmul.f32 %v3951, 0.5
        %v3985 = vmul.f32 %v3875, 0.70710677
        %v3986 = vmul.f32 %v3877, 0.70710677
        %v3987 = vmul.f32 %v3879, 0.70710677
        %v3988 = vmul.f32 %v3881, 0.70710677
        %v3989 = vmul.f32 %v3885, 0.70710677
        %v3990 = vmul.f32 %v3887, 0.70710677
        %v3991 = vmul.f32 %v3889, 0.70710677
        %v3992 = vmul.f32 %v3891, 0.70710677
        %v3993 = vmul.f32 %v3895, 0.70710677
        %v3994 = vmul.f32 %v3897, 0.70710677
        %v3995 = vmul.f32 %v3899, 0.70710677
        %v3996 = vmul.f32 %v3901, 0.70710677
        %v3997 = vmul.f32 %v3905, 0.70710677
        %v3998 = vmul.f32 %v3907, 0.70710677
        %v3999 = vmul.f32 %v3909, 0.70710677
        %v4000 = vmul.f32 %v3911, 0.70710677
        %v4001 = vmul.f32 %v3915, 0.70710677
        %v4002 = vmul.f32 %v3917, 0.70710677
        %v4003 = vmul.f32 %v3919, 0.70710677
        %v4004 = vmul.f32 %v3921, 0.70710677
        %v4005 = vmul.f32 %v3925, 0.70710677
        %v4006 = vmul.f32 %v3927, 0.70710677
        %v4007 = vmul.f32 %v3929, 0.70710677
        %v4008 = vmul.f32 %v3931, 0.70710677
        %v4009 = vmul.f32 %v3935, 0.70710677
        %v4010 = vmul.f32 %v3937, 0.70710677
        %v4011 = vmul.f32 %v3939, 0.70710677
        %v4012 = vmul.f32 %v3941, 0.70710677
        %v4013 = vmul.f32 %v3945, 0.70710677
        %v4014 = vmul.f32 %v3947, 0.70710677
        %v4015 = vmul.f32 %v3949, 0.70710677
        %v4016 = vmul.f32 %v3951, 0.70710677
        %v4017 = verf.f32.pop %v3985
        %v4018 = verf.f32.pop %v3986
        %v4019 = verf.f32.pop %v3987
        %v4020 = verf.f32.pop %v3988
        %v4021 = verf.f32.pop %v3989
        %v4022 = verf.f32.pop %v3990
        %v4023 = verf.f32.pop %v3991
        %v4024 = verf.f32.pop %v3992
        %v4025 = verf.f32.pop %v3993
        %v4026 = verf.f32.pop %v3994
        %v4027 = verf.f32.pop %v3995
        %v4028 = verf.f32.pop %v3996
        %v4029 = verf.f32.pop %v3997
        %v4030 = verf.f32.pop %v3998
        %v4031 = verf.f32.pop %v3999
        %v4032 = verf.f32.pop %v4000
        %v4033 = verf.f32.pop %v4001
        %v4034 = verf.f32.pop %v4002
        %v4035 = verf.f32.pop %v4003
        %v4036 = verf.f32.pop %v4004
        %v4037 = verf.f32.pop %v4005
        %v4038 = verf.f32.pop %v4006
        %v4039 = verf.f32.pop %v4007
        %v4040 = verf.f32.pop %v4008
        %v4041 = verf.f32.pop %v4009
        %v4042 = verf.f32.pop %v4010
        %v4043 = verf.f32.pop %v4011
        %v4044 = verf.f32.pop %v4012
        %v4045 = verf.f32.pop %v4013
        %v4046 = verf.f32.pop %v4014
        %v4047 = verf.f32.pop %v4015
        %v4048 = verf.f32.pop %v4016
        %v4049 = vadd.f32 %v4017, 1.0
        %v4050 = vadd.f32 %v4018, 1.0
        %v4051 = vadd.f32 %v4019, 1.0
        %v4052 = vadd.f32 %v4020, 1.0
        %v4053 = vadd.f32 %v4021, 1.0
        %v4054 = vadd.f32 %v4022, 1.0
        %v4055 = vadd.f32 %v4023, 1.0
        %v4056 = vadd.f32 %v4024, 1.0
        %v4057 = vadd.f32 %v4025, 1.0
        %v4058 = vadd.f32 %v4026, 1.0
        %v4059 = vadd.f32 %v4027, 1.0
        %v4060 = vadd.f32 %v4028, 1.0
        %v4061 = vadd.f32 %v4029, 1.0
        %v4062 = vadd.f32 %v4030, 1.0
        %v4063 = vadd.f32 %v4031, 1.0
        %v4064 = vadd.f32 %v4032, 1.0
        %v4065 = vadd.f32 %v4033, 1.0
        %v4066 = vadd.f32 %v4034, 1.0
        %v4067 = vadd.f32 %v4035, 1.0
        %v4068 = vadd.f32 %v4036, 1.0
        %v4069 = vadd.f32 %v4037, 1.0
        %v4070 = vadd.f32 %v4038, 1.0
        %v4071 = vadd.f32 %v4039, 1.0
        %v4072 = vadd.f32 %v4040, 1.0
        %v4073 = vadd.f32 %v4041, 1.0
        %v4074 = vadd.f32 %v4042, 1.0
        %v4075 = vadd.f32 %v4043, 1.0
        %v4076 = vadd.f32 %v4044, 1.0
        %v4077 = vadd.f32 %v4045, 1.0
        %v4078 = vadd.f32 %v4046, 1.0
        %v4079 = vadd.f32 %v4047, 1.0
        %v4080 = vadd.f32 %v4048, 1.0
        %v4081 = vmul.f32 %v3953, %v4049
        %v4082 = vmul.f32 %v3954, %v4050
        %v4083 = vmul.f32 %v3955, %v4051
        %v4084 = vmul.f32 %v3956, %v4052
        %v4085 = vmul.f32 %v3957, %v4053
        %v4086 = vmul.f32 %v3958, %v4054
        %v4087 = vmul.f32 %v3959, %v4055
        %v4088 = vmul.f32 %v3960, %v4056
        %v4089 = vmul.f32 %v3961, %v4057
        %v4090 = vmul.f32 %v3962, %v4058
        %v4091 = vmul.f32 %v3963, %v4059
        %v4092 = vmul.f32 %v3964, %v4060
        %v4093 = vmul.f32 %v3965, %v4061
        %v4094 = vmul.f32 %v3966, %v4062
        %v4095 = vmul.f32 %v3967, %v4063
        %v4096 = vmul.f32 %v3968, %v4064
        %v4097 = vmul.f32 %v3969, %v4065
        %v4098 = vmul.f32 %v3970, %v4066
        %v4099 = vmul.f32 %v3971, %v4067
        %v4100 = vmul.f32 %v3972, %v4068
        %v4101 = vmul.f32 %v3973, %v4069
        %v4102 = vmul.f32 %v3974, %v4070
        %v4103 = vmul.f32 %v3975, %v4071
        %v4104 = vmul.f32 %v3976, %v4072
        %v4105 = vmul.f32 %v3977, %v4073
        %v4106 = vmul.f32 %v3978, %v4074
        %v4107 = vmul.f32 %v3979, %v4075
        %v4108 = vmul.f32 %v3980, %v4076
        %v4109 = vmul.f32 %v3981, %v4077
        %v4110 = vmul.f32 %v3982, %v4078
        %v4111 = vmul.f32 %v3983, %v4079
        %v4112 = vmul.f32 %v3984, %v4080
        %v4113 = vpack.c.bf16 %v4083, %v4081
        %v4114 = vpack.c.bf16 %v4084, %v4082
        %v4115 = vpack.c.bf16 %v4087, %v4085
        %v4116 = vpack.c.bf16 %v4088, %v4086
        %v4117 = vpack.c.bf16 %v4091, %v4089
        %v4118 = vpack.c.bf16 %v4092, %v4090
        %v4119 = vpack.c.bf16 %v4095, %v4093
        %v4120 = vpack.c.bf16 %v4096, %v4094
        %v4121 = vpack.c.bf16 %v4099, %v4097
        %v4122 = vpack.c.bf16 %v4100, %v4098
        %v4123 = vpack.c.bf16 %v4103, %v4101
        %v4124 = vpack.c.bf16 %v4104, %v4102
        %v4125 = vpack.c.bf16 %v4107, %v4105
        %v4126 = vpack.c.bf16 %v4108, %v4106
        %v4127 = vpack.c.bf16 %v4111, %v4109
        %v4128 = vpack.c.bf16 %v4112, %v4110
        %v4129 = vld [vmem:[#allocation10] sm:$0xf]
        %v4130 = vld [vmem:[#allocation10 + $0x4] sm:$0xf]
        %v4131 = vld [vmem:[#allocation10 + $0x8] sm:$0xf]
        %v4132 = vld [vmem:[#allocation10 + $0xc] sm:$0xf]
        %v4133 = vld [vmem:[#allocation10 + $0x10] sm:$0xf]
        %v4134 = vld [vmem:[#allocation10 + $0x14] sm:$0xf]
        %v4135 = vld [vmem:[#allocation10 + $0x18] sm:$0xf]
        %v4136 = vld [vmem:[#allocation10 + $0x1c] sm:$0xf]
        %v4137 = vld [vmem:[#allocation10 + $0x20] sm:$0xf]
        %v4138 = vld [vmem:[#allocation10 + $0x24] sm:$0xf]
        %v4139 = vld [vmem:[#allocation10 + $0x28] sm:$0xf]
        %v4140 = vld [vmem:[#allocation10 + $0x2c] sm:$0xf]
        %v4141 = vld [vmem:[#allocation10 + $0x30] sm:$0xf]
        %v4142 = vld [vmem:[#allocation10 + $0x34] sm:$0xf]
        %v4143 = vld [vmem:[#allocation10 + $0x38] sm:$0xf]
        %v4144 = vld [vmem:[#allocation10 + $0x3c] sm:$0xf]
        %v4145 = vld [vmem:[#allocation10 + $0x40] sm:$0xf]
        %v4146 = vld [vmem:[#allocation10 + $0x44] sm:$0xf]
        %v4147 = vld [vmem:[#allocation10 + $0x48] sm:$0xf]
        %v4148 = vld [vmem:[#allocation10 + $0x4c] sm:$0xf]
        %v4149 = vld [vmem:[#allocation10 + $0x50] sm:$0xf]
        %v4150 = vld [vmem:[#allocation10 + $0x54] sm:$0xf]
        %v4151 = vld [vmem:[#allocation10 + $0x58] sm:$0xf]
        %v4152 = vld [vmem:[#allocation10 + $0x5c] sm:$0xf]
        %v4153 = vld [vmem:[#allocation10 + $0x60] sm:$0xf]
        %v4154 = vld [vmem:[#allocation10 + $0x64] sm:$0xf]
        %v4155 = vld [vmem:[#allocation10 + $0x68] sm:$0xf]
        %v4156 = vld [vmem:[#allocation10 + $0x6c] sm:$0xf]
        %v4157 = vld [vmem:[#allocation10 + $0x70] sm:$0xf]
        %v4158 = vld [vmem:[#allocation10 + $0x74] sm:$0xf]
        %v4159 = vld [vmem:[#allocation10 + $0x78] sm:$0xf]
        %v4160 = vld [vmem:[#allocation10 + $0x7c] sm:$0xf]
        %v4161 = vld [vmem:[%s10] sm:$0x1]
        %v4163 = vlaneseq
        %v4164 = vshrl.u32 %v4163, 7
        %v4165 = vsub.s32 0, %v4164
        %v4166 = vrot.slane %v4161, %v4165
        %v4200 = vunpack.c.l.b16 %v4129
        %v4201 = vunpack.c.l.b16 %v4130
        %v4202 = vunpack.c.l.b16 %v4131
        %v4203 = vunpack.c.l.b16 %v4132
        %v4204 = vunpack.c.l.b16 %v4133
        %v4205 = vunpack.c.l.b16 %v4134
        %v4206 = vunpack.c.l.b16 %v4135
        %v4207 = vunpack.c.l.b16 %v4136
        %v4208 = vunpack.c.l.b16 %v4137
        %v4209 = vunpack.c.l.b16 %v4138
        %v4210 = vunpack.c.l.b16 %v4139
        %v4211 = vunpack.c.l.b16 %v4140
        %v4212 = vunpack.c.l.b16 %v4141
        %v4213 = vunpack.c.l.b16 %v4142
        %v4214 = vunpack.c.l.b16 %v4143
        %v4215 = vunpack.c.l.b16 %v4144
        %v4216 = vunpack.c.l.b16 %v4145
        %v4217 = vunpack.c.l.b16 %v4146
        %v4218 = vunpack.c.l.b16 %v4147
        %v4219 = vunpack.c.l.b16 %v4148
        %v4220 = vunpack.c.l.b16 %v4149
        %v4221 = vunpack.c.l.b16 %v4150
        %v4222 = vunpack.c.l.b16 %v4151
        %v4223 = vunpack.c.l.b16 %v4152
        %v4224 = vunpack.c.l.b16 %v4153
        %v4225 = vunpack.c.l.b16 %v4154
        %v4226 = vunpack.c.l.b16 %v4155
        %v4227 = vunpack.c.l.b16 %v4156
        %v4228 = vunpack.c.l.b16 %v4157
        %v4229 = vunpack.c.l.b16 %v4158
        %v4230 = vunpack.c.l.b16 %v4159
        %v4231 = vunpack.c.l.b16 %v4160
        %v4232 = vpack.c.b16 %v4201, %v4200
        %v4233 = vpack.c.b16 %v4203, %v4202
        %v4234 = vpack.c.b16 %v4205, %v4204
        %v4235 = vpack.c.b16 %v4207, %v4206
        %v4236 = vpack.c.b16 %v4209, %v4208
        %v4237 = vpack.c.b16 %v4211, %v4210
        %v4238 = vpack.c.b16 %v4213, %v4212
        %v4239 = vpack.c.b16 %v4215, %v4214
        %v4240 = vpack.c.b16 %v4217, %v4216
        %v4241 = vpack.c.b16 %v4219, %v4218
        %v4242 = vpack.c.b16 %v4221, %v4220
        %v4243 = vpack.c.b16 %v4223, %v4222
        %v4244 = vpack.c.b16 %v4225, %v4224
        %v4245 = vpack.c.b16 %v4227, %v4226
        %v4246 = vpack.c.b16 %v4229, %v4228
        %v4247 = vpack.c.b16 %v4231, %v4230
        %4264 = vmatprep.subr.bf16.mxu0 0
        %4265 = vmatpush1.bf16.msra.mxu0 %v4232
        %4266 = vmatprep.subr.bf16.mxu0 0
        %4267 = vmatpush1.bf16.msra.mxu0 %v4233
        %4268 = vmatprep.subr.bf16.mxu0 0
        %4269 = vmatpush1.bf16.msra.mxu0 %v4234
        %4270 = vmatprep.subr.bf16.mxu0 0
        %4271 = vmatpush1.bf16.msra.mxu0 %v4235
        %4272 = vmatprep.subr.bf16.mxu0 0
        %4273 = vmatpush1.bf16.msra.mxu0 %v4236
        %4274 = vmatprep.subr.bf16.mxu0 0
        %4275 = vmatpush1.bf16.msra.mxu0 %v4237
        %4276 = vmatprep.subr.bf16.mxu0 0
        %4277 = vmatpush1.bf16.msra.mxu0 %v4238
        %4278 = vmatprep.subr.bf16.mxu0 0
        %4279 = vmatpush1.bf16.msra.mxu0 %v4239
        %4280 = vmatprep.subr.bf16.mxu0 0
        %4281 = vmatpush1.bf16.msra.mxu0 %v4240
        %4282 = vmatprep.subr.bf16.mxu0 0
        %4283 = vmatpush1.bf16.msra.mxu0 %v4241
        %4284 = vmatprep.subr.bf16.mxu0 0
        %4285 = vmatpush1.bf16.msra.mxu0 %v4242
        %4286 = vmatprep.subr.bf16.mxu0 0
        %4287 = vmatpush1.bf16.msra.mxu0 %v4243
        %4288 = vmatprep.subr.bf16.mxu0 0
        %4289 = vmatpush1.bf16.msra.mxu0 %v4244
        %4290 = vmatprep.subr.bf16.mxu0 0
        %4291 = vmatpush1.bf16.msra.mxu0 %v4245
        %4292 = vmatprep.subr.bf16.mxu0 0
        %4293 = vmatpush1.bf16.msra.mxu0 %v4246
        %4294 = vmatprep.subr.bf16.mxu0 0
        %4295 = vmatpush1.bf16.msra.mxu0 %v4247
        %4296 = vmatprep.mubr.bf16.mxu0 %v4114
        %4297 = vmatmul.mubr.bf16.gmra.mrb[0].mxu0 %v4113
        %v4298 = vpop.f32.mrb[0].mxu0
        %v4299 = vadd.f32 %v4166, %v4298
        %v4300 = vpop.f32.mrb[0].mxu0
        %v4301 = vpop.f32.mrb[0].mxu0
        %v4302 = vadd.f32 %v4166, %v4301
        %v4303 = vpop.f32.mrb[0].mxu0
        %4304 = vmatprep.mubr.bf16.mxu0 %v4116
        %4305 = vmatmul.mubr.bf16.gmra.mrb[0].mxu0 %v4115
        %v4306 = vpop.f32.mrb[0].mxu0
        %v4307 = vadd.f32 %v4166, %v4306
        %v4308 = vpop.f32.mrb[0].mxu0
        %v4309 = vpop.f32.mrb[0].mxu0
        %v4310 = vadd.f32 %v4166, %v4309
        %v4311 = vpop.f32.mrb[0].mxu0
        %4312 = vmatprep.mubr.bf16.mxu0 %v4118
        %4313 = vmatmul.mubr.bf16.gmra.mrb[0].mxu0 %v4117
        %v4314 = vpop.f32.mrb[0].mxu0
        %v4315 = vadd.f32 %v4166, %v4314
        %v4316 = vpop.f32.mrb[0].mxu0
        %v4317 = vpop.f32.mrb[0].mxu0
        %v4318 = vadd.f32 %v4166, %v4317
        %v4319 = vpop.f32.mrb[0].mxu0
        %4320 = vmatprep.mubr.bf16.mxu0 %v4120
        %4321 = vmatmul.mubr.bf16.gmra.mrb[0].mxu0 %v4119
        %v4322 = vpop.f32.mrb[0].mxu0
        %v4323 = vadd.f32 %v4166, %v4322
        %v4324 = vpop.f32.mrb[0].mxu0
        %v4325 = vpop.f32.mrb[0].mxu0
        %v4326 = vadd.f32 %v4166, %v4325
        %v4327 = vpop.f32.mrb[0].mxu0
        %4328 = vmatprep.mubr.bf16.mxu0 %v4122
        %4329 = vmatmul.mubr.bf16.gmra.mrb[0].mxu0 %v4121
        %v4330 = vpop.f32.mrb[0].mxu0
        %v4331 = vadd.f32 %v4166, %v4330
        %v4332 = vpop.f32.mrb[0].mxu0
        %v4333 = vpop.f32.mrb[0].mxu0
        %v4334 = vadd.f32 %v4166, %v4333
        %v4335 = vpop.f32.mrb[0].mxu0
        %4336 = vmatprep.mubr.bf16.mxu0 %v4124
        %4337 = vmatmul.mubr.bf16.gmra.mrb[0].mxu0 %v4123
        %v4338 = vpop.f32.mrb[0].mxu0
        %v4339 = vadd.f32 %v4166, %v4338
        %v4340 = vpop.f32.mrb[0].mxu0
        %v4341 = vpop.f32.mrb[0].mxu0
        %v4342 = vadd.f32 %v4166, %v4341
        %v4343 = vpop.f32.mrb[0].mxu0
        %4344 = vmatprep.mubr.bf16.mxu0 %v4126
        %4345 = vmatmul.mubr.bf16.gmra.mrb[0].mxu0 %v4125
        %v4346 = vpop.f32.mrb[0].mxu0
        %v4347 = vadd.f32 %v4166, %v4346
        %v4348 = vpop.f32.mrb[0].mxu0
        %v4349 = vpop.f32.mrb[0].mxu0
        %v4350 = vadd.f32 %v4166, %v4349
        %v4351 = vpop.f32.mrb[0].mxu0
        %4352 = vmatprep.mubr.bf16.mxu0 %v4128
        %4353 = vmatmul.mubr.bf16.gmra.mrb[0].mxu0 %v4127
        %v4354 = vpop.f32.mrb[0].mxu0
        %v4355 = vadd.f32 %v4166, %v4354
        %v4356 = vpop.f32.mrb[0].mxu0
        %v4357 = vpop.f32.mrb[0].mxu0
        %v4358 = vadd.f32 %v4166, %v4357
        %v4359 = vpop.f32.mrb[0].mxu0
        %4360 = vdwg.mxu0
        %v4361 = vadd.f32 %v3708, %v4299
        %v4362 = vadd.f32 %v3709, %v4302
        %v4363 = vadd.f32 %v3710, %v4307
        %v4364 = vadd.f32 %v3711, %v4310
        %v4365 = vadd.f32 %v3712, %v4315
        %v4366 = vadd.f32 %v3713, %v4318
        %v4367 = vadd.f32 %v3714, %v4323
        %v4368 = vadd.f32 %v3715, %v4326
        %v4369 = vadd.f32 %v3716, %v4331
        %v4370 = vadd.f32 %v3717, %v4334
        %v4371 = vadd.f32 %v3718, %v4339
        %v4372 = vadd.f32 %v3719, %v4342
        %v4373 = vadd.f32 %v3720, %v4347
        %v4374 = vadd.f32 %v3721, %v4350
        %v4375 = vadd.f32 %v3722, %v4355
        %v4376 = vadd.f32 %v3723, %v4358
        %v4377 = vld [vmem:[%s11] sm:$0x1]
        %v4378 = vld [vmem:[%s12] sm:$0x1]
        %4379 = vadd.xlane.f32.xlu0 %v4361
        %v4380 = vpop.xlane.xlu0 %4379
        %4381 = vadd.xlane.f32.xlu0 %v4362
        %v4382 = vpop.xlane.xlu0 %4381
        %4383 = vadd.xlane.f32.xlu0 %v4363
        %v4384 = vpop.xlane.xlu0 %4383
        %4385 = vadd.xlane.f32.xlu0 %v4364
        %v4386 = vpop.xlane.xlu0 %4385
        %4387 = vadd.xlane.f32.xlu0 %v4365
        %v4388 = vpop.xlane.xlu0 %4387
        %4389 = vadd.xlane.f32.xlu0 %v4366
        %v4390 = vpop.xlane.xlu0 %4389
        %4391 = vadd.xlane.f32.xlu0 %v4367
        %v4392 = vpop.xlane.xlu0 %4391
        %4393 = vadd.xlane.f32.xlu0 %v4368
        %v4394 = vpop.xlane.xlu0 %4393
        %4395 = vadd.xlane.f32.xlu0 %v4369
        %v4396 = vpop.xlane.xlu0 %4395
        %4397 = vadd.xlane.f32.xlu0 %v4370
        %v4398 = vpop.xlane.xlu0 %4397
        %4399 = vadd.xlane.f32.xlu0 %v4371
        %v4400 = vpop.xlane.xlu0 %4399
        %4401 = vadd.xlane.f32.xlu0 %v4372
        %v4402 = vpop.xlane.xlu0 %4401
        %4403 = vadd.xlane.f32.xlu0 %v4373
        %v4404 = vpop.xlane.xlu0 %4403
        %4405 = vadd.xlane.f32.xlu0 %v4374
        %v4406 = vpop.xlane.xlu0 %4405
        %4407 = vadd.xlane.f32.xlu0 %v4375
        %v4408 = vpop.xlane.xlu0 %4407
        %4409 = vadd.xlane.f32.xlu0 %v4376
        %v4410 = vpop.xlane.xlu0 %4409
        %v4411 = vmul.f32 %v4380, %v3519
        %v4412 = vmul.f32 %v4382, %v3519
        %v4413 = vmul.f32 %v4384, %v3519
        %v4414 = vmul.f32 %v4386, %v3519
        %v4415 = vmul.f32 %v4388, %v3519
        %v4416 = vmul.f32 %v4390, %v3519
        %v4417 = vmul.f32 %v4392, %v3519
        %v4418 = vmul.f32 %v4394, %v3519
        %v4419 = vmul.f32 %v4396, %v3519
        %v4420 = vmul.f32 %v4398, %v3519
        %v4421 = vmul.f32 %v4400, %v3519
        %v4422 = vmul.f32 %v4402, %v3519
        %v4423 = vmul.f32 %v4404, %v3519
        %v4424 = vmul.f32 %v4406, %v3519
        %v4425 = vmul.f32 %v4408, %v3519
        %v4426 = vmul.f32 %v4410, %v3519
        %v4427 = vsub.f32 %v4361, %v4411
        %v4428 = vsub.f32 %v4362, %v4412
        %v4429 = vsub.f32 %v4363, %v4413
        %v4430 = vsub.f32 %v4364, %v4414
        %v4431 = vsub.f32 %v4365, %v4415
        %v4432 = vsub.f32 %v4366, %v4416
        %v4433 = vsub.f32 %v4367, %v4417
        %v4434 = vsub.f32 %v4368, %v4418
        %v4435 = vsub.f32 %v4369, %v4419
        %v4436 = vsub.f32 %v4370, %v4420
        %v4437 = vsub.f32 %v4371, %v4421
        %v4438 = vsub.f32 %v4372, %v4422
        %v4439 = vsub.f32 %v4373, %v4423
        %v4440 = vsub.f32 %v4374, %v4424
        %v4441 = vsub.f32 %v4375, %v4425
        %v4442 = vsub.f32 %v4376, %v4426
        %v4443 = vmul.f32 %v4427, %v4427
        %v4444 = vmul.f32 %v4428, %v4428
        %v4445 = vmul.f32 %v4429, %v4429
        %v4446 = vmul.f32 %v4430, %v4430
        %v4447 = vmul.f32 %v4431, %v4431
        %v4448 = vmul.f32 %v4432, %v4432
        %v4449 = vmul.f32 %v4433, %v4433
        %v4450 = vmul.f32 %v4434, %v4434
        %v4451 = vmul.f32 %v4435, %v4435
        %v4452 = vmul.f32 %v4436, %v4436
        %v4453 = vmul.f32 %v4437, %v4437
        %v4454 = vmul.f32 %v4438, %v4438
        %v4455 = vmul.f32 %v4439, %v4439
        %v4456 = vmul.f32 %v4440, %v4440
        %v4457 = vmul.f32 %v4441, %v4441
        %v4458 = vmul.f32 %v4442, %v4442
        %4459 = vadd.xlane.f32.xlu0 %v4443
        %v4460 = vpop.xlane.xlu0 %4459
        %4461 = vadd.xlane.f32.xlu0 %v4444
        %v4462 = vpop.xlane.xlu0 %4461
        %4463 = vadd.xlane.f32.xlu0 %v4445
        %v4464 = vpop.xlane.xlu0 %4463
        %4465 = vadd.xlane.f32.xlu0 %v4446
        %v4466 = vpop.xlane.xlu0 %4465
        %4467 = vadd.xlane.f32.xlu0 %v4447
        %v4468 = vpop.xlane.xlu0 %4467
        %4469 = vadd.xlane.f32.xlu0 %v4448
        %v4470 = vpop.xlane.xlu0 %4469
        %4471 = vadd.xlane.f32.xlu0 %v4449
        %v4472 = vpop.xlane.xlu0 %4471
        %4473 = vadd.xlane.f32.xlu0 %v4450
        %v4474 = vpop.xlane.xlu0 %4473
        %4475 = vadd.xlane.f32.xlu0 %v4451
        %v4476 = vpop.xlane.xlu0 %4475
        %4477 = vadd.xlane.f32.xlu0 %v4452
        %v4478 = vpop.xlane.xlu0 %4477
        %4479 = vadd.xlane.f32.xlu0 %v4453
        %v4480 = vpop.xlane.xlu0 %4479
        %4481 = vadd.xlane.f32.xlu0 %v4454
        %v4482 = vpop.xlane.xlu0 %4481
        %4483 = vadd.xlane.f32.xlu0 %v4455
        %v4484 = vpop.xlane.xlu0 %4483
        %4485 = vadd.xlane.f32.xlu0 %v4456
        %v4486 = vpop.xlane.xlu0 %4485
        %4487 = vadd.xlane.f32.xlu0 %v4457
        %v4488 = vpop.xlane.xlu0 %4487
        %4489 = vadd.xlane.f32.xlu0 %v4458
        %v4490 = vpop.xlane.xlu0 %4489
        %v4491 = vmul.f32 %v4460, %v3519
        %v4492 = vmul.f32 %v4462, %v3519
        %v4493 = vmul.f32 %v4464, %v3519
        %v4494 = vmul.f32 %v4466, %v3519
        %v4495 = vmul.f32 %v4468, %v3519
        %v4496 = vmul.f32 %v4470, %v3519
        %v4497 = vmul.f32 %v4472, %v3519
        %v4498 = vmul.f32 %v4474, %v3519
        %v4499 = vmul.f32 %v4476, %v3519
        %v4500 = vmul.f32 %v4478, %v3519
        %v4501 = vmul.f32 %v4480, %v3519
        %v4502 = vmul.f32 %v4482, %v3519
        %v4503 = vmul.f32 %v4484, %v3519
        %v4504 = vmul.f32 %v4486, %v3519
        %v4505 = vmul.f32 %v4488, %v3519
        %v4506 = vmul.f32 %v4490, %v3519
        %v4507 = vadd.f32 %v4491, 1e-05
        %v4508 = vadd.f32 %v4492, 1e-05
        %v4509 = vadd.f32 %v4493, 1e-05
        %v4510 = vadd.f32 %v4494, 1e-05
        %v4511 = vadd.f32 %v4495, 1e-05
        %v4512 = vadd.f32 %v4496, 1e-05
        %v4513 = vadd.f32 %v4497, 1e-05
        %v4514 = vadd.f32 %v4498, 1e-05
        %v4515 = vadd.f32 %v4499, 1e-05
        %v4516 = vadd.f32 %v4500, 1e-05
        %v4517 = vadd.f32 %v4501, 1e-05
        %v4518 = vadd.f32 %v4502, 1e-05
        %v4519 = vadd.f32 %v4503, 1e-05
        %v4520 = vadd.f32 %v4504, 1e-05
        %v4521 = vadd.f32 %v4505, 1e-05
        %v4522 = vadd.f32 %v4506, 1e-05
        %v4523 = vrsqrt.pop %v4507
        %v4524 = vrsqrt.pop %v4508
        %v4525 = vrsqrt.pop %v4509
        %v4526 = vrsqrt.pop %v4510
        %v4527 = vrsqrt.pop %v4511
        %v4528 = vrsqrt.pop %v4512
        %v4529 = vrsqrt.pop %v4513
        %v4530 = vrsqrt.pop %v4514
        %v4531 = vrsqrt.pop %v4515
        %v4532 = vrsqrt.pop %v4516
        %v4533 = vrsqrt.pop %v4517
        %v4534 = vrsqrt.pop %v4518
        %v4535 = vrsqrt.pop %v4519
        %v4536 = vrsqrt.pop %v4520
        %v4537 = vrsqrt.pop %v4521
        %v4538 = vrsqrt.pop %v4522
        %v4539 = vmul.f32 %v4427, %v4523
        %v4540 = vmul.f32 %v4428, %v4524
        %v4541 = vmul.f32 %v4429, %v4525
        %v4542 = vmul.f32 %v4430, %v4526
        %v4543 = vmul.f32 %v4431, %v4527
        %v4544 = vmul.f32 %v4432, %v4528
        %v4545 = vmul.f32 %v4433, %v4529
        %v4546 = vmul.f32 %v4434, %v4530
        %v4547 = vmul.f32 %v4435, %v4531
        %v4548 = vmul.f32 %v4436, %v4532
        %v4549 = vmul.f32 %v4437, %v4533
        %v4550 = vmul.f32 %v4438, %v4534
        %v4551 = vmul.f32 %v4439, %v4535
        %v4552 = vmul.f32 %v4440, %v4536
        %v4553 = vmul.f32 %v4441, %v4537
        %v4554 = vmul.f32 %v4442, %v4538
        %v4556 = vlaneseq
        %v4557 = vshrl.u32 %v4556, 7
        %v4558 = vsub.s32 0, %v4557
        %v4559 = vrot.slane %v4377, %v4558
        %v4561 = vmul.f32 %v4539, %v4559
        %v4562 = vmul.f32 %v4540, %v4559
        %v4563 = vmul.f32 %v4541, %v4559
        %v4564 = vmul.f32 %v4542, %v4559
        %v4565 = vmul.f32 %v4543, %v4559
        %v4566 = vmul.f32 %v4544, %v4559
        %v4567 = vmul.f32 %v4545, %v4559
        %v4568 = vmul.f32 %v4546, %v4559
        %v4569 = vmul.f32 %v4547, %v4559
        %v4570 = vmul.f32 %v4548, %v4559
        %v4571 = vmul.f32 %v4549, %v4559
        %v4572 = vmul.f32 %v4550, %v4559
        %v4573 = vmul.f32 %v4551, %v4559
        %v4574 = vmul.f32 %v4552, %v4559
        %v4575 = vmul.f32 %v4553, %v4559
        %v4576 = vmul.f32 %v4554, %v4559
        %v4578 = vlaneseq
        %v4579 = vshrl.u32 %v4578, 7
        %v4580 = vsub.s32 0, %v4579
        %v4581 = vrot.slane %v4378, %v4580
        %v4583 = vadd.f32 %v4561, %v4581
        %v4584 = vadd.f32 %v4562, %v4581
        %v4585 = vadd.f32 %v4563, %v4581
        %v4586 = vadd.f32 %v4564, %v4581
        %v4587 = vadd.f32 %v4565, %v4581
        %v4588 = vadd.f32 %v4566, %v4581
        %v4589 = vadd.f32 %v4567, %v4581
        %v4590 = vadd.f32 %v4568, %v4581
        %v4591 = vadd.f32 %v4569, %v4581
        %v4592 = vadd.f32 %v4570, %v4581
        %v4593 = vadd.f32 %v4571, %v4581
        %v4594 = vadd.f32 %v4572, %v4581
        %v4595 = vadd.f32 %v4573, %v4581
        %v4596 = vadd.f32 %v4574, %v4581
        %v4597 = vadd.f32 %v4575, %v4581
        %v4598 = vadd.f32 %v4576, %v4581
        %v4599 = vadd.f32 %v3708, %v4583
        %v4600 = vadd.f32 %v3709, %v4584
        %v4601 = vadd.f32 %v3710, %v4585
        %v4602 = vadd.f32 %v3711, %v4586
        %v4603 = vadd.f32 %v3712, %v4587
        %v4604 = vadd.f32 %v3713, %v4588
        %v4605 = vadd.f32 %v3714, %v4589
        %v4606 = vadd.f32 %v3715, %v4590
        %v4607 = vadd.f32 %v3716, %v4591
        %v4608 = vadd.f32 %v3717, %v4592
        %v4609 = vadd.f32 %v3718, %v4593
        %v4610 = vadd.f32 %v3719, %v4594
        %v4611 = vadd.f32 %v3720, %v4595
        %v4612 = vadd.f32 %v3721, %v4596
        %v4613 = vadd.f32 %v3722, %v4597
        %v4614 = vadd.f32 %v3723, %v4598
        %4615 = vst [vmem:[%s547] sm:$0xff] %v4599
        %4616 = vst [vmem:[%s547 + $0x8] sm:$0xff] %v4600
        %4617 = vst [vmem:[%s547 + $0x10] sm:$0xff] %v4601
        %4618 = vst [vmem:[%s547 + $0x18] sm:$0xff] %v4602
        %4619 = vst [vmem:[%s547 + $0x20] sm:$0xff] %v4603
        %4620 = vst [vmem:[%s547 + $0x28] sm:$0xff] %v4604
        %4621 = vst [vmem:[%s547 + $0x30] sm:$0xff] %v4605
        %4622 = vst [vmem:[%s547 + $0x38] sm:$0xff] %v4606
        %4623 = vst [vmem:[%s547 + $0x40] sm:$0xff] %v4607
        %4624 = vst [vmem:[%s547 + $0x48] sm:$0xff] %v4608
        %4625 = vst [vmem:[%s547 + $0x50] sm:$0xff] %v4609
        %4626 = vst [vmem:[%s547 + $0x58] sm:$0xff] %v4610
        %4627 = vst [vmem:[%s547 + $0x60] sm:$0xff] %v4611
        %4628 = vst [vmem:[%s547 + $0x68] sm:$0xff] %v4612
        %4629 = vst [vmem:[%s547 + $0x70] sm:$0xff] %v4613
        %4630 = vst [vmem:[%s547 + $0x78] sm:$0xff] %v4614
        %s4631 = sand.u32 %s323, 1
        %s4632 = scalar_lea.sflag [#allocation4], %s4631
        %s4633 = sand.u32 %s323, 1
        %s4634 = smul.addr %s4633, 128
        %s4635 = scalar_lea.vmem [#allocation11], %s4634
        %s4636 = sand.u32 %s349, 1
        %s4637 = scalar_lea.sflag [#allocation13], %s4636
        %s4638 = sand.u32 %s349, 1
        %s4639 = smul.addr %s4638, 256
        %s4640 = scalar_lea.vmem [#allocation12], %s4639
        // Predicated region
        $region93: #{tpu_custom_call.1} parent=71 // pred_check
          %p4641 = pneg %p333
        $region94: #{tpu_custom_call.1} parent=71 // pred_check_branch
          %4643 = sbr.rel (%p4641) target = $region96
        $region95: #{tpu_custom_call.1} parent=71 // pred_region
          %s4645 = ssub.s32 2048, 2048
          %4646 = vsyncadd %s4632, %s4645
          %s4647 = smul.addr %s37, 16
          %s4648 = smul.addr %s4647, 128
          %s4649 = scalar_lea.hbm %s13, %s4648
          %s4650 = sshll.u32 %s4635, 4
          %s4651 = int_to_ptr.vmem [resolvable:$true] %s4650
          %4656 = dma.vmem_to_hbm [thread:$0]  %s4651, 2048, %s4649, %s4632, 128, 128, 8
        $region96: #{tpu_custom_call.1} parent=71 // pred_fallthru
          _
        // Predicated region
        $region97: #{tpu_custom_call.1} parent=71 // pred_check
          %p4657 = pneg %p359
        $region98: #{tpu_custom_call.1} parent=71 // pred_check_branch
          %4659 = sbr.rel (%p4657) target = $region100
        $region99: #{tpu_custom_call.1} parent=71 // pred_region
          %s4661 = ssub.s32 4096, 4096
          %4662 = vsyncadd %s4637, %s4661
          %s4663 = smul.addr %s37, 64
          %s4664 = smul.addr %s4663, 64
          %s4665 = scalar_lea.hbm %s14, %s4664
          %s4666 = sshll.u32 %s4640, 4
          %s4667 = int_to_ptr.vmem [resolvable:$true] %s4666
          %4672 = dma.vmem_to_hbm [thread:$0]  %s4667, 4096, %s4665, %s4637, 64, 64, 4
        $region100: #{tpu_custom_call.1} parent=71 // pred_fallthru
          _
      $region72: #{tpu_custom_call.1} parent=5 // pred_fallthru
        _
      %p4673 = scmp.le.s32.totalorder 2, %s32
      // Predicated region
      $region101: #{tpu_custom_call.1} parent=5 // pred_check
        %p4674 = pneg %p4673
      $region102: #{tpu_custom_call.1} parent=5 // pred_check_branch
        %4676 = sbr.rel (%p4674) target = $region104
      $region103: #{tpu_custom_call.1} parent=5 // pred_region
        %s4677 = ssub.s32 %s32, 2
        // Predicated region
        $region105: #{tpu_custom_call.1} parent=103 // pred_check
          %p4678 = pneg %p339
        $region106: #{tpu_custom_call.1} parent=103 // pred_check_branch
          %4680 = sbr.rel (%p4678) target = $region108
        $region107: #{tpu_custom_call.1} parent=103 // pred_region
          %s4681 = sand.u32 %s324, 1
          %s4682 = scalar_lea.sflag [#allocation4], %s4681
          %s4683 = sand.u32 %s324, 1
          %s4684 = smul.addr %s4683, 128
          %s4685 = scalar_lea.vmem [#allocation11], %s4684
          %4686 = dma.done %s4682, 2048
        $region108: #{tpu_custom_call.1} parent=103 // pred_fallthru
          _
        // Predicated region
        $region109: #{tpu_custom_call.1} parent=103 // pred_check
          %p4687 = pneg %p365
        $region110: #{tpu_custom_call.1} parent=103 // pred_check_branch
          %4689 = sbr.rel (%p4687) target = $region112
        $region111: #{tpu_custom_call.1} parent=103 // pred_region
          %s4690 = sand.u32 %s350, 1
          %s4691 = scalar_lea.sflag [#allocation13], %s4690
          %s4692 = sand.u32 %s350, 1
          %s4693 = smul.addr %s4692, 256
          %s4694 = scalar_lea.vmem [#allocation12], %s4693
          %4695 = dma.done %s4691, 4096
        $region112: #{tpu_custom_call.1} parent=103 // pred_fallthru
          _
      $region104: #{tpu_custom_call.1} parent=5 // pred_fallthru
        _
    $region6: #{tpu_custom_call.1} parent=1 // loop_footer
      %s36 = sadd.s32 1, %s32
    $region7: #{tpu_custom_call.1} parent=1 // loop_footer_branch
      %31 = sbr.rel target = $region3
    $region8: #{tpu_custom_call.1} parent=1 // loop_exit
      _
    %4696 = vsyncpa [#allocation3], 1
    %s4697 = scalar_lea.sflag [#allocation3], 1
    %4698 = vsyncpa %s4697, 1
    %4699 = vsyncpa [#allocation6], 1
    %4700 = vsyncpa [#allocation9], 1
    %4701 = vsyncpa [#allocation4], 1
    %s4702 = scalar_lea.sflag [#allocation4], 1
    %4703 = vsyncpa %s4702, 1
    %4704 = vsyncpa [#allocation13], 1
    %s4705 = scalar_lea.sflag [#allocation13], 1
    %4706 = vsyncpa %s4705, 1

</llo_original>
